<compile_context>
chip_gen: v7x
topology: tpu7x:2x2x1
jax: 0.10.0
libtpu: 0.0.40
codegen_flags: <defaults>
</compile_context>

<pallas_src>
import functools

import numpy as np
import jax
import jax.numpy as jnp
from jax.experimental import pallas as pl
from jax.experimental.pallas import tpu as pltpu

BIN_SIZES = [1, 2, 4, 6]
LN_EPS = 1e-5
LANE = 128
SUBLANE = 8


def _round_up(n, m):
    return ((n + m - 1) // m) * m


# ---------------------------------------------------------------------------
# Plain-JAX glue (tiny pyramid stages)
# ---------------------------------------------------------------------------
def layer_norm(x, gamma, beta, eps=LN_EPS):
    mean = x.mean(axis=-1, keepdims=True)
    var = ((x - mean) ** 2).mean(axis=-1, keepdims=True)
    return (x - mean) * jax.lax.rsqrt(var + eps) * gamma + beta


def adaptive_avg_pool_nhwc(x, out_size):
    """PyTorch AdaptiveAvgPool2d semantics, NHWC input."""
    B, H, W, C = x.shape

    def bounds(n, s):
        starts = [int(np.floor(i * n / s)) for i in range(s)]
        ends = [int(np.ceil((i + 1) * n / s)) for i in range(s)]
        return starts, ends

    hs, he = bounds(H, out_size)
    ws, we = bounds(W, out_size)
    rows = []
    for i in range(out_size):
        cols = []
        for j in range(out_size):
            cols.append(x[:, hs[i]:he[i], ws[j]:we[j], :].mean(axis=(1, 2)))
        rows.append(jnp.stack(cols, axis=1))
    return jnp.stack(rows, axis=1)  # (B, s, s, C)


def upsample_bilinear_align_corners(x, out_h, out_w):
    """F.interpolate(mode='bilinear', align_corners=True), NHWC input."""
    B, h, w, C = x.shape

    def coords(n_in, n_out):
        if n_in == 1:
            return (np.zeros(n_out, np.int32), np.zeros(n_out, np.int32),
                    np.zeros(n_out, np.float32))
        src = np.arange(n_out, dtype=np.float64) * (n_in - 1) / (n_out - 1)
        i0 = np.minimum(np.floor(src).astype(np.int32), n_in - 2)
        return i0, i0 + 1, (src - i0).astype(np.float32)

    y0, y1, fy = coords(h, out_h)
    x0, x1, fx = coords(w, out_w)
    r0, r1 = x[:, y0], x[:, y1]
    v00, v01 = r0[:, :, x0], r0[:, :, x1]
    v10, v11 = r1[:, :, x0], r1[:, :, x1]
    fy_ = jnp.asarray(fy)[None, :, None, None]
    fx_ = jnp.asarray(fx)[None, None, :, None]
    top = v00 * (1.0 - fx_) + v01 * fx_
    bot = v10 * (1.0 - fx_) + v11 * fx_
    return top * (1.0 - fy_) + bot * fy_


# ---------------------------------------------------------------------------
# Pallas kernel: fused 3x3 conv (no bias) + LayerNorm(channels) + ReLU
# ---------------------------------------------------------------------------
def bottleneck_kernel(x_hbm, w_ref, gamma_ref, beta_ref, out_ref, xbuf, sem,
                      *, tile_rows, w_out, n_tiles, c_valid):
    # x_hbm : (B, H_pad+2, W_in, Cin_p) bf16, raw HBM (pl.ANY) -- manual halo'd-tile DMA
    # w_ref : (3, 3*Cin_p, Cout_p)      bf16, resident (constant index_map)
    # gamma/beta: (1, Cout_p)           f32 (zero in padded lanes)
    # out_ref:(1, TH, W_out, Cout_p)    f32
    # xbuf  : (2, TH+2, W_in, Cin_p)    bf16 double-buffered DMA scratch
    th = tile_rows
    cin_p = xbuf.shape[-1]
    cout_p = out_ref.shape[-1]
    b = pl.program_id(0)
    t = pl.program_id(1)
    slot = t % 2

    def tile_copy(bi, ti, sl):
        return pltpu.make_async_copy(
            x_hbm.at[bi, pl.ds(ti * th, th + 2), :, :],
            xbuf.at[sl],
            sem.at[sl])

    # Prime the per-batch pipeline at its first row tile.
    @pl.when(t == 0)
    def _():
        tile_copy(b, t, slot).start()

    # Prefetch the next row tile of this batch while computing the current one.
    @pl.when(t + 1 < n_tiles)
    def _():
        tile_copy(b, t + 1, (t + 1) % 2).start()

    tile_copy(b, t, slot).wait()

    x = xbuf[slot]                                        # (TH+2, W_in, Cin_p) bf16
    m = th * w_out
    acc = jnp.zeros((m, cout_p), jnp.float32)
    for dx in range(3):
        xs = x[:, dx:dx + w_out, :]                       # one sublane shift per dx (3 total)
        patches = jnp.concatenate(                        # lane-aligned dy concat, K = 3*Cin_p
            [xs[0:th], xs[1:th + 1], xs[2:th + 2]], axis=-1)
        acc = acc + jnp.dot(patches.reshape(m, 3 * cin_p), w_ref[dx],
                            preferred_element_type=jnp.float32)

    # LayerNorm over the REAL channel count.  Padded output lanes are exactly zero in `acc`
    # (zero-padded weights), so the mean is exact; the variance uses a masked, centered form
    # (robust when the conv output mean is large relative to its std).
    lane = jax.lax.broadcasted_iota(jnp.int32, (1, cout_p), 1)
    cmask = lane < c_valid
    inv_c = 1.0 / float(c_valid)
    mean = jnp.sum(acc, axis=-1, keepdims=True) * inv_c
    xc = jnp.where(cmask, acc - mean, 0.0)
    var = jnp.sum(xc * xc, axis=-1, keepdims=True) * inv_c
    y = xc * jax.lax.rsqrt(var + LN_EPS)
    y = y * gamma_ref[...] + beta_ref[...]                # padded lanes: gamma=beta=0 -> 0
    out_ref[...] = jnp.maximum(y, 0.0).reshape(1, th, w_out, cout_p)


def _vmem_capacity_bytes():
    try:
        return int(pltpu.get_tpu_info().vmem_capacity_bytes)
    except Exception:
        return 128 * 2 ** 20


def _step_footprint_bytes(th, w_out, w_in, cin_p, cout_p):
    m = th * w_out
    xbuf = 2 * (th + 2) * w_in * cin_p * 2          # double-buffered input DMA scratch
    wts = 2 * 9 * cin_p * cout_p * 2                # resident weights (pipeline keeps 2 bufs)
    outb = 2 * th * w_out * cout_p * 4              # double-buffered output tile
    tmp = ((th + 2) * w_out * cin_p * 2             # per-dx shifted slice
           + m * 3 * cin_p * 2                      # per-dx im2col patches
           + 3 * m * cout_p * 4)                    # f32 accumulator / dot result / epilogue
    return xbuf + wts + outb + tmp + 4 * cout_p * 4


def bottleneck_pallas(cat_nhwc, w_oihw, gamma, beta, *, tile_rows=None):
    """Fused 3x3 conv (bias=False) + LayerNorm(channels) + ReLU; NHWC in/out.

    `cat_nhwc` may already be bf16 and channel-padded to a multiple of 128 (preferred,
    avoids an extra staging pass); an unpadded f32/bf16 input also works.
    """
    B, H, W, Cx = cat_nhwc.shape
    Cout, Cin = w_oihw.shape[0], w_oihw.shape[1]
    assert w_oihw.shape[2:] == (3, 3)
    cin_p = _round_up(Cin, LANE)
    cout_p = _round_up(Cout, LANE)
    assert Cx in (Cin, cin_p), (Cx, Cin, cin_p)

    x = cat_nhwc.astype(jnp.bfloat16)
    if Cx != cin_p:
        x = jnp.pad(x, ((0, 0), (0, 0), (0, 0), (0, cin_p - Cx)))

    w_out = _round_up(W, SUBLANE)             # sublane-dense output stores / reshapes
    w_in = _round_up(w_out + 2, SUBLANE)      # halo'd, aligned input width

    # Generation-aware VMEM budget: ~48 MiB usable on v7x (64 MiB phys), ~96 MiB on v5e/v6e.
    capacity = _vmem_capacity_bytes()
    vmem_cap = (capacity * 3) // 4
    if tile_rows is None:
        target_m = 1024 if capacity > 96 * 2 ** 20 else 512
        th = max(1, min(H, target_m // max(w_out, 1)))
        while th > 1 and _step_footprint_bytes(th, w_out, w_in, cin_p, cout_p) > (vmem_cap * 3) // 4:
            th = max(1, th // 2)
    else:
        th = int(tile_rows)
    n_tiles = (H + th - 1) // th              # no divisibility requirement: rows are padded
    h_pad = n_tiles * th

    # Single bf16 staging pass: spatial halo + alignment padding only.  No duplicated
    # overlapping row tiles -- the kernel DMAs its halo'd tile straight out of this array.
    x_pad = jnp.pad(x, ((0, 0), (1, h_pad - H + 1), (1, w_in - W - 1), (0, 0)))

    # Weights OIHW -> per-dx matrices: w_mat[dx, dy*cin_p + ci, co] = w[co, ci, dy, dx].
    w_t = jnp.transpose(w_oihw, (3, 2, 1, 0))                     # (dx, dy, Cin, Cout)
    w_t = jnp.pad(w_t, ((0, 0), (0, 0), (0, cin_p - Cin), (0, cout_p - Cout)))
    w_mat = w_t.reshape(3, 3 * cin_p, cout_p).astype(jnp.bfloat16)

    gamma_p = jnp.pad(gamma, (0, cout_p - Cout)).reshape(1, cout_p).astype(jnp.float32)
    beta_p = jnp.pad(beta, (0, cout_p - Cout)).reshape(1, cout_p).astype(jnp.float32)

    footprint = _step_footprint_bytes(th, w_out, w_in, cin_p, cout_p)
    vmem_limit = int(min(vmem_cap, max(32 * 2 ** 20, 2 * footprint)))

    out = pl.pallas_call(
        functools.partial(bottleneck_kernel, tile_rows=th, w_out=w_out,
                          n_tiles=n_tiles, c_valid=Cout),
        out_shape=jax.ShapeDtypeStruct((B, h_pad, w_out, cout_p), jnp.float32),
        grid=(B, n_tiles),
        in_specs=[
            # raw HBM ref -- the kernel DMAs overlapping halo'd row tiles itself
            pl.BlockSpec(memory_space=pl.ANY),
            # constant index_map -> weights / LN params stay resident in VMEM
            pl.BlockSpec((3, 3 * cin_p, cout_p), lambda b, t: (0, 0, 0)),
            pl.BlockSpec((1, cout_p), lambda b, t: (0, 0)),
            pl.BlockSpec((1, cout_p), lambda b, t: (0, 0)),
        ],
        out_specs=pl.BlockSpec((1, th, w_out, cout_p), lambda b, t: (b, t, 0, 0)),
        scratch_shapes=[
            pltpu.VMEM((2, th + 2, w_in, cin_p), jnp.bfloat16),   # input double buffer
            pltpu.SemaphoreType.DMA((2,)),
        ],
        compiler_params=pltpu.CompilerParams(
            # batch axis parallel (megacore-shardable); row tiles sequential per batch so the
            # manual prefetch (prime at t==0, fetch t+1 during t) stays valid on every chip.
            dimension_semantics=("parallel", "arbitrary"),
            vmem_limit_bytes=vmem_limit),
    )(x_pad, w_mat, gamma_p, beta_p)

    return out[:, :H, :W, :Cout]


# ---------------------------------------------------------------------------
# Full PSPModule forward
# ---------------------------------------------------------------------------
def init_params(key, in_channels):
    out_channels = in_channels // len(BIN_SIZES)
    keys = jax.random.split(key, 3 * len(BIN_SIZES) + 3)
    params = {"stage_w": [], "stage_gamma": [], "stage_beta": []}
    k = 0
    for _ in BIN_SIZES:
        params["stage_w"].append(
            0.1 * jax.random.normal(keys[k], (in_channels, out_channels), jnp.float32)); k += 1
        params["stage_gamma"].append(
            1.0 + 0.1 * jax.random.normal(keys[k], (out_channels,), jnp.float32)); k += 1
        params["stage_beta"].append(
            0.1 * jax.random.normal(keys[k], (out_channels,), jnp.float32)); k += 1

    cin_bneck = in_channels + out_channels * len(BIN_SIZES)
    # PyTorch conv weight layout: OIHW
    params["bneck_w_oihw"] = 0.1 * jax.random.normal(
        keys[k], (in_channels, cin_bneck, 3, 3), jnp.float32); k += 1
    params["bneck_gamma"] = 1.0 + 0.1 * jax.random.normal(
        keys[k], (in_channels,), jnp.float32); k += 1
    params["bneck_beta"] = 0.1 * jax.random.normal(
        keys[k], (in_channels,), jnp.float32); k += 1
    return params


@jax.jit
def psp_forward(x_nchw, params):
    x = jnp.transpose(x_nchw, (0, 2, 3, 1)).astype(jnp.float32)   # -> NHWC
    B, H, W, C = x.shape

    # Build the concatenated pyramid directly as channel-padded bf16 so the Pallas wrapper's
    # pad/cast staging pass vanishes (one bf16 HBM write instead of f32 write + pad + cast).
    parts = [x.astype(jnp.bfloat16)]
    cat_c = C
    for bs, w1, g, b in zip(BIN_SIZES, params["stage_w"],
                            params["stage_gamma"], params["stage_beta"]):
        p = adaptive_avg_pool_nhwc(x, bs)                 # (B, bs, bs, C)
        y = jnp.einsum("bhwc,cd->bhwd", p, w1)            # 1x1 conv, no bias
        y = jnp.maximum(layer_norm(y, g, b), 0.0)         # LN + ReLU
        y = upsample_bilinear_align_corners(y, H, W)      # back to (H, W)
        parts.append(y.astype(jnp.bfloat16))
        cat_c += w1.shape[1]
    cin_p = _round_up(cat_c, LANE)
    if cin_p > cat_c:
        parts.append(jnp.zeros((B, H, W, cin_p - cat_c), jnp.bfloat16))
    cat = jnp.concatenate(parts, axis=-1)                 # (B, H, W, cin_p) bf16

    out_nhwc = bottleneck_pallas(cat, params["bneck_w_oihw"],
                                 params["bneck_gamma"], params["bneck_beta"])
    # TODO(synk): Dropout2d(0.1) is treated as identity (eval-mode semantics).
    return jnp.transpose(out_nhwc, (0, 3, 1, 2))          # -> NCHW


# Independent reference for the fused Pallas stage (lax.conv with the same compute policy:
# bf16 operands, f32 accumulation; LN/ReLU in f32).
def ref_bottleneck(cat_nhwc, w_oihw, gamma, beta):
    x_nchw = jnp.transpose(cat_nhwc, (0, 3, 1, 2)).astype(jnp.bfloat16)
    y = jax.lax.conv_general_dilated(
        x_nchw, w_oihw.astype(jnp.bfloat16),
        window_strides=(1, 1), padding=((1, 1), (1, 1)),
        dimension_numbers=("NCHW", "OIHW", "NCHW"),
        preferred_element_type=jnp.float32)
    y = jnp.transpose(y, (0, 2, 3, 1))
    y = layer_norm(y, gamma, beta)
    return jnp.maximum(y, 0.0)


if __name__ == "__main__":
    key = jax.random.PRNGKey(0)
    k_x, k_p = jax.random.split(key)

    B, C, H, W = 2, 8, 16, 16
    x = jax.random.normal(k_x, (B, C, H, W), jnp.float32)
    params = init_params(k_p, C)

    out = jax.block_until_ready(psp_forward(x, params))
    assert out.shape == (B, C, H, W), out.shape

    # Sanity check of the Pallas hot path against a lax.conv reference with matching precision
    # policy (bf16 operands / f32 accumulate): isolates the manual halo DMA, dx-shift im2col,
    # channel/spatial padding and masked LN of the kernel.
    x_nhwc = jnp.transpose(x, (0, 2, 3, 1))
    pyramids = [x_nhwc]
    for bs, w1, g, b in zip(BIN_SIZES, params["stage_w"],
                            params["stage_gamma"], params["stage_beta"]):
        p = adaptive_avg_pool_nhwc(x_nhwc, bs)
        y = jnp.maximum(layer_norm(jnp.einsum("bhwc,cd->bhwd", p, w1), g, b), 0.0)
        pyramids.append(upsample_bilinear_align_corners(y, H, W))
    cat = jnp.concatenate(pyramids, axis=-1)
    ref = ref_bottleneck(cat, params["bneck_w_oihw"],
                         params["bneck_gamma"], params["bneck_beta"])
    pallas_out = jnp.transpose(out, (0, 2, 3, 1))
    np.testing.assert_allclose(np.asarray(pallas_out), np.asarray(ref),
                               rtol=2e-3, atol=2e-3)

    print("KERNEL_OK")
</pallas_src>

<mosaic_0001>
module attributes {stable_mosaic.version = 11 : i64} {
  func.func @bottleneck_kernel(%arg0: i32, %arg1: i32, %arg2: memref<2x18x24x128xbf16, #tpu.memory_space<any>>, %arg3: memref<3x384x128xbf16, #tpu.memory_space<vmem>>, %arg4: memref<1x128xf32, #tpu.memory_space<vmem>>, %arg5: memref<1x128xf32, #tpu.memory_space<vmem>>, %arg6: memref<1x16x16x128xf32, #tpu.memory_space<vmem>>, %arg7: memref<2x18x24x128xbf16, #tpu.memory_space<vmem>>, %arg8: memref<2x!tpu.dma_semaphore, #tpu.memory_space<semaphore_mem>>) attributes {dimension_semantics = [#tpu.dimension_semantics<parallel>, #tpu.dimension_semantics<arbitrary>], iteration_bounds = array<i64: 2, 1>, scalar_prefetch = 0 : i64, scratch_operands = 2 : i64, tpu.core_type = #tpu.core_type<tc>, window_params = [{}, {pipeline_mode = #tpu.pipeline_mode<synchronous>, transform_indices = @transform_1, window_bounds = array<i64: 3, 384, 128>}, {pipeline_mode = #tpu.pipeline_mode<synchronous>, transform_indices = @transform_2, window_bounds = array<i64: 1, 128>}, {pipeline_mode = #tpu.pipeline_mode<synchronous>, transform_indices = @transform_3, window_bounds = array<i64: 1, 128>}, {transform_indices = @transform_4, window_bounds = array<i64: 1, 16, 16, 128>}]} {
    %c2_i32 = arith.constant 2 : i32
    %c0_i32 = arith.constant 0 : i32
    %0 = arith.cmpi eq, %c2_i32, %c0_i32 : i32
    %c1_i32 = arith.constant 1 : i32
    %1 = arith.select %0, %c1_i32, %c2_i32 : i32
    %2 = arith.remsi %arg1, %1 : i32
    %c0_i32_0 = arith.constant 0 : i32
    %3 = arith.cmpi ne, %2, %c0_i32_0 : i32
    %c0_i32_1 = arith.constant 0 : i32
    %4 = arith.cmpi slt, %2, %c0_i32_1 : i32
    %c0_i32_2 = arith.constant 0 : i32
    %5 = arith.cmpi slt, %1, %c0_i32_2 : i32
    %6 = arith.xori %4, %5 : i1
    %7 = arith.andi %6, %3 : i1
    %8 = arith.addi %2, %1 : i32
    %9 = arith.select %7, %8, %2 : i32
    %c0_i32_3 = arith.constant 0 : i32
    %10 = arith.cmpi eq, %arg1, %c0_i32_3 : i32
    %11 = arith.extui %10 : i1 to i32
    %c0_i32_4 = arith.constant 0 : i32
    %12 = arith.cmpi ne, %11, %c0_i32_4 : i32
    scf.if %12 {
      %c16_i32_40 = arith.constant 16 : i32
      %91 = arith.muli %arg1, %c16_i32_40 : i32
      %c0_i32_41 = arith.constant 0 : i32
      %c0_i32_42 = arith.constant 0 : i32
      %92 = tpu.memref_slice %arg2[%arg0, %91, %c0_i32_41, %c0_i32_42] : memref<2x18x24x128xbf16, #tpu.memory_space<any>> -> memref<1x18x24x128xbf16, #tpu.memory_space<any>>
      %93 = tpu.memref_squeeze %92 : memref<1x18x24x128xbf16, #tpu.memory_space<any>> -> memref<18x24x128xbf16, #tpu.memory_space<any>>
      %c0_i32_43 = arith.constant 0 : i32
      %c0_i32_44 = arith.constant 0 : i32
      %c0_i32_45 = arith.constant 0 : i32
      %94 = tpu.memref_slice %arg7[%9, %c0_i32_43, %c0_i32_44, %c0_i32_45] : memref<2x18x24x128xbf16, #tpu.memory_space<vmem>> -> memref<1x18x24x128xbf16, #tpu.memory_space<vmem>>
      %95 = tpu.memref_squeeze %94 : memref<1x18x24x128xbf16, #tpu.memory_space<vmem>> -> memref<18x24x128xbf16, #tpu.memory_space<vmem>>
      %96 = tpu.memref_slice %arg8[%9] : memref<2x!tpu.dma_semaphore, #tpu.memory_space<semaphore_mem>> -> memref<1x!tpu.dma_semaphore, #tpu.memory_space<semaphore_mem>>
      %97 = tpu.memref_squeeze %96 : memref<1x!tpu.dma_semaphore, #tpu.memory_space<semaphore_mem>> -> memref<!tpu.dma_semaphore, #tpu.memory_space<semaphore_mem>>
      tpu.enqueue_dma source(%93 : memref<18x24x128xbf16, #tpu.memory_space<any>>) target(%95 : memref<18x24x128xbf16, #tpu.memory_space<vmem>>) target_semaphore(%97 : memref<!tpu.dma_semaphore, #tpu.memory_space<semaphore_mem>>)
    } else {
    }
    %c1_i32_5 = arith.constant 1 : i32
    %13 = arith.addi %arg1, %c1_i32_5 : i32
    %c1_i32_6 = arith.constant 1 : i32
    %14 = arith.cmpi slt, %13, %c1_i32_6 : i32
    %15 = arith.extui %14 : i1 to i32
    %c0_i32_7 = arith.constant 0 : i32
    %16 = arith.cmpi ne, %15, %c0_i32_7 : i32
    scf.if %16 {
      %c1_i32_40 = arith.constant 1 : i32
      %91 = arith.addi %arg1, %c1_i32_40 : i32
      %c1_i32_41 = arith.constant 1 : i32
      %92 = arith.addi %arg1, %c1_i32_41 : i32
      %c2_i32_42 = arith.constant 2 : i32
      %c0_i32_43 = arith.constant 0 : i32
      %93 = arith.cmpi eq, %c2_i32_42, %c0_i32_43 : i32
      %c1_i32_44 = arith.constant 1 : i32
      %94 = arith.select %93, %c1_i32_44, %c2_i32_42 : i32
      %95 = arith.remsi %92, %94 : i32
      %c0_i32_45 = arith.constant 0 : i32
      %96 = arith.cmpi ne, %95, %c0_i32_45 : i32
      %c0_i32_46 = arith.constant 0 : i32
      %97 = arith.cmpi slt, %95, %c0_i32_46 : i32
      %c0_i32_47 = arith.constant 0 : i32
      %98 = arith.cmpi slt, %94, %c0_i32_47 : i32
      %99 = arith.xori %97, %98 : i1
      %100 = arith.andi %99, %96 : i1
      %101 = arith.addi %95, %94 : i32
      %102 = arith.select %100, %101, %95 : i32
      %c16_i32_48 = arith.constant 16 : i32
      %103 = arith.muli %91, %c16_i32_48 : i32
      %c0_i32_49 = arith.constant 0 : i32
      %c0_i32_50 = arith.constant 0 : i32
      %104 = tpu.memref_slice %arg2[%arg0, %103, %c0_i32_49, %c0_i32_50] : memref<2x18x24x128xbf16, #tpu.memory_space<any>> -> memref<1x18x24x128xbf16, #tpu.memory_space<any>>
      %105 = tpu.memref_squeeze %104 : memref<1x18x24x128xbf16, #tpu.memory_space<any>> -> memref<18x24x128xbf16, #tpu.memory_space<any>>
      %c0_i32_51 = arith.constant 0 : i32
      %c0_i32_52 = arith.constant 0 : i32
      %c0_i32_53 = arith.constant 0 : i32
      %106 = tpu.memref_slice %arg7[%102, %c0_i32_51, %c0_i32_52, %c0_i32_53] : memref<2x18x24x128xbf16, #tpu.memory_space<vmem>> -> memref<1x18x24x128xbf16, #tpu.memory_space<vmem>>
      %107 = tpu.memref_squeeze %106 : memref<1x18x24x128xbf16, #tpu.memory_space<vmem>> -> memref<18x24x128xbf16, #tpu.memory_space<vmem>>
      %108 = tpu.memref_slice %arg8[%102] : memref<2x!tpu.dma_semaphore, #tpu.memory_space<semaphore_mem>> -> memref<1x!tpu.dma_semaphore, #tpu.memory_space<semaphore_mem>>
      %109 = tpu.memref_squeeze %108 : memref<1x!tpu.dma_semaphore, #tpu.memory_space<semaphore_mem>> -> memref<!tpu.dma_semaphore, #tpu.memory_space<semaphore_mem>>
      tpu.enqueue_dma source(%105 : memref<18x24x128xbf16, #tpu.memory_space<any>>) target(%107 : memref<18x24x128xbf16, #tpu.memory_space<vmem>>) target_semaphore(%109 : memref<!tpu.dma_semaphore, #tpu.memory_space<semaphore_mem>>)
    } else {
    }
    %c16_i32 = arith.constant 16 : i32
    %17 = arith.muli %arg1, %c16_i32 : i32
    %c0_i32_8 = arith.constant 0 : i32
    %c0_i32_9 = arith.constant 0 : i32
    %18 = tpu.memref_slice %arg2[%arg0, %17, %c0_i32_8, %c0_i32_9] : memref<2x18x24x128xbf16, #tpu.memory_space<any>> -> memref<1x18x24x128xbf16, #tpu.memory_space<any>>
    %19 = tpu.memref_squeeze %18 : memref<1x18x24x128xbf16, #tpu.memory_space<any>> -> memref<18x24x128xbf16, #tpu.memory_space<any>>
    %c0_i32_10 = arith.constant 0 : i32
    %c0_i32_11 = arith.constant 0 : i32
    %c0_i32_12 = arith.constant 0 : i32
    %20 = tpu.memref_slice %arg7[%9, %c0_i32_10, %c0_i32_11, %c0_i32_12] : memref<2x18x24x128xbf16, #tpu.memory_space<vmem>> -> memref<1x18x24x128xbf16, #tpu.memory_space<vmem>>
    %21 = tpu.memref_squeeze %20 : memref<1x18x24x128xbf16, #tpu.memory_space<vmem>> -> memref<18x24x128xbf16, #tpu.memory_space<vmem>>
    %22 = tpu.memref_slice %arg8[%9] : memref<2x!tpu.dma_semaphore, #tpu.memory_space<semaphore_mem>> -> memref<1x!tpu.dma_semaphore, #tpu.memory_space<semaphore_mem>>
    %23 = tpu.memref_squeeze %22 : memref<1x!tpu.dma_semaphore, #tpu.memory_space<semaphore_mem>> -> memref<!tpu.dma_semaphore, #tpu.memory_space<semaphore_mem>>
    tpu.wait_dma2 semaphore(%23 : memref<!tpu.dma_semaphore, #tpu.memory_space<semaphore_mem>>) src(%19 : memref<18x24x128xbf16, #tpu.memory_space<any>>) dst(%21 : memref<18x24x128xbf16, #tpu.memory_space<vmem>>)
    %24 = arith.index_cast %9 : i32 to index
    %c0 = arith.constant 0 : index
    %c0_13 = arith.constant 0 : index
    %c0_14 = arith.constant 0 : index
    %25 = vector.load %arg7[%24, %c0, %c0_13, %c0_14] : memref<2x18x24x128xbf16, #tpu.memory_space<vmem>>, vector<1x18x24x128xbf16>
    %26 = vector.shape_cast %25 : vector<1x18x24x128xbf16> to vector<18x24x128xbf16>
    %cst = arith.constant 0.000000e+00 : f32
    %27 = vector.broadcast %cst : f32 to vector<256x128xf32>
    %28 = vector.extract_strided_slice %26 {offsets = [0, 0, 0], sizes = [18, 16, 128], strides = [1, 1, 1]} : vector<18x24x128xbf16> to vector<18x16x128xbf16>
    %29 = vector.extract_strided_slice %28 {offsets = [0, 0, 0], sizes = [16, 16, 128], strides = [1, 1, 1]} : vector<18x16x128xbf16> to vector<16x16x128xbf16>
    %30 = vector.extract_strided_slice %28 {offsets = [1, 0, 0], sizes = [16, 16, 128], strides = [1, 1, 1]} : vector<18x16x128xbf16> to vector<16x16x128xbf16>
    %31 = vector.extract_strided_slice %28 {offsets = [2, 0, 0], sizes = [16, 16, 128], strides = [1, 1, 1]} : vector<18x16x128xbf16> to vector<16x16x128xbf16>
    %32 = tpu.concatenate %29, %30, %31 in 2 : vector<16x16x128xbf16>, vector<16x16x128xbf16>, vector<16x16x128xbf16> -> vector<16x16x384xbf16>
    %33 = vector.shape_cast %32 : vector<16x16x384xbf16> to vector<256x384xbf16>
    %c0_15 = arith.constant 0 : index
    %c0_16 = arith.constant 0 : index
    %c0_17 = arith.constant 0 : index
    %34 = vector.load %arg3[%c0_15, %c0_16, %c0_17] : memref<3x384x128xbf16, #tpu.memory_space<vmem>>, vector<1x384x128xbf16>
    %35 = vector.shape_cast %34 : vector<1x384x128xbf16> to vector<384x128xbf16>
    %cst_18 = arith.constant dense<0.000000e+00> : vector<256x128xf32>
    %36 = tpu.matmul %33, %35, %cst_18 {dimension_numbers = #tpu.dot_dimension_numbers<[1], [0], [0], [1], [0, 0, 1, 1], [], []>} : vector<256x384xbf16>, vector<384x128xbf16>, vector<256x128xf32> -> vector<256x128xf32>
    %37 = arith.addf %27, %36 : vector<256x128xf32>
    %38 = vector.extract_strided_slice %26 {offsets = [0, 1, 0], sizes = [18, 16, 128], strides = [1, 1, 1]} : vector<18x24x128xbf16> to vector<18x16x128xbf16>
    %39 = vector.extract_strided_slice %38 {offsets = [0, 0, 0], sizes = [16, 16, 128], strides = [1, 1, 1]} : vector<18x16x128xbf16> to vector<16x16x128xbf16>
    %40 = vector.extract_strided_slice %38 {offsets = [1, 0, 0], sizes = [16, 16, 128], strides = [1, 1, 1]} : vector<18x16x128xbf16> to vector<16x16x128xbf16>
    %41 = vector.extract_strided_slice %38 {offsets = [2, 0, 0], sizes = [16, 16, 128], strides = [1, 1, 1]} : vector<18x16x128xbf16> to vector<16x16x128xbf16>
    %42 = tpu.concatenate %39, %40, %41 in 2 : vector<16x16x128xbf16>, vector<16x16x128xbf16>, vector<16x16x128xbf16> -> vector<16x16x384xbf16>
    %43 = vector.shape_cast %42 : vector<16x16x384xbf16> to vector<256x384xbf16>
    %c1 = arith.constant 1 : index
    %c0_19 = arith.constant 0 : index
    %c0_20 = arith.constant 0 : index
    %44 = vector.load %arg3[%c1, %c0_19, %c0_20] : memref<3x384x128xbf16, #tpu.memory_space<vmem>>, vector<1x384x128xbf16>
    %45 = vector.shape_cast %44 : vector<1x384x128xbf16> to vector<384x128xbf16>
    %cst_21 = arith.constant dense<0.000000e+00> : vector<256x128xf32>
    %46 = tpu.matmul %43, %45, %cst_21 {dimension_numbers = #tpu.dot_dimension_numbers<[1], [0], [0], [1], [0, 0, 1, 1], [], []>} : vector<256x384xbf16>, vector<384x128xbf16>, vector<256x128xf32> -> vector<256x128xf32>
    %47 = arith.addf %37, %46 : vector<256x128xf32>
    %48 = vector.extract_strided_slice %26 {offsets = [0, 2, 0], sizes = [18, 16, 128], strides = [1, 1, 1]} : vector<18x24x128xbf16> to vector<18x16x128xbf16>
    %49 = vector.extract_strided_slice %48 {offsets = [0, 0, 0], sizes = [16, 16, 128], strides = [1, 1, 1]} : vector<18x16x128xbf16> to vector<16x16x128xbf16>
    %50 = vector.extract_strided_slice %48 {offsets = [1, 0, 0], sizes = [16, 16, 128], strides = [1, 1, 1]} : vector<18x16x128xbf16> to vector<16x16x128xbf16>
    %51 = vector.extract_strided_slice %48 {offsets = [2, 0, 0], sizes = [16, 16, 128], strides = [1, 1, 1]} : vector<18x16x128xbf16> to vector<16x16x128xbf16>
    %52 = tpu.concatenate %49, %50, %51 in 2 : vector<16x16x128xbf16>, vector<16x16x128xbf16>, vector<16x16x128xbf16> -> vector<16x16x384xbf16>
    %53 = vector.shape_cast %52 : vector<16x16x384xbf16> to vector<256x384xbf16>
    %c2 = arith.constant 2 : index
    %c0_22 = arith.constant 0 : index
    %c0_23 = arith.constant 0 : index
    %54 = vector.load %arg3[%c2, %c0_22, %c0_23] : memref<3x384x128xbf16, #tpu.memory_space<vmem>>, vector<1x384x128xbf16>
    %55 = vector.shape_cast %54 : vector<1x384x128xbf16> to vector<384x128xbf16>
    %cst_24 = arith.constant dense<0.000000e+00> : vector<256x128xf32>
    %56 = tpu.matmul %53, %55, %cst_24 {dimension_numbers = #tpu.dot_dimension_numbers<[1], [0], [0], [1], [0, 0, 1, 1], [], []>} : vector<256x384xbf16>, vector<384x128xbf16>, vector<256x128xf32> -> vector<256x128xf32>
    %57 = arith.addf %47, %56 : vector<256x128xf32>
    %58 = tpu.iota {dimensions = array<i32: 1>} : vector<1x128xi32>
    %c8_i32 = arith.constant 8 : i32
    %59 = vector.broadcast %c8_i32 : i32 to vector<1x128xi32>
    %60 = arith.cmpi slt, %58, %59 : vector<1x128xi32>
    %cst_25 = arith.constant dense<0.000000e+00> : vector<256xf32>
    %61 = vector.multi_reduction <add>, %57, %cst_25 [1] : vector<256x128xf32> to vector<256xf32>
    %62 = vector.shape_cast %61 : vector<256xf32> to vector<256x1xf32>
    %cst_26 = arith.constant 1.250000e-01 : f32
    %63 = vector.broadcast %cst_26 : f32 to vector<256x1xf32>
    %64 = arith.mulf %62, %63 : vector<256x1xf32>
    %65 = vector.broadcast %64 : vector<256x1xf32> to vector<256x128xf32>
    %66 = arith.subf %57, %65 : vector<256x128xf32>
    %cst_27 = arith.constant 0.000000e+00 : f32
    %67 = vector.shape_cast %60 : vector<1x128xi1> to vector<1x128xi1>
    %68 = vector.broadcast %67 : vector<1x128xi1> to vector<256x128xi1>
    %69 = vector.broadcast %cst_27 : f32 to vector<256x128xf32>
    %70 = arith.select %68, %66, %69 : vector<256x128xi1>, vector<256x128xf32>
    %71 = arith.mulf %70, %70 : vector<256x128xf32>
    %cst_28 = arith.constant dense<0.000000e+00> : vector<256xf32>
    %72 = vector.multi_reduction <add>, %71, %cst_28 [1] : vector<256x128xf32> to vector<256xf32>
    %73 = vector.shape_cast %72 : vector<256xf32> to vector<256x1xf32>
    %cst_29 = arith.constant 1.250000e-01 : f32
    %74 = vector.broadcast %cst_29 : f32 to vector<256x1xf32>
    %75 = arith.mulf %73, %74 : vector<256x1xf32>
    %cst_30 = arith.constant 9.99999974E-6 : f32
    %76 = vector.broadcast %cst_30 : f32 to vector<256x1xf32>
    %77 = arith.addf %75, %76 : vector<256x1xf32>
    %78 = math.rsqrt %77 : vector<256x1xf32>
    %79 = vector.broadcast %78 : vector<256x1xf32> to vector<256x128xf32>
    %80 = arith.mulf %70, %79 : vector<256x128xf32>
    %c0_31 = arith.constant 0 : index
    %c0_32 = arith.constant 0 : index
    %81 = vector.load %arg4[%c0_31, %c0_32] : memref<1x128xf32, #tpu.memory_space<vmem>>, vector<1x128xf32>
    %82 = vector.broadcast %81 : vector<1x128xf32> to vector<256x128xf32>
    %83 = arith.mulf %80, %82 : vector<256x128xf32>
    %c0_33 = arith.constant 0 : index
    %c0_34 = arith.constant 0 : index
    %84 = vector.load %arg5[%c0_33, %c0_34] : memref<1x128xf32, #tpu.memory_space<vmem>>, vector<1x128xf32>
    %85 = vector.broadcast %84 : vector<1x128xf32> to vector<256x128xf32>
    %86 = arith.addf %83, %85 : vector<256x128xf32>
    %cst_35 = arith.constant 0.000000e+00 : f32
    %87 = vector.broadcast %cst_35 : f32 to vector<256x128xf32>
    %88 = arith.maximumf %86, %87 : vector<256x128xf32>
    %89 = vector.shape_cast %88 : vector<256x128xf32> to vector<1x16x16x128xf32>
    %c0_36 = arith.constant 0 : index
    %c0_37 = arith.constant 0 : index
    %c0_38 = arith.constant 0 : index
    %c0_39 = arith.constant 0 : index
    %90 = vector.load %arg6[%c0_36, %c0_37, %c0_38, %c0_39] : memref<1x16x16x128xf32, #tpu.memory_space<vmem>>, vector<1x16x16x128xf32>
    tpu.vector_store %arg6[%c0_36, %c0_37, %c0_38, %c0_39], %89 {strides = array<i32>} : memref<1x16x16x128xf32, #tpu.memory_space<vmem>>, vector<1x16x16x128xf32>,
    return
  }
  func.func @transform_1(%arg0: i32, %arg1: i32) -> (i32, i32, i32) {
    %c0_i32 = arith.constant 0 : i32
    %c0_i32_0 = arith.constant 0 : i32
    %c0_i32_1 = arith.constant 0 : i32
    %c0_i32_2 = arith.constant 0 : i32
    return %c0_i32, %c0_i32_0, %c0_i32_1 : i32, i32, i32
  }
  func.func @transform_2(%arg0: i32, %arg1: i32) -> (i32, i32) {
    %c0_i32 = arith.constant 0 : i32
    %c0_i32_0 = arith.constant 0 : i32
    %c0_i32_1 = arith.constant 0 : i32
    return %c0_i32, %c0_i32_0 : i32, i32
  }
  func.func @transform_3(%arg0: i32, %arg1: i32) -> (i32, i32) {
    %c0_i32 = arith.constant 0 : i32
    %c0_i32_0 = arith.constant 0 : i32
    %c0_i32_1 = arith.constant 0 : i32
    return %c0_i32, %c0_i32_0 : i32, i32
  }
  func.func @transform_4(%arg0: i32, %arg1: i32) -> (i32, i32, i32, i32) {
    %c0_i32 = arith.constant 0 : i32
    %c0_i32_0 = arith.constant 0 : i32
    %c0_i32_1 = arith.constant 0 : i32
    return %arg0, %arg1, %c0_i32, %c0_i32_0 : i32, i32, i32, i32
  }
}

</mosaic_0001>

<llo_original>
// kernel: psp_forward.1
$region0: #{psp_forward.1}
  #allocation0 [shape = 'u32[]', space=smem, size = 0x4, offset = 0x4, fixed_abs, tag = 'smem constant byte address 0x4 - core index']
  #allocation1 [shape = 'u32[144,128]{1,0:T(1,128)}', space=vmem, size = 0x12000, scoped, tag = 'internal scratch']
  #allocation2 [shape = 'bf16[2,18,24,128]{3,2,1,0:T(8,128)(2,1)}', space=vmem, size = 0x36000, scoped, tag = 'scratch operand']
  #allocation3 [shape = 's32[2]{0}', space=sflag, size = 0x8, scoped, tag = 'scratch operand']
  #allocation4 [shape = 's32[]', space=sflag, size = 0x4, offset = 0, fixed_abs, tag = 'sflag constant byte address 0x0 - dummy sync flag']
  #allocation5 [shape = 's32[]', space=sflag, size = 0x4, offset = 0, fixed_abs, tag = 'sflag constant byte address 0x0 - dummy sync flag']
  %s0 = inlined_call_operand.vmem [shape: bf16[2,18,24,128], index: 0, kind: input, shape index: {}]
  %s1 = inlined_call_operand.vmem [shape: bf16[3,384,128], index: 1, kind: input, shape index: {}]
  %s2 = inlined_call_operand.vmem [shape: f32[1,128], index: 2, kind: input, shape index: {}]
  %s3 = inlined_call_operand.vmem [shape: f32[1,128], index: 3, kind: input, shape index: {}]
  %s4 = inlined_call_operand.vmem [shape: f32[2,16,16,128], index: 4, kind: output, shape index: {}]
  %s5 = sld [smem:[#allocation0]]
  $region121: #{psp_forward.1} parent=0
    _
  %s7 = ssub.s32 1, %s5
  %s8 = scalar_select 0, %s7, %s5
  loop: start=0, step=1, limit=4
  $region2: #{psp_forward.1} parent=0 // loop_pre_header
    _
  $region3: #{psp_forward.1} parent=0 // loop_header
    %s10 = sphi 0, %s14
    %p11 = scmp.ge.s32.totalorder %s10, 4
    %s17 = sphi 0, %s29
    %s18 = sphi 0, %s25
    %s19 = sphi 0, %s17
    %s20 = sphi 0, %s18
    %s21 = sphi 0, %s19
    %s22 = sphi 0, %s20
    %s30 = sphi 0, %s30
    %s32 = sphi 0, %s30
    %s33 = sphi 0, %s32
    %s47 = sphi 0, %s33
    %s51 = sphi 0, %s51
    %s53 = sphi 0, %s51
    %s54 = sphi 0, %s53
    %s68 = sphi 0, %s54
    %s72 = sphi 0, %s72
    %s74 = sphi 0, %s72
    %s75 = sphi 0, %s74
    %s89 = sphi 0, %s75
    %s97 = sphi 0, %s99
    %s100 = sphi 0, %s97
    %s101 = sphi 0, %s100
    %s117 = sphi 0, %s101
  $region4: #{psp_forward.1} parent=0 // loop_header_branch
    %13 = sbr.rel (%p11) target = $region8
  $region5: #{psp_forward.1} parent=0 // loop_body
    %s15 = ssub.s32 %s10, 1
    %s16 = ssub.s32 %s10, 2
    %s23 = sadd.s32 1, %s18
    %p24 = scmp.ge.s32.totalorder %s23, 1
    %s25 = scalar_select %p24, 0, %s23
    %s26 = sadd.s32 1, %s17
    %s27 = scalar_select %p24, %s26, %s17
    %p28 = scmp.ge.s32.totalorder %s27, 2
    %s29 = scalar_select %p28, 0, %s27
    %s31 = sadd.s32 %s30, 1
    %p34 = scmp.eq.s32.totalorder %s10, 1
    %p35 = scmp.ne.s32.totalorder %s30, %s32
    %p36 = scmp.eq.s32.totalorder %s10, 0
    %p37 = por %p35, %p36
    %p38 = scmp.ne.s32.totalorder %s30, %s32
    %p39 = scmp.eq.s32.totalorder %s15, 1
    %p40 = por %p38, %p39
    %p41 = scmp.ne.s32.totalorder %s32, %s33
    %p42 = scmp.eq.s32.totalorder %s15, 0
    %p43 = por %p41, %p42
    %p44 = scmp.ne.s32.totalorder %s32, %s33
    %p45 = scmp.eq.s32.totalorder %s16, 1
    %p46 = por %p44, %p45
    %p48 = scmp.ne.s32.totalorder %s33, %s47
    %p49 = scmp.eq.s32.totalorder %s16, 0
    %p50 = por %p48, %p49
    %s52 = sadd.s32 %s51, 1
    %p55 = scmp.eq.s32.totalorder %s10, 1
    %p56 = scmp.ne.s32.totalorder %s51, %s53
    %p57 = scmp.eq.s32.totalorder %s10, 0
    %p58 = por %p56, %p57
    %p59 = scmp.ne.s32.totalorder %s51, %s53
    %p60 = scmp.eq.s32.totalorder %s15, 1
    %p61 = por %p59, %p60
    %p62 = scmp.ne.s32.totalorder %s53, %s54
    %p63 = scmp.eq.s32.totalorder %s15, 0
    %p64 = por %p62, %p63
    %p65 = scmp.ne.s32.totalorder %s53, %s54
    %p66 = scmp.eq.s32.totalorder %s16, 1
    %p67 = por %p65, %p66
    %p69 = scmp.ne.s32.totalorder %s54, %s68
    %p70 = scmp.eq.s32.totalorder %s16, 0
    %p71 = por %p69, %p70
    %s73 = sadd.s32 %s72, 1
    %p76 = scmp.eq.s32.totalorder %s10, 1
    %p77 = scmp.ne.s32.totalorder %s72, %s74
    %p78 = scmp.eq.s32.totalorder %s10, 0
    %p79 = por %p77, %p78
    %p80 = scmp.ne.s32.totalorder %s72, %s74
    %p81 = scmp.eq.s32.totalorder %s15, 1
    %p82 = por %p80, %p81
    %p83 = scmp.ne.s32.totalorder %s74, %s75
    %p84 = scmp.eq.s32.totalorder %s15, 0
    %p85 = por %p83, %p84
    %p86 = scmp.ne.s32.totalorder %s74, %s75
    %p87 = scmp.eq.s32.totalorder %s16, 1
    %p88 = por %p86, %p87
    %p90 = scmp.ne.s32.totalorder %s75, %s89
    %p91 = scmp.eq.s32.totalorder %s16, 0
    %p92 = por %p90, %p91
    %s93 = ssub.s32 %s17, %s29
    %s94 = ssub.s32 %s18, %s25
    %s95 = sor.u32 %s93, %s94
    %p96 = scmp.eq.s32.totalorder %s95, 0
    %s98 = sadd.s32 %s97, 1
    %s99 = scalar_select %p96, %s97, %s98
    %p102 = pneg %p96
    %p103 = scmp.eq.s32.totalorder %s10, 1
    %p104 = por %p102, %p103
    %p105 = scmp.ne.s32.totalorder %s97, %s100
    %p106 = scmp.eq.s32.totalorder %s10, 0
    %p107 = por %p105, %p106
    %p108 = scmp.ne.s32.totalorder %s97, %s100
    %p109 = scmp.eq.s32.totalorder %s15, 1
    %p110 = por %p108, %p109
    %p111 = scmp.ne.s32.totalorder %s100, %s101
    %p112 = scmp.eq.s32.totalorder %s15, 0
    %p113 = por %p111, %p112
    %p114 = scmp.ne.s32.totalorder %s100, %s101
    %p115 = scmp.eq.s32.totalorder %s16, 1
    %p116 = por %p114, %p115
    %p118 = scmp.ne.s32.totalorder %s101, %s117
    %p119 = scmp.eq.s32.totalorder %s16, 0
    %p120 = por %p118, %p119
    %p121 = scmp.le.s32.totalorder 1, %s10
    %p122 = scmp.lt.s32.totalorder %s10, 3
    %p123 = pnand %p121, %p122
    %p124 = pneg %p123
    // Predicated region
    $region9: #{psp_forward.1} parent=5 // pred_check
      _
    $region10: #{psp_forward.1} parent=5 // pred_check_branch
      %126 = sbr.rel (%p123) target = $region12
    $region11: #{psp_forward.1} parent=5 // pred_region
      %s127 = ssub.s32 %s10, 1
      // Predicated region
      $region13: #{psp_forward.1} parent=11 // pred_check
        %p128 = pneg %p43
      $region14: #{psp_forward.1} parent=11 // pred_check_branch
        %130 = sbr.rel (%p128) target = $region16
      $region15: #{psp_forward.1} parent=11 // pred_region
        _
      $region16: #{psp_forward.1} parent=11 // pred_fallthru
        _
      // Predicated region
      $region17: #{psp_forward.1} parent=11 // pred_check
        %p131 = pneg %p64
      $region18: #{psp_forward.1} parent=11 // pred_check_branch
        %133 = sbr.rel (%p131) target = $region20
      $region19: #{psp_forward.1} parent=11 // pred_region
        _
      $region20: #{psp_forward.1} parent=11 // pred_fallthru
        _
      // Predicated region
      $region21: #{psp_forward.1} parent=11 // pred_check
        %p134 = pneg %p85
      $region22: #{psp_forward.1} parent=11 // pred_check_branch
        %136 = sbr.rel (%p134) target = $region24
      $region23: #{psp_forward.1} parent=11 // pred_region
        _
      $region24: #{psp_forward.1} parent=11 // pred_fallthru
        _
    $region12: #{psp_forward.1} parent=5 // pred_fallthru
      _
    %p137 = scmp.lt.s32.totalorder %s10, 2
    // Predicated region
    $region25: #{psp_forward.1} parent=5 // pred_check
      %p138 = pneg %p137
    $region26: #{psp_forward.1} parent=5 // pred_check_branch
      %140 = sbr.rel (%p138) target = $region28
    $region27: #{psp_forward.1} parent=5 // pred_region
      _
    $region28: #{psp_forward.1} parent=5 // pred_fallthru
      _
    %p141 = scmp.le.s32.totalorder 1, %s10
    %p142 = scmp.lt.s32.totalorder %s10, 3
    %p143 = pnand %p141, %p142
    %p144 = pneg %p143
    // Predicated region
    $region29: #{psp_forward.1} parent=5 // pred_check
      _
    $region30: #{psp_forward.1} parent=5 // pred_check_branch
      %146 = sbr.rel (%p143) target = $region32
    $region31: #{psp_forward.1} parent=5 // pred_region
      %s147 = ssub.s32 %s10, 1
      %p148 = pneg %p43
      %p149 = pneg %p40
      %p150 = pneg %p64
      %p151 = pneg %p61
      %p152 = pneg %p85
      %p153 = pneg %p82
      %p154 = pneg %p113
      %p155 = pneg %p110
      %s156 = smul.u32 16, %s20
      %p157 = scmp.lt.s32.totalorder %s19, 1
      %s158 = scalar_select %p157, %s19, 1
      %p159 = scmp.lt.s32.totalorder %s156, 15
      %s160 = scalar_select %p159, %s156, 15
      %s161 = smul.addr %s160, 2
      %s162 = smul.addr %s158, 32
      %s163 = sadd.s32 %s161, %s162
      %s164 = smul.addr %s163, 8
      %s165 = scalar_lea.vmem %s4, %s164
      %s166 = smul.u32 16, %s20
      %p167 = scmp.lt.s32.totalorder %s19, 1
      %s168 = scalar_select %p167, %s19, 1
      %p169 = scmp.lt.s32.totalorder %s166, 15
      %s170 = scalar_select %p169, %s166, 15
      %s171 = smul.addr %s170, 2
      %s172 = smul.addr %s168, 32
      %s173 = sadd.s32 %s171, %s172
      %s174 = smul.addr %s173, 8
      %s175 = scalar_lea.vmem %s4, %s174
      %s176 = smul.u32 16, %s20
      %p178 = scmp.lt.s32.totalorder %s20, 0
      %s179 = ssub.s32 0, %s20
      %s180 = scalar_select %p178, %s179, %s20
      %s181 = sand.u32 %s180, 1
      %s182 = ssub.s32 0, %s181
      %s183 = scalar_select %p178, %s182, %s181
      %p184 = scmp.ne.s32.totalorder %s183, 0
      %p185 = scmp.lt.s32.totalorder %s183, 0
      %p186 = pnand %p185, %p184
      %p187 = pneg %p186
      %s188 = sadd.s32 %s183, 2
      %s189 = scalar_select %p187, %s188, %s183
      %p190 = scmp.eq.s32.totalorder %s20, 0
      // Predicated region
      $region33: #{psp_forward.1} parent=31 // pred_check
        %p191 = pneg %p190
      $region34: #{psp_forward.1} parent=31 // pred_check_branch
        %193 = sbr.rel (%p191) target = $region36
      $region35: #{psp_forward.1} parent=31 // pred_region
        %s194 = smul.u32 %s20, 16
        %s195 = smul.u32 %s194, 3
        %s196 = smul.u32 %s19, 54
        %s197 = sadd.s32 %s195, %s196
        %s198 = smul.addr %s197, 4
        %s199 = scalar_lea.vmem %s0, %s198
        %s200 = smul.u32 %s189, 54
        %s201 = smul.addr %s200, 4
        %s202 = scalar_lea.vmem [#allocation2], %s201
        %s203 = scalar_lea.sflag [#allocation3], %s189
        %p205 = scmp.lt.u32.totalorder 216, 8
        %p206 = pneg %p205
        // Predicated region
        $region37: #{psp_forward.1} parent=35 // pred_check
          _
        $region38: #{psp_forward.1} parent=35 // pred_check_branch
          %208 = sbr.rel (%p205) target = $region40
        $region39: #{psp_forward.1} parent=35 // pred_region
          %s223 = sand.u32 216, 7
          %p224 = scmp.eq.s32.totalorder %s223, 0
          // Predicated region
          $region52: #{psp_forward.1} parent=39 // pred_check
            %p225 = pneg %p224
          $region53: #{psp_forward.1} parent=39 // pred_check_branch
            %227 = sbr.rel (%p225) target = $region55
          $region54: #{psp_forward.1} parent=39 // pred_region
            loop: start=0, step=1, limit=1
            $region56: #{psp_forward.1} parent=54 // loop_pre_header
              _
            $region57: #{psp_forward.1} parent=54 // loop_header
              %s229 = sphi 0, %s233
              %p230 = scmp.ge.s32.totalorder %s229, 1
              %s234 = sphi %s199, %s199
              %s235 = sphi %s202, %s202
            $region58: #{psp_forward.1} parent=54 // loop_header_branch
              %232 = sbr.rel (%p230) target = $region62
            $region59: #{psp_forward.1} parent=54 // loop_body
              %v236 = vld [vmem:[%s234] sm:$0xff]
              %237 = vst [vmem:[%s235] sm:$0xff] %v236
              %v238 = vld [vmem:[%s234 + $0x8] sm:$0xff]
              %239 = vst [vmem:[%s235 + $0x8] sm:$0xff] %v238
              %v240 = vld [vmem:[%s234 + $0x10] sm:$0xff]
              %241 = vst [vmem:[%s235 + $0x10] sm:$0xff] %v240
              %v242 = vld [vmem:[%s234 + $0x18] sm:$0xff]
              %243 = vst [vmem:[%s235 + $0x18] sm:$0xff] %v242
              %v244 = vld [vmem:[%s234 + $0x20] sm:$0xff]
              %245 = vst [vmem:[%s235 + $0x20] sm:$0xff] %v244
              %v246 = vld [vmem:[%s234 + $0x28] sm:$0xff]
              %247 = vst [vmem:[%s235 + $0x28] sm:$0xff] %v246
              %v248 = vld [vmem:[%s234 + $0x30] sm:$0xff]
              %249 = vst [vmem:[%s235 + $0x30] sm:$0xff] %v248
              %v250 = vld [vmem:[%s234 + $0x38] sm:$0xff]
              %251 = vst [vmem:[%s235 + $0x38] sm:$0xff] %v250
              %v252 = vld [vmem:[%s234 + $0x40] sm:$0xff]
              %253 = vst [vmem:[%s235 + $0x40] sm:$0xff] %v252
              %v254 = vld [vmem:[%s234 + $0x48] sm:$0xff]
              %255 = vst [vmem:[%s235 + $0x48] sm:$0xff] %v254
              %v256 = vld [vmem:[%s234 + $0x50] sm:$0xff]
              %257 = vst [vmem:[%s235 + $0x50] sm:$0xff] %v256
              %v258 = vld [vmem:[%s234 + $0x58] sm:$0xff]
              %259 = vst [vmem:[%s235 + $0x58] sm:$0xff] %v258
              %v260 = vld [vmem:[%s234 + $0x60] sm:$0xff]
              %261 = vst [vmem:[%s235 + $0x60] sm:$0xff] %v260
              %v262 = vld [vmem:[%s234 + $0x68] sm:$0xff]
              %263 = vst [vmem:[%s235 + $0x68] sm:$0xff] %v262
              %v264 = vld [vmem:[%s234 + $0x70] sm:$0xff]
              %265 = vst [vmem:[%s235 + $0x70] sm:$0xff] %v264
              %v266 = vld [vmem:[%s234 + $0x78] sm:$0xff]
              %267 = vst [vmem:[%s235 + $0x78] sm:$0xff] %v266
              %v268 = vld [vmem:[%s234 + $0x80] sm:$0xff]
              %269 = vst [vmem:[%s235 + $0x80] sm:$0xff] %v268
              %v270 = vld [vmem:[%s234 + $0x88] sm:$0xff]
              %271 = vst [vmem:[%s235 + $0x88] sm:$0xff] %v270
              %v272 = vld [vmem:[%s234 + $0x90] sm:$0xff]
              %273 = vst [vmem:[%s235 + $0x90] sm:$0xff] %v272
              %v274 = vld [vmem:[%s234 + $0x98] sm:$0xff]
              %275 = vst [vmem:[%s235 + $0x98] sm:$0xff] %v274
              %v276 = vld [vmem:[%s234 + $0xa0] sm:$0xff]
              %277 = vst [vmem:[%s235 + $0xa0] sm:$0xff] %v276
              %v278 = vld [vmem:[%s234 + $0xa8] sm:$0xff]
              %279 = vst [vmem:[%s235 + $0xa8] sm:$0xff] %v278
              %v280 = vld [vmem:[%s234 + $0xb0] sm:$0xff]
              %281 = vst [vmem:[%s235 + $0xb0] sm:$0xff] %v280
              %v282 = vld [vmem:[%s234 + $0xb8] sm:$0xff]
              %283 = vst [vmem:[%s235 + $0xb8] sm:$0xff] %v282
              %v284 = vld [vmem:[%s234 + $0xc0] sm:$0xff]
              %285 = vst [vmem:[%s235 + $0xc0] sm:$0xff] %v284
              %v286 = vld [vmem:[%s234 + $0xc8] sm:$0xff]
              %287 = vst [vmem:[%s235 + $0xc8] sm:$0xff] %v286
              %v288 = vld [vmem:[%s234 + $0xd0] sm:$0xff]
              %289 = vst [vmem:[%s235 + $0xd0] sm:$0xff] %v288
            $region60: #{psp_forward.1} parent=54 // loop_footer
              %s233 = sadd.s32 1, %s229
            $region61: #{psp_forward.1} parent=54 // loop_footer_branch
              %228 = sbr.rel target = $region57
            $region62: #{psp_forward.1} parent=54 // loop_exit
              _
          $region55: #{psp_forward.1} parent=39 // pred_fallthru
            _
          %p290 = pneg %p224
          // Predicated region
          $region63: #{psp_forward.1} parent=39 // pred_check
            _
          $region64: #{psp_forward.1} parent=39 // pred_check_branch
            %292 = sbr.rel (%p224) target = $region66
          $region65: #{psp_forward.1} parent=39 // pred_region
            %s293 = sand.u32 216, 7
          $region66: #{psp_forward.1} parent=39 // pred_fallthru
            _
        $region40: #{psp_forward.1} parent=35 // pred_fallthru
          _
        // Predicated region
        $region41: #{psp_forward.1} parent=35 // pred_check
          %p209 = pneg %p205
        $region42: #{psp_forward.1} parent=35 // pred_check_branch
          %211 = sbr.rel (%p209) target = $region44
        $region43: #{psp_forward.1} parent=35 // pred_region
          %s212 = sshllo.u32 0, 216
          loop: start=0, step=1, limit=1
          $region45: #{psp_forward.1} parent=43 // loop_pre_header
            _
          $region46: #{psp_forward.1} parent=43 // loop_header
            %s214 = sphi 0, %s218
            %p215 = scmp.ge.s32.totalorder %s214, 1
            %s219 = sphi %s199, %s199
            %s220 = sphi %s202, %s202
          $region47: #{psp_forward.1} parent=43 // loop_header_branch
            %217 = sbr.rel (%p215) target = $region51
          $region48: #{psp_forward.1} parent=43 // loop_body
            %v221 = vld [vmem:[%s219] sm:%s212]
            %222 = vst [vmem:[%s220] sm:%s212] %v221
          $region49: #{psp_forward.1} parent=43 // loop_footer
            %s218 = sadd.s32 1, %s214
          $region50: #{psp_forward.1} parent=43 // loop_footer_branch
            %213 = sbr.rel target = $region46
          $region51: #{psp_forward.1} parent=43 // loop_exit
            _
        $region44: #{psp_forward.1} parent=35 // pred_fallthru
          _
        // Predicated region
        $region67: #{psp_forward.1} parent=35 // pred_check
          _
        $region68: #{psp_forward.1} parent=35 // pred_check_branch
          %296 = sbr.rel (0) target = $region70
        $region69: #{psp_forward.1} parent=35 // pred_region
          %297 = vsyncadd %s203, 3456
        $region70: #{psp_forward.1} parent=35 // pred_fallthru
          _
      $region36: #{psp_forward.1} parent=31 // pred_fallthru
        _
      %s298 = sadd.s32 %s20, 1
      %p299 = scmp.lt.s32.totalorder %s298, 1
      // Predicated region
      $region71: #{psp_forward.1} parent=31 // pred_check
        %p300 = pneg %p299
      $region72: #{psp_forward.1} parent=31 // pred_check_branch
        %302 = sbr.rel (%p300) target = $region74
      $region73: #{psp_forward.1} parent=31 // pred_region
        %p303 = scmp.lt.s32.totalorder %s298, 0
        %s304 = ssub.s32 0, %s298
        %s305 = scalar_select %p303, %s304, %s298
        %s306 = sand.u32 %s305, 1
        %s307 = ssub.s32 0, %s306
        %s308 = scalar_select %p303, %s307, %s306
        %p309 = scmp.ne.s32.totalorder %s308, 0
        %p310 = scmp.lt.s32.totalorder %s308, 0
        %p311 = pnand %p310, %p309
        %p312 = pneg %p311
        %s313 = sadd.s32 %s308, 2
        %s314 = scalar_select %p312, %s313, %s308
        %s315 = smul.u32 %s298, 16
        %s316 = smul.u32 %s315, 3
        %s317 = smul.u32 %s19, 54
        %s318 = sadd.s32 %s316, %s317
        %s319 = smul.addr %s318, 4
        %s320 = scalar_lea.vmem %s0, %s319
        %s321 = smul.u32 %s314, 54
        %s322 = smul.addr %s321, 4
        %s323 = scalar_lea.vmem [#allocation2], %s322
        %s324 = scalar_lea.sflag [#allocation3], %s314
        %p326 = scmp.lt.u32.totalorder 216, 8
        %p327 = pneg %p326
        // Predicated region
        $region75: #{psp_forward.1} parent=73 // pred_check
          _
        $region76: #{psp_forward.1} parent=73 // pred_check_branch
          %329 = sbr.rel (%p326) target = $region78
        $region77: #{psp_forward.1} parent=73 // pred_region
          %s344 = sand.u32 216, 7
          %p345 = scmp.eq.s32.totalorder %s344, 0
          // Predicated region
          $region90: #{psp_forward.1} parent=77 // pred_check
            %p346 = pneg %p345
          $region91: #{psp_forward.1} parent=77 // pred_check_branch
            %348 = sbr.rel (%p346) target = $region93
          $region92: #{psp_forward.1} parent=77 // pred_region
            loop: start=0, step=1, limit=1
            $region94: #{psp_forward.1} parent=92 // loop_pre_header
              _
            $region95: #{psp_forward.1} parent=92 // loop_header
              %s350 = sphi 0, %s354
              %p351 = scmp.ge.s32.totalorder %s350, 1
              %s355 = sphi %s320, %s320
              %s356 = sphi %s323, %s323
            $region96: #{psp_forward.1} parent=92 // loop_header_branch
              %353 = sbr.rel (%p351) target = $region100
            $region97: #{psp_forward.1} parent=92 // loop_body
              %v357 = vld [vmem:[%s355] sm:$0xff]
              %358 = vst [vmem:[%s356] sm:$0xff] %v357
              %v359 = vld [vmem:[%s355 + $0x8] sm:$0xff]
              %360 = vst [vmem:[%s356 + $0x8] sm:$0xff] %v359
              %v361 = vld [vmem:[%s355 + $0x10] sm:$0xff]
              %362 = vst [vmem:[%s356 + $0x10] sm:$0xff] %v361
              %v363 = vld [vmem:[%s355 + $0x18] sm:$0xff]
              %364 = vst [vmem:[%s356 + $0x18] sm:$0xff] %v363
              %v365 = vld [vmem:[%s355 + $0x20] sm:$0xff]
              %366 = vst [vmem:[%s356 + $0x20] sm:$0xff] %v365
              %v367 = vld [vmem:[%s355 + $0x28] sm:$0xff]
              %368 = vst [vmem:[%s356 + $0x28] sm:$0xff] %v367
              %v369 = vld [vmem:[%s355 + $0x30] sm:$0xff]
              %370 = vst [vmem:[%s356 + $0x30] sm:$0xff] %v369
              %v371 = vld [vmem:[%s355 + $0x38] sm:$0xff]
              %372 = vst [vmem:[%s356 + $0x38] sm:$0xff] %v371
              %v373 = vld [vmem:[%s355 + $0x40] sm:$0xff]
              %374 = vst [vmem:[%s356 + $0x40] sm:$0xff] %v373
              %v375 = vld [vmem:[%s355 + $0x48] sm:$0xff]
              %376 = vst [vmem:[%s356 + $0x48] sm:$0xff] %v375
              %v377 = vld [vmem:[%s355 + $0x50] sm:$0xff]
              %378 = vst [vmem:[%s356 + $0x50] sm:$0xff] %v377
              %v379 = vld [vmem:[%s355 + $0x58] sm:$0xff]
              %380 = vst [vmem:[%s356 + $0x58] sm:$0xff] %v379
              %v381 = vld [vmem:[%s355 + $0x60] sm:$0xff]
              %382 = vst [vmem:[%s356 + $0x60] sm:$0xff] %v381
              %v383 = vld [vmem:[%s355 + $0x68] sm:$0xff]
              %384 = vst [vmem:[%s356 + $0x68] sm:$0xff] %v383
              %v385 = vld [vmem:[%s355 + $0x70] sm:$0xff]
              %386 = vst [vmem:[%s356 + $0x70] sm:$0xff] %v385
              %v387 = vld [vmem:[%s355 + $0x78] sm:$0xff]
              %388 = vst [vmem:[%s356 + $0x78] sm:$0xff] %v387
              %v389 = vld [vmem:[%s355 + $0x80] sm:$0xff]
              %390 = vst [vmem:[%s356 + $0x80] sm:$0xff] %v389
              %v391 = vld [vmem:[%s355 + $0x88] sm:$0xff]
              %392 = vst [vmem:[%s356 + $0x88] sm:$0xff] %v391
              %v393 = vld [vmem:[%s355 + $0x90] sm:$0xff]
              %394 = vst [vmem:[%s356 + $0x90] sm:$0xff] %v393
              %v395 = vld [vmem:[%s355 + $0x98] sm:$0xff]
              %396 = vst [vmem:[%s356 + $0x98] sm:$0xff] %v395
              %v397 = vld [vmem:[%s355 + $0xa0] sm:$0xff]
              %398 = vst [vmem:[%s356 + $0xa0] sm:$0xff] %v397
              %v399 = vld [vmem:[%s355 + $0xa8] sm:$0xff]
              %400 = vst [vmem:[%s356 + $0xa8] sm:$0xff] %v399
              %v401 = vld [vmem:[%s355 + $0xb0] sm:$0xff]
              %402 = vst [vmem:[%s356 + $0xb0] sm:$0xff] %v401
              %v403 = vld [vmem:[%s355 + $0xb8] sm:$0xff]
              %404 = vst [vmem:[%s356 + $0xb8] sm:$0xff] %v403
              %v405 = vld [vmem:[%s355 + $0xc0] sm:$0xff]
              %406 = vst [vmem:[%s356 + $0xc0] sm:$0xff] %v405
              %v407 = vld [vmem:[%s355 + $0xc8] sm:$0xff]
              %408 = vst [vmem:[%s356 + $0xc8] sm:$0xff] %v407
              %v409 = vld [vmem:[%s355 + $0xd0] sm:$0xff]
              %410 = vst [vmem:[%s356 + $0xd0] sm:$0xff] %v409
            $region98: #{psp_forward.1} parent=92 // loop_footer
              %s354 = sadd.s32 1, %s350
            $region99: #{psp_forward.1} parent=92 // loop_footer_branch
              %349 = sbr.rel target = $region95
            $region100: #{psp_forward.1} parent=92 // loop_exit
              _
          $region93: #{psp_forward.1} parent=77 // pred_fallthru
            _
          %p411 = pneg %p345
          // Predicated region
          $region101: #{psp_forward.1} parent=77 // pred_check
            _
          $region102: #{psp_forward.1} parent=77 // pred_check_branch
            %413 = sbr.rel (%p345) target = $region104
          $region103: #{psp_forward.1} parent=77 // pred_region
            %s414 = sand.u32 216, 7
          $region104: #{psp_forward.1} parent=77 // pred_fallthru
            _
        $region78: #{psp_forward.1} parent=73 // pred_fallthru
          _
        // Predicated region
        $region79: #{psp_forward.1} parent=73 // pred_check
          %p330 = pneg %p326
        $region80: #{psp_forward.1} parent=73 // pred_check_branch
          %332 = sbr.rel (%p330) target = $region82
        $region81: #{psp_forward.1} parent=73 // pred_region
          %s333 = sshllo.u32 0, 216
          loop: start=0, step=1, limit=1
          $region83: #{psp_forward.1} parent=81 // loop_pre_header
            _
          $region84: #{psp_forward.1} parent=81 // loop_header
            %s335 = sphi 0, %s339
            %p336 = scmp.ge.s32.totalorder %s335, 1
            %s340 = sphi %s320, %s320
            %s341 = sphi %s323, %s323
          $region85: #{psp_forward.1} parent=81 // loop_header_branch
            %338 = sbr.rel (%p336) target = $region89
          $region86: #{psp_forward.1} parent=81 // loop_body
            %v342 = vld [vmem:[%s340] sm:%s333]
            %343 = vst [vmem:[%s341] sm:%s333] %v342
          $region87: #{psp_forward.1} parent=81 // loop_footer
            %s339 = sadd.s32 1, %s335
          $region88: #{psp_forward.1} parent=81 // loop_footer_branch
            %334 = sbr.rel target = $region84
          $region89: #{psp_forward.1} parent=81 // loop_exit
            _
        $region82: #{psp_forward.1} parent=73 // pred_fallthru
          _
        // Predicated region
        $region105: #{psp_forward.1} parent=73 // pred_check
          _
        $region106: #{psp_forward.1} parent=73 // pred_check_branch
          %417 = sbr.rel (0) target = $region108
        $region107: #{psp_forward.1} parent=73 // pred_region
          %418 = vsyncadd %s324, 3456
        $region108: #{psp_forward.1} parent=73 // pred_fallthru
          _
      $region74: #{psp_forward.1} parent=31 // pred_fallthru
        _
      %s419 = smul.u32 %s189, 54
      %s420 = smul.addr %s419, 4
      %s421 = scalar_lea.vmem [#allocation2], %s420
      %s422 = scalar_lea.sflag [#allocation3], %s189
      %s423 = smul.u32 4, 18
      %s424 = smul.u32 %s423, 3
      %s425 = smul.u32 %s424, 1
      %s426 = sshll.u32 %s425, 4
      %427 = dma.done %s422, %s426
      %v428 = vld [vmem:[%s421] sm:$0xf]
      %v429 = vld [vmem:[%s421 + $0x4] sm:$0xf]
      %v430 = vld [vmem:[%s421 + $0x8] sm:$0xf]
      %v431 = vld [vmem:[%s421 + $0xc] sm:$0xf]
      %v432 = vld [vmem:[%s421 + $0x10] sm:$0xf]
      %v433 = vld [vmem:[%s421 + $0x14] sm:$0xf]
      %v434 = vld [vmem:[%s421 + $0x18] sm:$0xf]
      %v435 = vld [vmem:[%s421 + $0x1c] sm:$0xf]
      %v436 = vld [vmem:[%s421 + $0x20] sm:$0xf]
      %v437 = vld [vmem:[%s421 + $0x24] sm:$0xf]
      %v438 = vld [vmem:[%s421 + $0x28] sm:$0xf]
      %v439 = vld [vmem:[%s421 + $0x2c] sm:$0xf]
      %v440 = vld [vmem:[%s421 + $0x30] sm:$0xf]
      %v441 = vld [vmem:[%s421 + $0x34] sm:$0xf]
      %v442 = vld [vmem:[%s421 + $0x38] sm:$0xf]
      %v443 = vld [vmem:[%s421 + $0x3c] sm:$0xf]
      %v444 = vld [vmem:[%s421 + $0x40] sm:$0xf]
      %v445 = vld [vmem:[%s421 + $0x44] sm:$0xf]
      %v446 = vld [vmem:[%s421 + $0x48] sm:$0xf]
      %v447 = vld [vmem:[%s421 + $0x4c] sm:$0xf]
      %v448 = vld [vmem:[%s421 + $0x50] sm:$0xf]
      %v449 = vld [vmem:[%s421 + $0x54] sm:$0xf]
      %v450 = vld [vmem:[%s421 + $0x58] sm:$0xf]
      %v451 = vld [vmem:[%s421 + $0x5c] sm:$0xf]
      %v452 = vld [vmem:[%s421 + $0x60] sm:$0xf]
      %v453 = vld [vmem:[%s421 + $0x64] sm:$0xf]
      %v454 = vld [vmem:[%s421 + $0x68] sm:$0xf]
      %v455 = vld [vmem:[%s421 + $0x6c] sm:$0xf]
      %v456 = vld [vmem:[%s421 + $0x70] sm:$0xf]
      %v457 = vld [vmem:[%s421 + $0x74] sm:$0xf]
      %v458 = vld [vmem:[%s421 + $0x78] sm:$0xf]
      %v459 = vld [vmem:[%s421 + $0x7c] sm:$0xf]
      %v460 = vld [vmem:[%s421 + $0x80] sm:$0xf]
      %v461 = vld [vmem:[%s421 + $0x84] sm:$0xf]
      %v462 = vld [vmem:[%s421 + $0x88] sm:$0xf]
      %v463 = vld [vmem:[%s421 + $0x8c] sm:$0xf]
      %v464 = vld [vmem:[%s421 + $0x90] sm:$0xf]
      %v465 = vld [vmem:[%s421 + $0x94] sm:$0xf]
      %v466 = vld [vmem:[%s421 + $0x98] sm:$0xf]
      %v467 = vld [vmem:[%s421 + $0x9c] sm:$0xf]
      %v468 = vld [vmem:[%s421 + $0xa0] sm:$0xf]
      %v469 = vld [vmem:[%s421 + $0xa4] sm:$0xf]
      %v470 = vld [vmem:[%s421 + $0xa8] sm:$0xf]
      %v471 = vld [vmem:[%s421 + $0xac] sm:$0xf]
      %v472 = vld [vmem:[%s421 + $0xb0] sm:$0xf]
      %v473 = vld [vmem:[%s421 + $0xb4] sm:$0xf]
      %v474 = vld [vmem:[%s421 + $0xb8] sm:$0xf]
      %v475 = vld [vmem:[%s421 + $0xbc] sm:$0xf]
      %v476 = vld [vmem:[%s421 + $0xc0] sm:$0xf]
      %v477 = vld [vmem:[%s421 + $0xc4] sm:$0xf]
      %v478 = vld [vmem:[%s421 + $0xc8] sm:$0xf]
      %v479 = vld [vmem:[%s421 + $0xcc] sm:$0xf]
      %v480 = vld [vmem:[%s421 + $0xd0] sm:$0xf]
      %v481 = vld [vmem:[%s421 + $0xd4] sm:$0xf]
      %v514 = vunpack.c.l.b16 %v428
      %v515 = vunpack.c.l.b16 %v429
      %v516 = vunpack.c.l.b16 %v431
      %v517 = vunpack.c.l.b16 %v432
      %v518 = vunpack.c.l.b16 %v434
      %v519 = vunpack.c.l.b16 %v435
      %v520 = vunpack.c.l.b16 %v437
      %v521 = vunpack.c.l.b16 %v438
      %v522 = vunpack.c.l.b16 %v440
      %v523 = vunpack.c.l.b16 %v441
      %v524 = vunpack.c.l.b16 %v443
      %v525 = vunpack.c.l.b16 %v444
      %v526 = vunpack.c.l.b16 %v446
      %v527 = vunpack.c.l.b16 %v447
      %v528 = vunpack.c.l.b16 %v449
      %v529 = vunpack.c.l.b16 %v450
      %v530 = vunpack.c.l.b16 %v452
      %v531 = vunpack.c.l.b16 %v453
      %v532 = vunpack.c.l.b16 %v455
      %v533 = vunpack.c.l.b16 %v456
      %v534 = vunpack.c.l.b16 %v458
      %v535 = vunpack.c.l.b16 %v459
      %v536 = vunpack.c.l.b16 %v461
      %v537 = vunpack.c.l.b16 %v462
      %v538 = vunpack.c.l.b16 %v464
      %v539 = vunpack.c.l.b16 %v465
      %v540 = vunpack.c.l.b16 %v467
      %v541 = vunpack.c.l.b16 %v468
      %v542 = vunpack.c.l.b16 %v470
      %v543 = vunpack.c.l.b16 %v471
      %v544 = vunpack.c.l.b16 %v473
      %v545 = vunpack.c.l.b16 %v474
      %v546 = vpack.c.b16 %v515, %v514
      %v547 = vpack.c.b16 %v517, %v516
      %v548 = vpack.c.b16 %v519, %v518
      %v549 = vpack.c.b16 %v521, %v520
      %v550 = vpack.c.b16 %v523, %v522
      %v551 = vpack.c.b16 %v525, %v524
      %v552 = vpack.c.b16 %v527, %v526
      %v553 = vpack.c.b16 %v529, %v528
      %v554 = vpack.c.b16 %v531, %v530
      %v555 = vpack.c.b16 %v533, %v532
      %v556 = vpack.c.b16 %v535, %v534
      %v557 = vpack.c.b16 %v537, %v536
      %v558 = vpack.c.b16 %v539, %v538
      %v559 = vpack.c.b16 %v541, %v540
      %v560 = vpack.c.b16 %v543, %v542
      %v561 = vpack.c.b16 %v545, %v544
      %v580 = vunpack.c.l.b16 %v476
      %v581 = vunpack.c.l.b16 %v477
      %v582 = vpack.c.b16 %v581, %v580
      %v586 = vunpack.c.l.b16 %v479
      %v587 = vunpack.c.l.b16 %v480
      %v588 = vpack.c.b16 %v587, %v586
      %v590 = vld [vmem:[%s1] sm:$0xf]
      %v591 = vld [vmem:[%s1 + $0x4] sm:$0xf]
      %v592 = vld [vmem:[%s1 + $0x8] sm:$0xf]
      %v593 = vld [vmem:[%s1 + $0xc] sm:$0xf]
      %v594 = vld [vmem:[%s1 + $0x10] sm:$0xf]
      %v595 = vld [vmem:[%s1 + $0x14] sm:$0xf]
      %v596 = vld [vmem:[%s1 + $0x18] sm:$0xf]
      %v597 = vld [vmem:[%s1 + $0x1c] sm:$0xf]
      %v598 = vld [vmem:[%s1 + $0x20] sm:$0xf]
      %v599 = vld [vmem:[%s1 + $0x24] sm:$0xf]
      %v600 = vld [vmem:[%s1 + $0x28] sm:$0xf]
      %v601 = vld [vmem:[%s1 + $0x2c] sm:$0xf]
      %v602 = vld [vmem:[%s1 + $0x30] sm:$0xf]
      %v603 = vld [vmem:[%s1 + $0x34] sm:$0xf]
      %v604 = vld [vmem:[%s1 + $0x38] sm:$0xf]
      %v605 = vld [vmem:[%s1 + $0x3c] sm:$0xf]
      %v606 = vld [vmem:[%s1 + $0x40] sm:$0xf]
      %v607 = vld [vmem:[%s1 + $0x44] sm:$0xf]
      %v608 = vld [vmem:[%s1 + $0x48] sm:$0xf]
      %v609 = vld [vmem:[%s1 + $0x4c] sm:$0xf]
      %v610 = vld [vmem:[%s1 + $0x50] sm:$0xf]
      %v611 = vld [vmem:[%s1 + $0x54] sm:$0xf]
      %v612 = vld [vmem:[%s1 + $0x58] sm:$0xf]
      %v613 = vld [vmem:[%s1 + $0x5c] sm:$0xf]
      %v614 = vld [vmem:[%s1 + $0x60] sm:$0xf]
      %v615 = vld [vmem:[%s1 + $0x64] sm:$0xf]
      %v616 = vld [vmem:[%s1 + $0x68] sm:$0xf]
      %v617 = vld [vmem:[%s1 + $0x6c] sm:$0xf]
      %v618 = vld [vmem:[%s1 + $0x70] sm:$0xf]
      %v619 = vld [vmem:[%s1 + $0x74] sm:$0xf]
      %v620 = vld [vmem:[%s1 + $0x78] sm:$0xf]
      %v621 = vld [vmem:[%s1 + $0x7c] sm:$0xf]
      %v622 = vld [vmem:[%s1 + $0x80] sm:$0xf]
      %v623 = vld [vmem:[%s1 + $0x84] sm:$0xf]
      %v624 = vld [vmem:[%s1 + $0x88] sm:$0xf]
      %v625 = vld [vmem:[%s1 + $0x8c] sm:$0xf]
      %v626 = vld [vmem:[%s1 + $0x90] sm:$0xf]
      %v627 = vld [vmem:[%s1 + $0x94] sm:$0xf]
      %v628 = vld [vmem:[%s1 + $0x98] sm:$0xf]
      %v629 = vld [vmem:[%s1 + $0x9c] sm:$0xf]
      %v630 = vld [vmem:[%s1 + $0xa0] sm:$0xf]
      %v631 = vld [vmem:[%s1 + $0xa4] sm:$0xf]
      %v632 = vld [vmem:[%s1 + $0xa8] sm:$0xf]
      %v633 = vld [vmem:[%s1 + $0xac] sm:$0xf]
      %v634 = vld [vmem:[%s1 + $0xb0] sm:$0xf]
      %v635 = vld [vmem:[%s1 + $0xb4] sm:$0xf]
      %v636 = vld [vmem:[%s1 + $0xb8] sm:$0xf]
      %v637 = vld [vmem:[%s1 + $0xbc] sm:$0xf]
      %v654 = vunpack.c.l.b16 %v430
      %v655 = vunpack.c.l.b16 %v433
      %v656 = vunpack.c.l.b16 %v436
      %v657 = vunpack.c.l.b16 %v439
      %v658 = vunpack.c.l.b16 %v442
      %v659 = vunpack.c.l.b16 %v445
      %v660 = vunpack.c.l.b16 %v448
      %v661 = vunpack.c.l.b16 %v451
      %v662 = vunpack.c.l.b16 %v454
      %v663 = vunpack.c.l.b16 %v457
      %v664 = vunpack.c.l.b16 %v460
      %v665 = vunpack.c.l.b16 %v463
      %v666 = vunpack.c.l.b16 %v466
      %v667 = vunpack.c.l.b16 %v469
      %v668 = vunpack.c.l.b16 %v472
      %v669 = vunpack.c.l.b16 %v475
      %v670 = vpack.c.b16 %v654, %v654
      %v671 = vpack.c.b16 %v655, %v655
      %v672 = vpack.c.b16 %v656, %v656
      %v673 = vpack.c.b16 %v657, %v657
      %v674 = vpack.c.b16 %v658, %v658
      %v675 = vpack.c.b16 %v659, %v659
      %v676 = vpack.c.b16 %v660, %v660
      %v677 = vpack.c.b16 %v661, %v661
      %v678 = vpack.c.b16 %v662, %v662
      %v679 = vpack.c.b16 %v663, %v663
      %v680 = vpack.c.b16 %v664, %v664
      %v681 = vpack.c.b16 %v665, %v665
      %v682 = vpack.c.b16 %v666, %v666
      %v683 = vpack.c.b16 %v667, %v667
      %v684 = vpack.c.b16 %v668, %v668
      %v685 = vpack.c.b16 %v669, %v669
      %v687 = vunpack.c.l.b16 %v478
      %v688 = vpack.c.b16 %v687, %v687
      %v690 = vunpack.c.l.b16 %v481
      %v691 = vpack.c.b16 %v690, %v690
      %vm692 = vsmask.f32 7424
      %v694 = vshrl.u32 %v546, 16
      %v696 = vshll.u32 %v546, 16
      %v698 = vrot.slane %v696, 1
      %v699 = vor.u32 %v694, %v698
      %v701 = vshll.u32 %v670, 16
      %v703 = vrot.slane %v701, 1
      %v704 = vsel %vm692, %v699, %v703
      %v706 = vshrl.u32 %v547, 16
      %v708 = vshll.u32 %v547, 16
      %v710 = vrot.slane %v708, 1
      %v711 = vor.u32 %v706, %v710
      %v713 = vshll.u32 %v671, 16
      %v715 = vrot.slane %v713, 1
      %v716 = vsel %vm692, %v711, %v715
      %v718 = vshrl.u32 %v548, 16
      %v720 = vshll.u32 %v548, 16
      %v722 = vrot.slane %v720, 1
      %v723 = vor.u32 %v718, %v722
      %v725 = vshll.u32 %v672, 16
      %v727 = vrot.slane %v725, 1
      %v728 = vsel %vm692, %v723, %v727
      %v730 = vshrl.u32 %v549, 16
      %v732 = vshll.u32 %v549, 16
      %v734 = vrot.slane %v732, 1
      %v735 = vor.u32 %v730, %v734
      %v737 = vshll.u32 %v673, 16
      %v739 = vrot.slane %v737, 1
      %v740 = vsel %vm692, %v735, %v739
      %v742 = vshrl.u32 %v550, 16
      %v744 = vshll.u32 %v550, 16
      %v746 = vrot.slane %v744, 1
      %v747 = vor.u32 %v742, %v746
      %v749 = vshll.u32 %v674, 16
      %v751 = vrot.slane %v749, 1
      %v752 = vsel %vm692, %v747, %v751
      %v754 = vshrl.u32 %v551, 16
      %v756 = vshll.u32 %v551, 16
      %v758 = vrot.slane %v756, 1
      %v759 = vor.u32 %v754, %v758
      %v761 = vshll.u32 %v675, 16
      %v763 = vrot.slane %v761, 1
      %v764 = vsel %vm692, %v759, %v763
      %v766 = vshrl.u32 %v552, 16
      %v768 = vshll.u32 %v552, 16
      %v770 = vrot.slane %v768, 1
      %v771 = vor.u32 %v766, %v770
      %v773 = vshll.u32 %v676, 16
      %v775 = vrot.slane %v773, 1
      %v776 = vsel %vm692, %v771, %v775
      %v778 = vshrl.u32 %v553, 16
      %v780 = vshll.u32 %v553, 16
      %v782 = vrot.slane %v780, 1
      %v783 = vor.u32 %v778, %v782
      %v785 = vshll.u32 %v677, 16
      %v787 = vrot.slane %v785, 1
      %v788 = vsel %vm692, %v783, %v787
      %v790 = vshrl.u32 %v554, 16
      %v792 = vshll.u32 %v554, 16
      %v794 = vrot.slane %v792, 1
      %v795 = vor.u32 %v790, %v794
      %v797 = vshll.u32 %v678, 16
      %v799 = vrot.slane %v797, 1
      %v800 = vsel %vm692, %v795, %v799
      %v802 = vshrl.u32 %v555, 16
      %v804 = vshll.u32 %v555, 16
      %v806 = vrot.slane %v804, 1
      %v807 = vor.u32 %v802, %v806
      %v809 = vshll.u32 %v679, 16
      %v811 = vrot.slane %v809, 1
      %v812 = vsel %vm692, %v807, %v811
      %v814 = vshrl.u32 %v556, 16
      %v816 = vshll.u32 %v556, 16
      %v818 = vrot.slane %v816, 1
      %v819 = vor.u32 %v814, %v818
      %v821 = vshll.u32 %v680, 16
      %v823 = vrot.slane %v821, 1
      %v824 = vsel %vm692, %v819, %v823
      %v826 = vshrl.u32 %v557, 16
      %v828 = vshll.u32 %v557, 16
      %v830 = vrot.slane %v828, 1
      %v831 = vor.u32 %v826, %v830
      %v833 = vshll.u32 %v681, 16
      %v835 = vrot.slane %v833, 1
      %v836 = vsel %vm692, %v831, %v835
      %v838 = vshrl.u32 %v558, 16
      %v840 = vshll.u32 %v558, 16
      %v842 = vrot.slane %v840, 1
      %v843 = vor.u32 %v838, %v842
      %v845 = vshll.u32 %v682, 16
      %v847 = vrot.slane %v845, 1
      %v848 = vsel %vm692, %v843, %v847
      %v850 = vshrl.u32 %v559, 16
      %v852 = vshll.u32 %v559, 16
      %v854 = vrot.slane %v852, 1
      %v855 = vor.u32 %v850, %v854
      %v857 = vshll.u32 %v683, 16
      %v859 = vrot.slane %v857, 1
      %v860 = vsel %vm692, %v855, %v859
      %v862 = vshrl.u32 %v560, 16
      %v864 = vshll.u32 %v560, 16
      %v866 = vrot.slane %v864, 1
      %v867 = vor.u32 %v862, %v866
      %v869 = vshll.u32 %v684, 16
      %v871 = vrot.slane %v869, 1
      %v872 = vsel %vm692, %v867, %v871
      %v874 = vshrl.u32 %v561, 16
      %v876 = vshll.u32 %v561, 16
      %v878 = vrot.slane %v876, 1
      %v879 = vor.u32 %v874, %v878
      %v881 = vshll.u32 %v685, 16
      %v883 = vrot.slane %v881, 1
      %v884 = vsel %vm692, %v879, %v883
      %v886 = vshrl.u32 %v582, 16
      %v888 = vshll.u32 %v582, 16
      %v890 = vrot.slane %v888, 1
      %v891 = vor.u32 %v886, %v890
      %v893 = vshll.u32 %v688, 16
      %v895 = vrot.slane %v893, 1
      %v896 = vsel %vm692, %v891, %v895
      %v898 = vshrl.u32 %v588, 16
      %v900 = vshll.u32 %v588, 16
      %v902 = vrot.slane %v900, 1
      %v903 = vor.u32 %v898, %v902
      %v905 = vshll.u32 %v691, 16
      %v907 = vrot.slane %v905, 1
      %v908 = vsel %vm692, %v903, %v907
      %s927 = scalar_lea.vmem %s1, 192
      %v928 = vld [vmem:[%s927] sm:$0xf]
      %v929 = vld [vmem:[%s927 + $0x4] sm:$0xf]
      %v930 = vld [vmem:[%s927 + $0x8] sm:$0xf]
      %v931 = vld [vmem:[%s927 + $0xc] sm:$0xf]
      %v932 = vld [vmem:[%s927 + $0x10] sm:$0xf]
      %v933 = vld [vmem:[%s927 + $0x14] sm:$0xf]
      %v934 = vld [vmem:[%s927 + $0x18] sm:$0xf]
      %v935 = vld [vmem:[%s927 + $0x1c] sm:$0xf]
      %v936 = vld [vmem:[%s927 + $0x20] sm:$0xf]
      %v937 = vld [vmem:[%s927 + $0x24] sm:$0xf]
      %v938 = vld [vmem:[%s927 + $0x28] sm:$0xf]
      %v939 = vld [vmem:[%s927 + $0x2c] sm:$0xf]
      %v940 = vld [vmem:[%s927 + $0x30] sm:$0xf]
      %v941 = vld [vmem:[%s927 + $0x34] sm:$0xf]
      %v942 = vld [vmem:[%s927 + $0x38] sm:$0xf]
      %v943 = vld [vmem:[%s927 + $0x3c] sm:$0xf]
      %v944 = vld [vmem:[%s927 + $0x40] sm:$0xf]
      %v945 = vld [vmem:[%s927 + $0x44] sm:$0xf]
      %v946 = vld [vmem:[%s927 + $0x48] sm:$0xf]
      %v947 = vld [vmem:[%s927 + $0x4c] sm:$0xf]
      %v948 = vld [vmem:[%s927 + $0x50] sm:$0xf]
      %v949 = vld [vmem:[%s927 + $0x54] sm:$0xf]
      %v950 = vld [vmem:[%s927 + $0x58] sm:$0xf]
      %v951 = vld [vmem:[%s927 + $0x5c] sm:$0xf]
      %v952 = vld [vmem:[%s927 + $0x60] sm:$0xf]
      %v953 = vld [vmem:[%s927 + $0x64] sm:$0xf]
      %v954 = vld [vmem:[%s927 + $0x68] sm:$0xf]
      %v955 = vld [vmem:[%s927 + $0x6c] sm:$0xf]
      %v956 = vld [vmem:[%s927 + $0x70] sm:$0xf]
      %v957 = vld [vmem:[%s927 + $0x74] sm:$0xf]
      %v958 = vld [vmem:[%s927 + $0x78] sm:$0xf]
      %v959 = vld [vmem:[%s927 + $0x7c] sm:$0xf]
      %v960 = vld [vmem:[%s927 + $0x80] sm:$0xf]
      %v961 = vld [vmem:[%s927 + $0x84] sm:$0xf]
      %v962 = vld [vmem:[%s927 + $0x88] sm:$0xf]
      %v963 = vld [vmem:[%s927 + $0x8c] sm:$0xf]
      %v964 = vld [vmem:[%s927 + $0x90] sm:$0xf]
      %v965 = vld [vmem:[%s927 + $0x94] sm:$0xf]
      %v966 = vld [vmem:[%s927 + $0x98] sm:$0xf]
      %v967 = vld [vmem:[%s927 + $0x9c] sm:$0xf]
      %v968 = vld [vmem:[%s927 + $0xa0] sm:$0xf]
      %v969 = vld [vmem:[%s927 + $0xa4] sm:$0xf]
      %v970 = vld [vmem:[%s927 + $0xa8] sm:$0xf]
      %v971 = vld [vmem:[%s927 + $0xac] sm:$0xf]
      %v972 = vld [vmem:[%s927 + $0xb0] sm:$0xf]
      %v973 = vld [vmem:[%s927 + $0xb4] sm:$0xf]
      %v974 = vld [vmem:[%s927 + $0xb8] sm:$0xf]
      %v975 = vld [vmem:[%s927 + $0xbc] sm:$0xf]
      %v1024 = vunpack.c.l.b16 %v928
      %v1025 = vunpack.c.l.b16 %v929
      %v1026 = vunpack.c.l.b16 %v930
      %v1027 = vunpack.c.l.b16 %v931
      %v1028 = vunpack.c.l.b16 %v932
      %v1029 = vunpack.c.l.b16 %v933
      %v1030 = vunpack.c.l.b16 %v934
      %v1031 = vunpack.c.l.b16 %v935
      %v1032 = vunpack.c.l.b16 %v936
      %v1033 = vunpack.c.l.b16 %v937
      %v1034 = vunpack.c.l.b16 %v938
      %v1035 = vunpack.c.l.b16 %v939
      %v1036 = vunpack.c.l.b16 %v940
      %v1037 = vunpack.c.l.b16 %v941
      %v1038 = vunpack.c.l.b16 %v942
      %v1039 = vunpack.c.l.b16 %v943
      %v1040 = vunpack.c.l.b16 %v944
      %v1041 = vunpack.c.l.b16 %v945
      %v1042 = vunpack.c.l.b16 %v946
      %v1043 = vunpack.c.l.b16 %v947
      %v1044 = vunpack.c.l.b16 %v948
      %v1045 = vunpack.c.l.b16 %v949
      %v1046 = vunpack.c.l.b16 %v950
      %v1047 = vunpack.c.l.b16 %v951
      %v1048 = vunpack.c.l.b16 %v952
      %v1049 = vunpack.c.l.b16 %v953
      %v1050 = vunpack.c.l.b16 %v954
      %v1051 = vunpack.c.l.b16 %v955
      %v1052 = vunpack.c.l.b16 %v956
      %v1053 = vunpack.c.l.b16 %v957
      %v1054 = vunpack.c.l.b16 %v958
      %v1055 = vunpack.c.l.b16 %v959
      %v1056 = vunpack.c.l.b16 %v960
      %v1057 = vunpack.c.l.b16 %v961
      %v1058 = vunpack.c.l.b16 %v962
      %v1059 = vunpack.c.l.b16 %v963
      %v1060 = vunpack.c.l.b16 %v964
      %v1061 = vunpack.c.l.b16 %v965
      %v1062 = vunpack.c.l.b16 %v966
      %v1063 = vunpack.c.l.b16 %v967
      %v1064 = vunpack.c.l.b16 %v968
      %v1065 = vunpack.c.l.b16 %v969
      %v1066 = vunpack.c.l.b16 %v970
      %v1067 = vunpack.c.l.b16 %v971
      %v1068 = vunpack.c.l.b16 %v972
      %v1069 = vunpack.c.l.b16 %v973
      %v1070 = vunpack.c.l.b16 %v974
      %v1071 = vunpack.c.l.b16 %v975
      %v1072 = vpack.c.b16 %v1025, %v1024
      %v1073 = vpack.c.b16 %v1027, %v1026
      %v1074 = vpack.c.b16 %v1029, %v1028
      %v1075 = vpack.c.b16 %v1031, %v1030
      %v1076 = vpack.c.b16 %v1033, %v1032
      %v1077 = vpack.c.b16 %v1035, %v1034
      %v1078 = vpack.c.b16 %v1037, %v1036
      %v1079 = vpack.c.b16 %v1039, %v1038
      %v1080 = vpack.c.b16 %v1041, %v1040
      %v1081 = vpack.c.b16 %v1043, %v1042
      %v1082 = vpack.c.b16 %v1045, %v1044
      %v1083 = vpack.c.b16 %v1047, %v1046
      %v1084 = vpack.c.b16 %v1049, %v1048
      %v1085 = vpack.c.b16 %v1051, %v1050
      %v1086 = vpack.c.b16 %v1053, %v1052
      %v1087 = vpack.c.b16 %v1055, %v1054
      %v1088 = vpack.c.b16 %v1057, %v1056
      %v1089 = vpack.c.b16 %v1059, %v1058
      %v1090 = vpack.c.b16 %v1061, %v1060
      %v1091 = vpack.c.b16 %v1063, %v1062
      %v1092 = vpack.c.b16 %v1065, %v1064
      %v1093 = vpack.c.b16 %v1067, %v1066
      %v1094 = vpack.c.b16 %v1069, %v1068
      %v1095 = vpack.c.b16 %v1071, %v1070
      %1120 = vmatprep.subr.bf16.mxu0 0
      %1121 = vmatpush1.bf16.msra.mxu0 %v1072
      %1122 = vmatprep.subr.bf16.mxu0 0
      %1123 = vmatpush1.bf16.msra.mxu0 %v1073
      %1124 = vmatprep.subr.bf16.mxu0 0
      %1125 = vmatpush1.bf16.msra.mxu0 %v1074
      %1126 = vmatprep.subr.bf16.mxu0 0
      %1127 = vmatpush1.bf16.msra.mxu0 %v1075
      %1128 = vmatprep.subr.bf16.mxu0 0
      %1129 = vmatpush1.bf16.msra.mxu0 %v1076
      %1130 = vmatprep.subr.bf16.mxu0 0
      %1131 = vmatpush1.bf16.msra.mxu0 %v1077
      %1132 = vmatprep.subr.bf16.mxu0 0
      %1133 = vmatpush1.bf16.msra.mxu0 %v1078
      %1134 = vmatprep.subr.bf16.mxu0 0
      %1135 = vmatpush1.bf16.msra.mxu0 %v1079
      %1136 = vmatprep.subr.bf16.mxu0 0
      %1137 = vmatpush1.bf16.msra.mxu0 %v1080
      %1138 = vmatprep.subr.bf16.mxu0 0
      %1139 = vmatpush1.bf16.msra.mxu0 %v1081
      %1140 = vmatprep.subr.bf16.mxu0 0
      %1141 = vmatpush1.bf16.msra.mxu0 %v1082
      %1142 = vmatprep.subr.bf16.mxu0 0
      %1143 = vmatpush1.bf16.msra.mxu0 %v1083
      %1144 = vmatprep.subr.bf16.mxu0 0
      %1145 = vmatpush1.bf16.msra.mxu0 %v1084
      %1146 = vmatprep.subr.bf16.mxu0 0
      %1147 = vmatpush1.bf16.msra.mxu0 %v1085
      %1148 = vmatprep.subr.bf16.mxu0 0
      %1149 = vmatpush1.bf16.msra.mxu0 %v1086
      %1150 = vmatprep.subr.bf16.mxu0 0
      %1151 = vmatpush1.bf16.msra.mxu0 %v1087
      %1152 = vmatprep.mubr.bf16.mxu0 %v716
      %1153 = vmatmul.mubr.bf16.gmra.mrb[0].mxu0 %v704
      %v1154 = vpop.f32.mrb[0].mxu0
      %v1155 = vadd.f32 0.0, %v1154
      %v1156 = vpop.f32.mrb[0].mxu0
      %v1157 = vpop.f32.mrb[0].mxu0
      %v1158 = vadd.f32 0.0, %v1157
      %v1159 = vpop.f32.mrb[0].mxu0
      %1160 = vmatprep.mubr.bf16.mxu0 %v728
      %1161 = vmatmul.mubr.bf16.gmra.mrb[0].mxu0 %v716
      %v1162 = vpop.f32.mrb[0].mxu0
      %v1163 = vadd.f32 0.0, %v1162
      %v1164 = vpop.f32.mrb[0].mxu0
      %v1165 = vpop.f32.mrb[0].mxu0
      %v1166 = vadd.f32 0.0, %v1165
      %v1167 = vpop.f32.mrb[0].mxu0
      %1168 = vmatprep.mubr.bf16.mxu0 %v740
      %1169 = vmatmul.mubr.bf16.gmra.mrb[0].mxu0 %v728
      %v1170 = vpop.f32.mrb[0].mxu0
      %v1171 = vadd.f32 0.0, %v1170
      %v1172 = vpop.f32.mrb[0].mxu0
      %v1173 = vpop.f32.mrb[0].mxu0
      %v1174 = vadd.f32 0.0, %v1173
      %v1175 = vpop.f32.mrb[0].mxu0
      %1176 = vmatprep.mubr.bf16.mxu0 %v752
      %1177 = vmatmul.mubr.bf16.gmra.mrb[0].mxu0 %v740
      %v1178 = vpop.f32.mrb[0].mxu0
      %v1179 = vadd.f32 0.0, %v1178
      %v1180 = vpop.f32.mrb[0].mxu0
      %v1181 = vpop.f32.mrb[0].mxu0
      %v1182 = vadd.f32 0.0, %v1181
      %v1183 = vpop.f32.mrb[0].mxu0
      %1184 = vmatprep.mubr.bf16.mxu0 %v764
      %1185 = vmatmul.mubr.bf16.gmra.mrb[0].mxu0 %v752
      %v1186 = vpop.f32.mrb[0].mxu0
      %v1187 = vadd.f32 0.0, %v1186
      %v1188 = vpop.f32.mrb[0].mxu0
      %v1189 = vpop.f32.mrb[0].mxu0
      %v1190 = vadd.f32 0.0, %v1189
      %v1191 = vpop.f32.mrb[0].mxu0
      %1192 = vmatprep.mubr.bf16.mxu0 %v776
      %1193 = vmatmul.mubr.bf16.gmra.mrb[0].mxu0 %v764
      %v1194 = vpop.f32.mrb[0].mxu0
      %v1195 = vadd.f32 0.0, %v1194
      %v1196 = vpop.f32.mrb[0].mxu0
      %v1197 = vpop.f32.mrb[0].mxu0
      %v1198 = vadd.f32 0.0, %v1197
      %v1199 = vpop.f32.mrb[0].mxu0
      %1200 = vmatprep.mubr.bf16.mxu0 %v788
      %1201 = vmatmul.mubr.bf16.gmra.mrb[0].mxu0 %v776
      %v1202 = vpop.f32.mrb[0].mxu0
      %v1203 = vadd.f32 0.0, %v1202
      %v1204 = vpop.f32.mrb[0].mxu0
      %v1205 = vpop.f32.mrb[0].mxu0
      %v1206 = vadd.f32 0.0, %v1205
      %v1207 = vpop.f32.mrb[0].mxu0
      %1208 = vmatprep.mubr.bf16.mxu0 %v800
      %1209 = vmatmul.mubr.bf16.gmra.mrb[0].mxu0 %v788
      %v1210 = vpop.f32.mrb[0].mxu0
      %v1211 = vadd.f32 0.0, %v1210
      %v1212 = vpop.f32.mrb[0].mxu0
      %v1213 = vpop.f32.mrb[0].mxu0
      %v1214 = vadd.f32 0.0, %v1213
      %v1215 = vpop.f32.mrb[0].mxu0
      %1216 = vmatprep.mubr.bf16.mxu0 %v812
      %1217 = vmatmul.mubr.bf16.gmra.mrb[0].mxu0 %v800
      %v1218 = vpop.f32.mrb[0].mxu0
      %v1219 = vadd.f32 0.0, %v1218
      %v1220 = vpop.f32.mrb[0].mxu0
      %v1221 = vpop.f32.mrb[0].mxu0
      %v1222 = vadd.f32 0.0, %v1221
      %v1223 = vpop.f32.mrb[0].mxu0
      %1224 = vmatprep.mubr.bf16.mxu0 %v824
      %1225 = vmatmul.mubr.bf16.gmra.mrb[0].mxu0 %v812
      %v1226 = vpop.f32.mrb[0].mxu0
      %v1227 = vadd.f32 0.0, %v1226
      %v1228 = vpop.f32.mrb[0].mxu0
      %v1229 = vpop.f32.mrb[0].mxu0
      %v1230 = vadd.f32 0.0, %v1229
      %v1231 = vpop.f32.mrb[0].mxu0
      %1232 = vmatprep.mubr.bf16.mxu0 %v836
      %1233 = vmatmul.mubr.bf16.gmra.mrb[0].mxu0 %v824
      %v1234 = vpop.f32.mrb[0].mxu0
      %v1235 = vadd.f32 0.0, %v1234
      %v1236 = vpop.f32.mrb[0].mxu0
      %v1237 = vpop.f32.mrb[0].mxu0
      %v1238 = vadd.f32 0.0, %v1237
      %v1239 = vpop.f32.mrb[0].mxu0
      %1240 = vmatprep.mubr.bf16.mxu0 %v848
      %1241 = vmatmul.mubr.bf16.gmra.mrb[0].mxu0 %v836
      %v1242 = vpop.f32.mrb[0].mxu0
      %v1243 = vadd.f32 0.0, %v1242
      %v1244 = vpop.f32.mrb[0].mxu0
      %v1245 = vpop.f32.mrb[0].mxu0
      %v1246 = vadd.f32 0.0, %v1245
      %v1247 = vpop.f32.mrb[0].mxu0
      %1248 = vmatprep.mubr.bf16.mxu0 %v860
      %1249 = vmatmul.mubr.bf16.gmra.mrb[0].mxu0 %v848
      %v1250 = vpop.f32.mrb[0].mxu0
      %v1251 = vadd.f32 0.0, %v1250
      %v1252 = vpop.f32.mrb[0].mxu0
      %v1253 = vpop.f32.mrb[0].mxu0
      %v1254 = vadd.f32 0.0, %v1253
      %v1255 = vpop.f32.mrb[0].mxu0
      %1256 = vmatprep.mubr.bf16.mxu0 %v872
      %1257 = vmatmul.mubr.bf16.gmra.mrb[0].mxu0 %v860
      %v1258 = vpop.f32.mrb[0].mxu0
      %v1259 = vadd.f32 0.0, %v1258
      %v1260 = vpop.f32.mrb[0].mxu0
      %v1261 = vpop.f32.mrb[0].mxu0
      %v1262 = vadd.f32 0.0, %v1261
      %v1263 = vpop.f32.mrb[0].mxu0
      %1264 = vmatprep.mubr.bf16.mxu0 %v884
      %1265 = vmatmul.mubr.bf16.gmra.mrb[0].mxu0 %v872
      %v1266 = vpop.f32.mrb[0].mxu0
      %v1267 = vadd.f32 0.0, %v1266
      %v1268 = vpop.f32.mrb[0].mxu0
      %v1269 = vpop.f32.mrb[0].mxu0
      %v1270 = vadd.f32 0.0, %v1269
      %v1271 = vpop.f32.mrb[0].mxu0
      %1272 = vmatprep.mubr.bf16.mxu0 %v896
      %1273 = vmatmul.mubr.bf16.gmra.mrb[0].mxu0 %v884
      %v1274 = vpop.f32.mrb[0].mxu0
      %v1275 = vadd.f32 0.0, %v1274
      %v1276 = vpop.f32.mrb[0].mxu0
      %v1277 = vpop.f32.mrb[0].mxu0
      %v1278 = vadd.f32 0.0, %v1277
      %v1279 = vpop.f32.mrb[0].mxu0
      %1280 = vdwg.mxu0
      %1281 = vmatprep.subr.bf16.mxu0 0
      %1282 = vmatpush1.bf16.msra.mxu0 %v1088
      %1283 = vmatprep.subr.bf16.mxu0 0
      %1284 = vmatpush1.bf16.msra.mxu0 %v1089
      %1285 = vmatprep.subr.bf16.mxu0 0
      %1286 = vmatpush1.bf16.msra.mxu0 %v1090
      %1287 = vmatprep.subr.bf16.mxu0 0
      %1288 = vmatpush1.bf16.msra.mxu0 %v1091
      %1289 = vmatprep.subr.bf16.mxu0 0
      %1290 = vmatpush1.bf16.msra.mxu0 %v1092
      %1291 = vmatprep.subr.bf16.mxu0 0
      %1292 = vmatpush1.bf16.msra.mxu0 %v1093
      %1293 = vmatprep.subr.bf16.mxu0 0
      %1294 = vmatpush1.bf16.msra.mxu0 %v1094
      %1295 = vmatprep.subr.bf16.mxu0 0
      %1296 = vmatpush1.bf16.msra.mxu0 %v1095
      %1297 = vmatprep.subr.bf16.mxu0 0
      %1298 = vmatpush1.bf16.msra.mxu0 0
      %1299 = vmatprep.subr.bf16.mxu0 0
      %1300 = vmatpush1.bf16.msra.mxu0 0
      %1301 = vmatprep.subr.bf16.mxu0 0
      %1302 = vmatpush1.bf16.msra.mxu0 0
      %1303 = vmatprep.subr.bf16.mxu0 0
      %1304 = vmatpush1.bf16.msra.mxu0 0
      %1305 = vmatprep.subr.bf16.mxu0 0
      %1306 = vmatpush1.bf16.msra.mxu0 0
      %1307 = vmatprep.subr.bf16.mxu0 0
      %1308 = vmatpush1.bf16.msra.mxu0 0
      %1309 = vmatprep.subr.bf16.mxu0 0
      %1310 = vmatpush1.bf16.msra.mxu0 0
      %1311 = vmatprep.subr.bf16.mxu0 0
      %1312 = vmatpush1.bf16.msra.mxu0 0
      %1313 = vmatprep.mubr.bf16.mxu0 0
      %1314 = vmatmul.mubr.bf16.gmra.mrb[0].mxu0 %v728
      %v1315 = vpop.f32.mrb[0].mxu0
      %v1316 = vadd.f32 %v1155, %v1315
      %v1317 = vpop.f32.mrb[0].mxu0
      %v1318 = vpop.f32.mrb[0].mxu0
      %v1319 = vadd.f32 %v1158, %v1318
      %v1320 = vpop.f32.mrb[0].mxu0
      %1321 = vmatprep.mubr.bf16.mxu0 0
      %1322 = vmatmul.mubr.bf16.gmra.mrb[0].mxu0 %v740
      %v1323 = vpop.f32.mrb[0].mxu0
      %v1324 = vadd.f32 %v1163, %v1323
      %v1325 = vpop.f32.mrb[0].mxu0
      %v1326 = vpop.f32.mrb[0].mxu0
      %v1327 = vadd.f32 %v1166, %v1326
      %v1328 = vpop.f32.mrb[0].mxu0
      %1329 = vmatprep.mubr.bf16.mxu0 0
      %1330 = vmatmul.mubr.bf16.gmra.mrb[0].mxu0 %v752
      %v1331 = vpop.f32.mrb[0].mxu0
      %v1332 = vadd.f32 %v1171, %v1331
      %v1333 = vpop.f32.mrb[0].mxu0
      %v1334 = vpop.f32.mrb[0].mxu0
      %v1335 = vadd.f32 %v1174, %v1334
      %v1336 = vpop.f32.mrb[0].mxu0
      %1337 = vmatprep.mubr.bf16.mxu0 0
      %1338 = vmatmul.mubr.bf16.gmra.mrb[0].mxu0 %v764
      %v1339 = vpop.f32.mrb[0].mxu0
      %v1340 = vadd.f32 %v1179, %v1339
      %v1341 = vpop.f32.mrb[0].mxu0
      %v1342 = vpop.f32.mrb[0].mxu0
      %v1343 = vadd.f32 %v1182, %v1342
      %v1344 = vpop.f32.mrb[0].mxu0
      %1345 = vmatprep.mubr.bf16.mxu0 0
      %1346 = vmatmul.mubr.bf16.gmra.mrb[0].mxu0 %v776
      %v1347 = vpop.f32.mrb[0].mxu0
      %v1348 = vadd.f32 %v1187, %v1347
      %v1349 = vpop.f32.mrb[0].mxu0
      %v1350 = vpop.f32.mrb[0].mxu0
      %v1351 = vadd.f32 %v1190, %v1350
      %v1352 = vpop.f32.mrb[0].mxu0
      %1353 = vmatprep.mubr.bf16.mxu0 0
      %1354 = vmatmul.mubr.bf16.gmra.mrb[0].mxu0 %v788
      %v1355 = vpop.f32.mrb[0].mxu0
      %v1356 = vadd.f32 %v1195, %v1355
      %v1357 = vpop.f32.mrb[0].mxu0
      %v1358 = vpop.f32.mrb[0].mxu0
      %v1359 = vadd.f32 %v1198, %v1358
      %v1360 = vpop.f32.mrb[0].mxu0
      %1361 = vmatprep.mubr.bf16.mxu0 0
      %1362 = vmatmul.mubr.bf16.gmra.mrb[0].mxu0 %v800
      %v1363 = vpop.f32.mrb[0].mxu0
      %v1364 = vadd.f32 %v1203, %v1363
      %v1365 = vpop.f32.mrb[0].mxu0
      %v1366 = vpop.f32.mrb[0].mxu0
      %v1367 = vadd.f32 %v1206, %v1366
      %v1368 = vpop.f32.mrb[0].mxu0
      %1369 = vmatprep.mubr.bf16.mxu0 0
      %1370 = vmatmul.mubr.bf16.gmra.mrb[0].mxu0 %v812
      %v1371 = vpop.f32.mrb[0].mxu0
      %v1372 = vadd.f32 %v1211, %v1371
      %v1373 = vpop.f32.mrb[0].mxu0
      %v1374 = vpop.f32.mrb[0].mxu0
      %v1375 = vadd.f32 %v1214, %v1374
      %v1376 = vpop.f32.mrb[0].mxu0
      %1377 = vmatprep.mubr.bf16.mxu0 0
      %1378 = vmatmul.mubr.bf16.gmra.mrb[0].mxu0 %v824
      %v1379 = vpop.f32.mrb[0].mxu0
      %v1380 = vadd.f32 %v1219, %v1379
      %v1381 = vpop.f32.mrb[0].mxu0
      %v1382 = vpop.f32.mrb[0].mxu0
      %v1383 = vadd.f32 %v1222, %v1382
      %v1384 = vpop.f32.mrb[0].mxu0
      %1385 = vmatprep.mubr.bf16.mxu0 0
      %1386 = vmatmul.mubr.bf16.gmra.mrb[0].mxu0 %v836
      %v1387 = vpop.f32.mrb[0].mxu0
      %v1388 = vadd.f32 %v1227, %v1387
      %v1389 = vpop.f32.mrb[0].mxu0
      %v1390 = vpop.f32.mrb[0].mxu0
      %v1391 = vadd.f32 %v1230, %v1390
      %v1392 = vpop.f32.mrb[0].mxu0
      %1393 = vmatprep.mubr.bf16.mxu0 0
      %1394 = vmatmul.mubr.bf16.gmra.mrb[0].mxu0 %v848
      %v1395 = vpop.f32.mrb[0].mxu0
      %v1396 = vadd.f32 %v1235, %v1395
      %v1397 = vpop.f32.mrb[0].mxu0
      %v1398 = vpop.f32.mrb[0].mxu0
      %v1399 = vadd.f32 %v1238, %v1398
      %v1400 = vpop.f32.mrb[0].mxu0
      %1401 = vmatprep.mubr.bf16.mxu0 0
      %1402 = vmatmul.mubr.bf16.gmra.mrb[0].mxu0 %v860
      %v1403 = vpop.f32.mrb[0].mxu0
      %v1404 = vadd.f32 %v1243, %v1403
      %v1405 = vpop.f32.mrb[0].mxu0
      %v1406 = vpop.f32.mrb[0].mxu0
      %v1407 = vadd.f32 %v1246, %v1406
      %v1408 = vpop.f32.mrb[0].mxu0
      %1409 = vmatprep.mubr.bf16.mxu0 0
      %1410 = vmatmul.mubr.bf16.gmra.mrb[0].mxu0 %v872
      %v1411 = vpop.f32.mrb[0].mxu0
      %v1412 = vadd.f32 %v1251, %v1411
      %v1413 = vpop.f32.mrb[0].mxu0
      %v1414 = vpop.f32.mrb[0].mxu0
      %v1415 = vadd.f32 %v1254, %v1414
      %v1416 = vpop.f32.mrb[0].mxu0
      %1417 = vmatprep.mubr.bf16.mxu0 0
      %1418 = vmatmul.mubr.bf16.gmra.mrb[0].mxu0 %v884
      %v1419 = vpop.f32.mrb[0].mxu0
      %v1420 = vadd.f32 %v1259, %v1419
      %v1421 = vpop.f32.mrb[0].mxu0
      %v1422 = vpop.f32.mrb[0].mxu0
      %v1423 = vadd.f32 %v1262, %v1422
      %v1424 = vpop.f32.mrb[0].mxu0
      %1425 = vmatprep.mubr.bf16.mxu0 0
      %1426 = vmatmul.mubr.bf16.gmra.mrb[0].mxu0 %v896
      %v1427 = vpop.f32.mrb[0].mxu0
      %v1428 = vadd.f32 %v1267, %v1427
      %v1429 = vpop.f32.mrb[0].mxu0
      %v1430 = vpop.f32.mrb[0].mxu0
      %v1431 = vadd.f32 %v1270, %v1430
      %v1432 = vpop.f32.mrb[0].mxu0
      %1433 = vmatprep.mubr.bf16.mxu0 0
      %1434 = vmatmul.mubr.bf16.gmra.mrb[0].mxu0 %v908
      %v1435 = vpop.f32.mrb[0].mxu0
      %v1436 = vadd.f32 %v1275, %v1435
      %v1437 = vpop.f32.mrb[0].mxu0
      %v1438 = vpop.f32.mrb[0].mxu0
      %v1439 = vadd.f32 %v1278, %v1438
      %v1440 = vpop.f32.mrb[0].mxu0
      %1441 = vdwg.mxu0
      %v1490 = vunpack.c.l.b16 %v590
      %v1491 = vunpack.c.l.b16 %v591
      %v1492 = vunpack.c.l.b16 %v592
      %v1493 = vunpack.c.l.b16 %v593
      %v1494 = vunpack.c.l.b16 %v594
      %v1495 = vunpack.c.l.b16 %v595
      %v1496 = vunpack.c.l.b16 %v596
      %v1497 = vunpack.c.l.b16 %v597
      %v1498 = vunpack.c.l.b16 %v598
      %v1499 = vunpack.c.l.b16 %v599
      %v1500 = vunpack.c.l.b16 %v600
      %v1501 = vunpack.c.l.b16 %v601
      %v1502 = vunpack.c.l.b16 %v602
      %v1503 = vunpack.c.l.b16 %v603
      %v1504 = vunpack.c.l.b16 %v604
      %v1505 = vunpack.c.l.b16 %v605
      %v1506 = vunpack.c.l.b16 %v606
      %v1507 = vunpack.c.l.b16 %v607
      %v1508 = vunpack.c.l.b16 %v608
      %v1509 = vunpack.c.l.b16 %v609
      %v1510 = vunpack.c.l.b16 %v610
      %v1511 = vunpack.c.l.b16 %v611
      %v1512 = vunpack.c.l.b16 %v612
      %v1513 = vunpack.c.l.b16 %v613
      %v1514 = vunpack.c.l.b16 %v614
      %v1515 = vunpack.c.l.b16 %v615
      %v1516 = vunpack.c.l.b16 %v616
      %v1517 = vunpack.c.l.b16 %v617
      %v1518 = vunpack.c.l.b16 %v618
      %v1519 = vunpack.c.l.b16 %v619
      %v1520 = vunpack.c.l.b16 %v620
      %v1521 = vunpack.c.l.b16 %v621
      %v1522 = vunpack.c.l.b16 %v622
      %v1523 = vunpack.c.l.b16 %v623
      %v1524 = vunpack.c.l.b16 %v624
      %v1525 = vunpack.c.l.b16 %v625
      %v1526 = vunpack.c.l.b16 %v626
      %v1527 = vunpack.c.l.b16 %v627
      %v1528 = vunpack.c.l.b16 %v628
      %v1529 = vunpack.c.l.b16 %v629
      %v1530 = vunpack.c.l.b16 %v630
      %v1531 = vunpack.c.l.b16 %v631
      %v1532 = vunpack.c.l.b16 %v632
      %v1533 = vunpack.c.l.b16 %v633
      %v1534 = vunpack.c.l.b16 %v634
      %v1535 = vunpack.c.l.b16 %v635
      %v1536 = vunpack.c.l.b16 %v636
      %v1537 = vunpack.c.l.b16 %v637
      %v1538 = vpack.c.b16 %v1491, %v1490
      %v1539 = vpack.c.b16 %v1493, %v1492
      %v1540 = vpack.c.b16 %v1495, %v1494
      %v1541 = vpack.c.b16 %v1497, %v1496
      %v1542 = vpack.c.b16 %v1499, %v1498
      %v1543 = vpack.c.b16 %v1501, %v1500
      %v1544 = vpack.c.b16 %v1503, %v1502
      %v1545 = vpack.c.b16 %v1505, %v1504
      %v1546 = vpack.c.b16 %v1507, %v1506
      %v1547 = vpack.c.b16 %v1509, %v1508
      %v1548 = vpack.c.b16 %v1511, %v1510
      %v1549 = vpack.c.b16 %v1513, %v1512
      %v1550 = vpack.c.b16 %v1515, %v1514
      %v1551 = vpack.c.b16 %v1517, %v1516
      %v1552 = vpack.c.b16 %v1519, %v1518
      %v1553 = vpack.c.b16 %v1521, %v1520
      %v1554 = vpack.c.b16 %v1523, %v1522
      %v1555 = vpack.c.b16 %v1525, %v1524
      %v1556 = vpack.c.b16 %v1527, %v1526
      %v1557 = vpack.c.b16 %v1529, %v1528
      %v1558 = vpack.c.b16 %v1531, %v1530
      %v1559 = vpack.c.b16 %v1533, %v1532
      %v1560 = vpack.c.b16 %v1535, %v1534
      %v1561 = vpack.c.b16 %v1537, %v1536
      %1586 = vmatprep.subr.bf16.mxu0 0
      %1587 = vmatpush1.bf16.msra.mxu0 %v1538
      %1588 = vmatprep.subr.bf16.mxu0 0
      %1589 = vmatpush1.bf16.msra.mxu0 %v1539
      %1590 = vmatprep.subr.bf16.mxu0 0
      %1591 = vmatpush1.bf16.msra.mxu0 %v1540
      %1592 = vmatprep.subr.bf16.mxu0 0
      %1593 = vmatpush1.bf16.msra.mxu0 %v1541
      %1594 = vmatprep.subr.bf16.mxu0 0
      %1595 = vmatpush1.bf16.msra.mxu0 %v1542
      %1596 = vmatprep.subr.bf16.mxu0 0
      %1597 = vmatpush1.bf16.msra.mxu0 %v1543
      %1598 = vmatprep.subr.bf16.mxu0 0
      %1599 = vmatpush1.bf16.msra.mxu0 %v1544
      %1600 = vmatprep.subr.bf16.mxu0 0
      %1601 = vmatpush1.bf16.msra.mxu0 %v1545
      %1602 = vmatprep.subr.bf16.mxu0 0
      %1603 = vmatpush1.bf16.msra.mxu0 %v1546
      %1604 = vmatprep.subr.bf16.mxu0 0
      %1605 = vmatpush1.bf16.msra.mxu0 %v1547
      %1606 = vmatprep.subr.bf16.mxu0 0
      %1607 = vmatpush1.bf16.msra.mxu0 %v1548
      %1608 = vmatprep.subr.bf16.mxu0 0
      %1609 = vmatpush1.bf16.msra.mxu0 %v1549
      %1610 = vmatprep.subr.bf16.mxu0 0
      %1611 = vmatpush1.bf16.msra.mxu0 %v1550
      %1612 = vmatprep.subr.bf16.mxu0 0
      %1613 = vmatpush1.bf16.msra.mxu0 %v1551
      %1614 = vmatprep.subr.bf16.mxu0 0
      %1615 = vmatpush1.bf16.msra.mxu0 %v1552
      %1616 = vmatprep.subr.bf16.mxu0 0
      %1617 = vmatpush1.bf16.msra.mxu0 %v1553
      %1618 = vmatprep.mubr.bf16.mxu0 %v547
      %1619 = vmatmul.mubr.bf16.gmra.mrb[0].mxu0 %v546
      %v1620 = vpop.f32.mrb[0].mxu0
      %v1621 = vadd.f32 %v1316, %v1620
      %v1622 = vpop.f32.mrb[0].mxu0
      %v1623 = vpop.f32.mrb[0].mxu0
      %v1624 = vadd.f32 %v1319, %v1623
      %v1625 = vpop.f32.mrb[0].mxu0
      %1626 = vmatprep.mubr.bf16.mxu0 %v548
      %1627 = vmatmul.mubr.bf16.gmra.mrb[0].mxu0 %v547
      %v1628 = vpop.f32.mrb[0].mxu0
      %v1629 = vadd.f32 %v1324, %v1628
      %v1630 = vpop.f32.mrb[0].mxu0
      %v1631 = vpop.f32.mrb[0].mxu0
      %v1632 = vadd.f32 %v1327, %v1631
      %v1633 = vpop.f32.mrb[0].mxu0
      %1634 = vmatprep.mubr.bf16.mxu0 %v549
      %1635 = vmatmul.mubr.bf16.gmra.mrb[0].mxu0 %v548
      %v1636 = vpop.f32.mrb[0].mxu0
      %v1637 = vadd.f32 %v1332, %v1636
      %v1638 = vpop.f32.mrb[0].mxu0
      %v1639 = vpop.f32.mrb[0].mxu0
      %v1640 = vadd.f32 %v1335, %v1639
      %v1641 = vpop.f32.mrb[0].mxu0
      %1642 = vmatprep.mubr.bf16.mxu0 %v550
      %1643 = vmatmul.mubr.bf16.gmra.mrb[0].mxu0 %v549
      %v1644 = vpop.f32.mrb[0].mxu0
      %v1645 = vadd.f32 %v1340, %v1644
      %v1646 = vpop.f32.mrb[0].mxu0
      %v1647 = vpop.f32.mrb[0].mxu0
      %v1648 = vadd.f32 %v1343, %v1647
      %v1649 = vpop.f32.mrb[0].mxu0
      %1650 = vmatprep.mubr.bf16.mxu0 %v551
      %1651 = vmatmul.mubr.bf16.gmra.mrb[0].mxu0 %v550
      %v1652 = vpop.f32.mrb[0].mxu0
      %v1653 = vadd.f32 %v1348, %v1652
      %v1654 = vpop.f32.mrb[0].mxu0
      %v1655 = vpop.f32.mrb[0].mxu0
      %v1656 = vadd.f32 %v1351, %v1655
      %v1657 = vpop.f32.mrb[0].mxu0
      %1658 = vmatprep.mubr.bf16.mxu0 %v552
      %1659 = vmatmul.mubr.bf16.gmra.mrb[0].mxu0 %v551
      %v1660 = vpop.f32.mrb[0].mxu0
      %v1661 = vadd.f32 %v1356, %v1660
      %v1662 = vpop.f32.mrb[0].mxu0
      %v1663 = vpop.f32.mrb[0].mxu0
      %v1664 = vadd.f32 %v1359, %v1663
      %v1665 = vpop.f32.mrb[0].mxu0
      %1666 = vmatprep.mubr.bf16.mxu0 %v553
      %1667 = vmatmul.mubr.bf16.gmra.mrb[0].mxu0 %v552
      %v1668 = vpop.f32.mrb[0].mxu0
      %v1669 = vadd.f32 %v1364, %v1668
      %v1670 = vpop.f32.mrb[0].mxu0
      %v1671 = vpop.f32.mrb[0].mxu0
      %v1672 = vadd.f32 %v1367, %v1671
      %v1673 = vpop.f32.mrb[0].mxu0
      %1674 = vmatprep.mubr.bf16.mxu0 %v554
      %1675 = vmatmul.mubr.bf16.gmra.mrb[0].mxu0 %v553
      %v1676 = vpop.f32.mrb[0].mxu0
      %v1677 = vadd.f32 %v1372, %v1676
      %v1678 = vpop.f32.mrb[0].mxu0
      %v1679 = vpop.f32.mrb[0].mxu0
      %v1680 = vadd.f32 %v1375, %v1679
      %v1681 = vpop.f32.mrb[0].mxu0
      %1682 = vmatprep.mubr.bf16.mxu0 %v555
      %1683 = vmatmul.mubr.bf16.gmra.mrb[0].mxu0 %v554
      %v1684 = vpop.f32.mrb[0].mxu0
      %v1685 = vadd.f32 %v1380, %v1684
      %v1686 = vpop.f32.mrb[0].mxu0
      %v1687 = vpop.f32.mrb[0].mxu0
      %v1688 = vadd.f32 %v1383, %v1687
      %v1689 = vpop.f32.mrb[0].mxu0
      %1690 = vmatprep.mubr.bf16.mxu0 %v556
      %1691 = vmatmul.mubr.bf16.gmra.mrb[0].mxu0 %v555
      %v1692 = vpop.f32.mrb[0].mxu0
      %v1693 = vadd.f32 %v1388, %v1692
      %v1694 = vpop.f32.mrb[0].mxu0
      %v1695 = vpop.f32.mrb[0].mxu0
      %v1696 = vadd.f32 %v1391, %v1695
      %v1697 = vpop.f32.mrb[0].mxu0
      %1698 = vmatprep.mubr.bf16.mxu0 %v557
      %1699 = vmatmul.mubr.bf16.gmra.mrb[0].mxu0 %v556
      %v1700 = vpop.f32.mrb[0].mxu0
      %v1701 = vadd.f32 %v1396, %v1700
      %v1702 = vpop.f32.mrb[0].mxu0
      %v1703 = vpop.f32.mrb[0].mxu0
      %v1704 = vadd.f32 %v1399, %v1703
      %v1705 = vpop.f32.mrb[0].mxu0
      %1706 = vmatprep.mubr.bf16.mxu0 %v558
      %1707 = vmatmul.mubr.bf16.gmra.mrb[0].mxu0 %v557
      %v1708 = vpop.f32.mrb[0].mxu0
      %v1709 = vadd.f32 %v1404, %v1708
      %v1710 = vpop.f32.mrb[0].mxu0
      %v1711 = vpop.f32.mrb[0].mxu0
      %v1712 = vadd.f32 %v1407, %v1711
      %v1713 = vpop.f32.mrb[0].mxu0
      %1714 = vmatprep.mubr.bf16.mxu0 %v559
      %1715 = vmatmul.mubr.bf16.gmra.mrb[0].mxu0 %v558
      %v1716 = vpop.f32.mrb[0].mxu0
      %v1717 = vadd.f32 %v1412, %v1716
      %v1718 = vpop.f32.mrb[0].mxu0
      %v1719 = vpop.f32.mrb[0].mxu0
      %v1720 = vadd.f32 %v1415, %v1719
      %v1721 = vpop.f32.mrb[0].mxu0
      %1722 = vmatprep.mubr.bf16.mxu0 %v560
      %1723 = vmatmul.mubr.bf16.gmra.mrb[0].mxu0 %v559
      %v1724 = vpop.f32.mrb[0].mxu0
      %v1725 = vadd.f32 %v1420, %v1724
      %v1726 = vpop.f32.mrb[0].mxu0
      %v1727 = vpop.f32.mrb[0].mxu0
      %v1728 = vadd.f32 %v1423, %v1727
      %v1729 = vpop.f32.mrb[0].mxu0
      %1730 = vmatprep.mubr.bf16.mxu0 %v561
      %1731 = vmatmul.mubr.bf16.gmra.mrb[0].mxu0 %v560
      %v1732 = vpop.f32.mrb[0].mxu0
      %v1733 = vadd.f32 %v1428, %v1732
      %v1734 = vpop.f32.mrb[0].mxu0
      %v1735 = vpop.f32.mrb[0].mxu0
      %v1736 = vadd.f32 %v1431, %v1735
      %v1737 = vpop.f32.mrb[0].mxu0
      %1738 = vmatprep.mubr.bf16.mxu0 %v582
      %1739 = vmatmul.mubr.bf16.gmra.mrb[0].mxu0 %v561
      %v1740 = vpop.f32.mrb[0].mxu0
      %v1741 = vadd.f32 %v1436, %v1740
      %v1742 = vpop.f32.mrb[0].mxu0
      %v1743 = vpop.f32.mrb[0].mxu0
      %v1744 = vadd.f32 %v1439, %v1743
      %v1745 = vpop.f32.mrb[0].mxu0
      %1746 = vdwg.mxu0
      %1747 = vmatprep.subr.bf16.mxu0 0
      %1748 = vmatpush1.bf16.msra.mxu0 %v1554
      %1749 = vmatprep.subr.bf16.mxu0 0
      %1750 = vmatpush1.bf16.msra.mxu0 %v1555
      %1751 = vmatprep.subr.bf16.mxu0 0
      %1752 = vmatpush1.bf16.msra.mxu0 %v1556
      %1753 = vmatprep.subr.bf16.mxu0 0
      %1754 = vmatpush1.bf16.msra.mxu0 %v1557
      %1755 = vmatprep.subr.bf16.mxu0 0
      %1756 = vmatpush1.bf16.msra.mxu0 %v1558
      %1757 = vmatprep.subr.bf16.mxu0 0
      %1758 = vmatpush1.bf16.msra.mxu0 %v1559
      %1759 = vmatprep.subr.bf16.mxu0 0
      %1760 = vmatpush1.bf16.msra.mxu0 %v1560
      %1761 = vmatprep.subr.bf16.mxu0 0
      %1762 = vmatpush1.bf16.msra.mxu0 %v1561
      %1763 = vmatprep.subr.bf16.mxu0 0
      %1764 = vmatpush1.bf16.msra.mxu0 0
      %1765 = vmatprep.subr.bf16.mxu0 0
      %1766 = vmatpush1.bf16.msra.mxu0 0
      %1767 = vmatprep.subr.bf16.mxu0 0
      %1768 = vmatpush1.bf16.msra.mxu0 0
      %1769 = vmatprep.subr.bf16.mxu0 0
      %1770 = vmatpush1.bf16.msra.mxu0 0
      %1771 = vmatprep.subr.bf16.mxu0 0
      %1772 = vmatpush1.bf16.msra.mxu0 0
      %1773 = vmatprep.subr.bf16.mxu0 0
      %1774 = vmatpush1.bf16.msra.mxu0 0
      %1775 = vmatprep.subr.bf16.mxu0 0
      %1776 = vmatpush1.bf16.msra.mxu0 0
      %1777 = vmatprep.subr.bf16.mxu0 0
      %1778 = vmatpush1.bf16.msra.mxu0 0
      %1779 = vmatprep.mubr.bf16.mxu0 0
      %1780 = vmatmul.mubr.bf16.gmra.mrb[0].mxu0 %v548
      %v1781 = vpop.f32.mrb[0].mxu0
      %v1782 = vadd.f32 %v1621, %v1781
      %v1783 = vpop.f32.mrb[0].mxu0
      %v1784 = vpop.f32.mrb[0].mxu0
      %v1785 = vadd.f32 %v1624, %v1784
      %v1786 = vpop.f32.mrb[0].mxu0
      %1787 = vmatprep.mubr.bf16.mxu0 0
      %1788 = vmatmul.mubr.bf16.gmra.mrb[0].mxu0 %v549
      %v1789 = vpop.f32.mrb[0].mxu0
      %v1790 = vadd.f32 %v1629, %v1789
      %v1791 = vpop.f32.mrb[0].mxu0
      %v1792 = vpop.f32.mrb[0].mxu0
      %v1793 = vadd.f32 %v1632, %v1792
      %v1794 = vpop.f32.mrb[0].mxu0
      %1795 = vmatprep.mubr.bf16.mxu0 0
      %1796 = vmatmul.mubr.bf16.gmra.mrb[0].mxu0 %v550
      %v1797 = vpop.f32.mrb[0].mxu0
      %v1798 = vadd.f32 %v1637, %v1797
      %v1799 = vpop.f32.mrb[0].mxu0
      %v1800 = vpop.f32.mrb[0].mxu0
      %v1801 = vadd.f32 %v1640, %v1800
      %v1802 = vpop.f32.mrb[0].mxu0
      %1803 = vmatprep.mubr.bf16.mxu0 0
      %1804 = vmatmul.mubr.bf16.gmra.mrb[0].mxu0 %v551
      %v1805 = vpop.f32.mrb[0].mxu0
      %v1806 = vadd.f32 %v1645, %v1805
      %v1807 = vpop.f32.mrb[0].mxu0
      %v1808 = vpop.f32.mrb[0].mxu0
      %v1809 = vadd.f32 %v1648, %v1808
      %v1810 = vpop.f32.mrb[0].mxu0
      %1811 = vmatprep.mubr.bf16.mxu0 0
      %1812 = vmatmul.mubr.bf16.gmra.mrb[0].mxu0 %v552
      %v1813 = vpop.f32.mrb[0].mxu0
      %v1814 = vadd.f32 %v1653, %v1813
      %v1815 = vpop.f32.mrb[0].mxu0
      %v1816 = vpop.f32.mrb[0].mxu0
      %v1817 = vadd.f32 %v1656, %v1816
      %v1818 = vpop.f32.mrb[0].mxu0
      %1819 = vmatprep.mubr.bf16.mxu0 0
      %1820 = vmatmul.mubr.bf16.gmra.mrb[0].mxu0 %v553
      %v1821 = vpop.f32.mrb[0].mxu0
      %v1822 = vadd.f32 %v1661, %v1821
      %v1823 = vpop.f32.mrb[0].mxu0
      %v1824 = vpop.f32.mrb[0].mxu0
      %v1825 = vadd.f32 %v1664, %v1824
      %v1826 = vpop.f32.mrb[0].mxu0
      %1827 = vmatprep.mubr.bf16.mxu0 0
      %1828 = vmatmul.mubr.bf16.gmra.mrb[0].mxu0 %v554
      %v1829 = vpop.f32.mrb[0].mxu0
      %v1830 = vadd.f32 %v1669, %v1829
      %v1831 = vpop.f32.mrb[0].mxu0
      %v1832 = vpop.f32.mrb[0].mxu0
      %v1833 = vadd.f32 %v1672, %v1832
      %v1834 = vpop.f32.mrb[0].mxu0
      %1835 = vmatprep.mubr.bf16.mxu0 0
      %1836 = vmatmul.mubr.bf16.gmra.mrb[0].mxu0 %v555
      %v1837 = vpop.f32.mrb[0].mxu0
      %v1838 = vadd.f32 %v1677, %v1837
      %v1839 = vpop.f32.mrb[0].mxu0
      %v1840 = vpop.f32.mrb[0].mxu0
      %v1841 = vadd.f32 %v1680, %v1840
      %v1842 = vpop.f32.mrb[0].mxu0
      %1843 = vmatprep.mubr.bf16.mxu0 0
      %1844 = vmatmul.mubr.bf16.gmra.mrb[0].mxu0 %v556
      %v1845 = vpop.f32.mrb[0].mxu0
      %v1846 = vadd.f32 %v1685, %v1845
      %v1847 = vpop.f32.mrb[0].mxu0
      %v1848 = vpop.f32.mrb[0].mxu0
      %v1849 = vadd.f32 %v1688, %v1848
      %v1850 = vpop.f32.mrb[0].mxu0
      %1851 = vmatprep.mubr.bf16.mxu0 0
      %1852 = vmatmul.mubr.bf16.gmra.mrb[0].mxu0 %v557
      %v1853 = vpop.f32.mrb[0].mxu0
      %v1854 = vadd.f32 %v1693, %v1853
      %v1855 = vpop.f32.mrb[0].mxu0
      %v1856 = vpop.f32.mrb[0].mxu0
      %v1857 = vadd.f32 %v1696, %v1856
      %v1858 = vpop.f32.mrb[0].mxu0
      %1859 = vmatprep.mubr.bf16.mxu0 0
      %1860 = vmatmul.mubr.bf16.gmra.mrb[0].mxu0 %v558
      %v1861 = vpop.f32.mrb[0].mxu0
      %v1862 = vadd.f32 %v1701, %v1861
      %v1863 = vpop.f32.mrb[0].mxu0
      %v1864 = vpop.f32.mrb[0].mxu0
      %v1865 = vadd.f32 %v1704, %v1864
      %v1866 = vpop.f32.mrb[0].mxu0
      %1867 = vmatprep.mubr.bf16.mxu0 0
      %1868 = vmatmul.mubr.bf16.gmra.mrb[0].mxu0 %v559
      %v1869 = vpop.f32.mrb[0].mxu0
      %v1870 = vadd.f32 %v1709, %v1869
      %v1871 = vpop.f32.mrb[0].mxu0
      %v1872 = vpop.f32.mrb[0].mxu0
      %v1873 = vadd.f32 %v1712, %v1872
      %v1874 = vpop.f32.mrb[0].mxu0
      %1875 = vmatprep.mubr.bf16.mxu0 0
      %1876 = vmatmul.mubr.bf16.gmra.mrb[0].mxu0 %v560
      %v1877 = vpop.f32.mrb[0].mxu0
      %v1878 = vadd.f32 %v1717, %v1877
      %v1879 = vpop.f32.mrb[0].mxu0
      %v1880 = vpop.f32.mrb[0].mxu0
      %v1881 = vadd.f32 %v1720, %v1880
      %v1882 = vpop.f32.mrb[0].mxu0
      %1883 = vmatprep.mubr.bf16.mxu0 0
      %1884 = vmatmul.mubr.bf16.gmra.mrb[0].mxu0 %v561
      %v1885 = vpop.f32.mrb[0].mxu0
      %v1886 = vadd.f32 %v1725, %v1885
      %v1887 = vpop.f32.mrb[0].mxu0
      %v1888 = vpop.f32.mrb[0].mxu0
      %v1889 = vadd.f32 %v1728, %v1888
      %v1890 = vpop.f32.mrb[0].mxu0
      %1891 = vmatprep.mubr.bf16.mxu0 0
      %1892 = vmatmul.mubr.bf16.gmra.mrb[0].mxu0 %v582
      %v1893 = vpop.f32.mrb[0].mxu0
      %v1894 = vadd.f32 %v1733, %v1893
      %v1895 = vpop.f32.mrb[0].mxu0
      %v1896 = vpop.f32.mrb[0].mxu0
      %v1897 = vadd.f32 %v1736, %v1896
      %v1898 = vpop.f32.mrb[0].mxu0
      %1899 = vmatprep.mubr.bf16.mxu0 0
      %1900 = vmatmul.mubr.bf16.gmra.mrb[0].mxu0 %v588
      %v1901 = vpop.f32.mrb[0].mxu0
      %v1902 = vadd.f32 %v1741, %v1901
      %v1903 = vpop.f32.mrb[0].mxu0
      %v1904 = vpop.f32.mrb[0].mxu0
      %v1905 = vadd.f32 %v1744, %v1904
      %v1906 = vpop.f32.mrb[0].mxu0
      %1907 = vdwg.mxu0
      %vm1908 = vcmask 1046528
      %v1909 = vrot.slane %v546, 1
      %v1910 = vrot.slane %v670, 1
      %v1911 = vsel %vm1908, %v1909, %v1910
      %v1912 = vrot.slane %v547, 1
      %v1913 = vrot.slane %v671, 1
      %v1914 = vsel %vm1908, %v1912, %v1913
      %v1915 = vrot.slane %v548, 1
      %v1916 = vrot.slane %v672, 1
      %v1917 = vsel %vm1908, %v1915, %v1916
      %v1918 = vrot.slane %v549, 1
      %v1919 = vrot.slane %v673, 1
      %v1920 = vsel %vm1908, %v1918, %v1919
      %v1921 = vrot.slane %v550, 1
      %v1922 = vrot.slane %v674, 1
      %v1923 = vsel %vm1908, %v1921, %v1922
      %v1924 = vrot.slane %v551, 1
      %v1925 = vrot.slane %v675, 1
      %v1926 = vsel %vm1908, %v1924, %v1925
      %v1927 = vrot.slane %v552, 1
      %v1928 = vrot.slane %v676, 1
      %v1929 = vsel %vm1908, %v1927, %v1928
      %v1930 = vrot.slane %v553, 1
      %v1931 = vrot.slane %v677, 1
      %v1932 = vsel %vm1908, %v1930, %v1931
      %v1933 = vrot.slane %v554, 1
      %v1934 = vrot.slane %v678, 1
      %v1935 = vsel %vm1908, %v1933, %v1934
      %v1936 = vrot.slane %v555, 1
      %v1937 = vrot.slane %v679, 1
      %v1938 = vsel %vm1908, %v1936, %v1937
      %v1939 = vrot.slane %v556, 1
      %v1940 = vrot.slane %v680, 1
      %v1941 = vsel %vm1908, %v1939, %v1940
      %v1942 = vrot.slane %v557, 1
      %v1943 = vrot.slane %v681, 1
      %v1944 = vsel %vm1908, %v1942, %v1943
      %v1945 = vrot.slane %v558, 1
      %v1946 = vrot.slane %v682, 1
      %v1947 = vsel %vm1908, %v1945, %v1946
      %v1948 = vrot.slane %v559, 1
      %v1949 = vrot.slane %v683, 1
      %v1950 = vsel %vm1908, %v1948, %v1949
      %v1951 = vrot.slane %v560, 1
      %v1952 = vrot.slane %v684, 1
      %v1953 = vsel %vm1908, %v1951, %v1952
      %v1954 = vrot.slane %v561, 1
      %v1955 = vrot.slane %v685, 1
      %v1956 = vsel %vm1908, %v1954, %v1955
      %v1957 = vrot.slane %v582, 1
      %v1958 = vrot.slane %v688, 1
      %v1959 = vsel %vm1908, %v1957, %v1958
      %v1960 = vrot.slane %v588, 1
      %v1961 = vrot.slane %v691, 1
      %v1962 = vsel %vm1908, %v1960, %v1961
      %s1981 = scalar_lea.vmem %s1, 384
      %v1982 = vld [vmem:[%s1981] sm:$0xf]
      %v1983 = vld [vmem:[%s1981 + $0x4] sm:$0xf]
      %v1984 = vld [vmem:[%s1981 + $0x8] sm:$0xf]
      %v1985 = vld [vmem:[%s1981 + $0xc] sm:$0xf]
      %v1986 = vld [vmem:[%s1981 + $0x10] sm:$0xf]
      %v1987 = vld [vmem:[%s1981 + $0x14] sm:$0xf]
      %v1988 = vld [vmem:[%s1981 + $0x18] sm:$0xf]
      %v1989 = vld [vmem:[%s1981 + $0x1c] sm:$0xf]
      %v1990 = vld [vmem:[%s1981 + $0x20] sm:$0xf]
      %v1991 = vld [vmem:[%s1981 + $0x24] sm:$0xf]
      %v1992 = vld [vmem:[%s1981 + $0x28] sm:$0xf]
      %v1993 = vld [vmem:[%s1981 + $0x2c] sm:$0xf]
      %v1994 = vld [vmem:[%s1981 + $0x30] sm:$0xf]
      %v1995 = vld [vmem:[%s1981 + $0x34] sm:$0xf]
      %v1996 = vld [vmem:[%s1981 + $0x38] sm:$0xf]
      %v1997 = vld [vmem:[%s1981 + $0x3c] sm:$0xf]
      %v1998 = vld [vmem:[%s1981 + $0x40] sm:$0xf]
      %v1999 = vld [vmem:[%s1981 + $0x44] sm:$0xf]
      %v2000 = vld [vmem:[%s1981 + $0x48] sm:$0xf]
      %v2001 = vld [vmem:[%s1981 + $0x4c] sm:$0xf]
      %v2002 = vld [vmem:[%s1981 + $0x50] sm:$0xf]
      %v2003 = vld [vmem:[%s1981 + $0x54] sm:$0xf]
      %v2004 = vld [vmem:[%s1981 + $0x58] sm:$0xf]
      %v2005 = vld [vmem:[%s1981 + $0x5c] sm:$0xf]
      %v2006 = vld [vmem:[%s1981 + $0x60] sm:$0xf]
      %v2007 = vld [vmem:[%s1981 + $0x64] sm:$0xf]
      %v2008 = vld [vmem:[%s1981 + $0x68] sm:$0xf]
      %v2009 = vld [vmem:[%s1981 + $0x6c] sm:$0xf]
      %v2010 = vld [vmem:[%s1981 + $0x70] sm:$0xf]
      %v2011 = vld [vmem:[%s1981 + $0x74] sm:$0xf]
      %v2012 = vld [vmem:[%s1981 + $0x78] sm:$0xf]
      %v2013 = vld [vmem:[%s1981 + $0x7c] sm:$0xf]
      %v2014 = vld [vmem:[%s1981 + $0x80] sm:$0xf]
      %v2015 = vld [vmem:[%s1981 + $0x84] sm:$0xf]
      %v2016 = vld [vmem:[%s1981 + $0x88] sm:$0xf]
      %v2017 = vld [vmem:[%s1981 + $0x8c] sm:$0xf]
      %v2018 = vld [vmem:[%s1981 + $0x90] sm:$0xf]
      %v2019 = vld [vmem:[%s1981 + $0x94] sm:$0xf]
      %v2020 = vld [vmem:[%s1981 + $0x98] sm:$0xf]
      %v2021 = vld [vmem:[%s1981 + $0x9c] sm:$0xf]
      %v2022 = vld [vmem:[%s1981 + $0xa0] sm:$0xf]
      %v2023 = vld [vmem:[%s1981 + $0xa4] sm:$0xf]
      %v2024 = vld [vmem:[%s1981 + $0xa8] sm:$0xf]
      %v2025 = vld [vmem:[%s1981 + $0xac] sm:$0xf]
      %v2026 = vld [vmem:[%s1981 + $0xb0] sm:$0xf]
      %v2027 = vld [vmem:[%s1981 + $0xb4] sm:$0xf]
      %v2028 = vld [vmem:[%s1981 + $0xb8] sm:$0xf]
      %v2029 = vld [vmem:[%s1981 + $0xbc] sm:$0xf]
      %v2078 = vunpack.c.l.b16 %v1982
      %v2079 = vunpack.c.l.b16 %v1983
      %v2080 = vunpack.c.l.b16 %v1984
      %v2081 = vunpack.c.l.b16 %v1985
      %v2082 = vunpack.c.l.b16 %v1986
      %v2083 = vunpack.c.l.b16 %v1987
      %v2084 = vunpack.c.l.b16 %v1988
      %v2085 = vunpack.c.l.b16 %v1989
      %v2086 = vunpack.c.l.b16 %v1990
      %v2087 = vunpack.c.l.b16 %v1991
      %v2088 = vunpack.c.l.b16 %v1992
      %v2089 = vunpack.c.l.b16 %v1993
      %v2090 = vunpack.c.l.b16 %v1994
      %v2091 = vunpack.c.l.b16 %v1995
      %v2092 = vunpack.c.l.b16 %v1996
      %v2093 = vunpack.c.l.b16 %v1997
      %v2094 = vunpack.c.l.b16 %v1998
      %v2095 = vunpack.c.l.b16 %v1999
      %v2096 = vunpack.c.l.b16 %v2000
      %v2097 = vunpack.c.l.b16 %v2001
      %v2098 = vunpack.c.l.b16 %v2002
      %v2099 = vunpack.c.l.b16 %v2003
      %v2100 = vunpack.c.l.b16 %v2004
      %v2101 = vunpack.c.l.b16 %v2005
      %v2102 = vunpack.c.l.b16 %v2006
      %v2103 = vunpack.c.l.b16 %v2007
      %v2104 = vunpack.c.l.b16 %v2008
      %v2105 = vunpack.c.l.b16 %v2009
      %v2106 = vunpack.c.l.b16 %v2010
      %v2107 = vunpack.c.l.b16 %v2011
      %v2108 = vunpack.c.l.b16 %v2012
      %v2109 = vunpack.c.l.b16 %v2013
      %v2110 = vunpack.c.l.b16 %v2014
      %v2111 = vunpack.c.l.b16 %v2015
      %v2112 = vunpack.c.l.b16 %v2016
      %v2113 = vunpack.c.l.b16 %v2017
      %v2114 = vunpack.c.l.b16 %v2018
      %v2115 = vunpack.c.l.b16 %v2019
      %v2116 = vunpack.c.l.b16 %v2020
      %v2117 = vunpack.c.l.b16 %v2021
      %v2118 = vunpack.c.l.b16 %v2022
      %v2119 = vunpack.c.l.b16 %v2023
      %v2120 = vunpack.c.l.b16 %v2024
      %v2121 = vunpack.c.l.b16 %v2025
      %v2122 = vunpack.c.l.b16 %v2026
      %v2123 = vunpack.c.l.b16 %v2027
      %v2124 = vunpack.c.l.b16 %v2028
      %v2125 = vunpack.c.l.b16 %v2029
      %v2126 = vpack.c.b16 %v2079, %v2078
      %v2127 = vpack.c.b16 %v2081, %v2080
      %v2128 = vpack.c.b16 %v2083, %v2082
      %v2129 = vpack.c.b16 %v2085, %v2084
      %v2130 = vpack.c.b16 %v2087, %v2086
      %v2131 = vpack.c.b16 %v2089, %v2088
      %v2132 = vpack.c.b16 %v2091, %v2090
      %v2133 = vpack.c.b16 %v2093, %v2092
      %v2134 = vpack.c.b16 %v2095, %v2094
      %v2135 = vpack.c.b16 %v2097, %v2096
      %v2136 = vpack.c.b16 %v2099, %v2098
      %v2137 = vpack.c.b16 %v2101, %v2100
      %v2138 = vpack.c.b16 %v2103, %v2102
      %v2139 = vpack.c.b16 %v2105, %v2104
      %v2140 = vpack.c.b16 %v2107, %v2106
      %v2141 = vpack.c.b16 %v2109, %v2108
      %v2142 = vpack.c.b16 %v2111, %v2110
      %v2143 = vpack.c.b16 %v2113, %v2112
      %v2144 = vpack.c.b16 %v2115, %v2114
      %v2145 = vpack.c.b16 %v2117, %v2116
      %v2146 = vpack.c.b16 %v2119, %v2118
      %v2147 = vpack.c.b16 %v2121, %v2120
      %v2148 = vpack.c.b16 %v2123, %v2122
      %v2149 = vpack.c.b16 %v2125, %v2124
      %2174 = vmatprep.subr.bf16.mxu0 0
      %2175 = vmatpush1.bf16.msra.mxu0 %v2126
      %2176 = vmatprep.subr.bf16.mxu0 0
      %2177 = vmatpush1.bf16.msra.mxu0 %v2127
      %2178 = vmatprep.subr.bf16.mxu0 0
      %2179 = vmatpush1.bf16.msra.mxu0 %v2128
      %2180 = vmatprep.subr.bf16.mxu0 0
      %2181 = vmatpush1.bf16.msra.mxu0 %v2129
      %2182 = vmatprep.subr.bf16.mxu0 0
      %2183 = vmatpush1.bf16.msra.mxu0 %v2130
      %2184 = vmatprep.subr.bf16.mxu0 0
      %2185 = vmatpush1.bf16.msra.mxu0 %v2131
      %2186 = vmatprep.subr.bf16.mxu0 0
      %2187 = vmatpush1.bf16.msra.mxu0 %v2132
      %2188 = vmatprep.subr.bf16.mxu0 0
      %2189 = vmatpush1.bf16.msra.mxu0 %v2133
      %2190 = vmatprep.subr.bf16.mxu0 0
      %2191 = vmatpush1.bf16.msra.mxu0 %v2134
      %2192 = vmatprep.subr.bf16.mxu0 0
      %2193 = vmatpush1.bf16.msra.mxu0 %v2135
      %2194 = vmatprep.subr.bf16.mxu0 0
      %2195 = vmatpush1.bf16.msra.mxu0 %v2136
      %2196 = vmatprep.subr.bf16.mxu0 0
      %2197 = vmatpush1.bf16.msra.mxu0 %v2137
      %2198 = vmatprep.subr.bf16.mxu0 0
      %2199 = vmatpush1.bf16.msra.mxu0 %v2138
      %2200 = vmatprep.subr.bf16.mxu0 0
      %2201 = vmatpush1.bf16.msra.mxu0 %v2139
      %2202 = vmatprep.subr.bf16.mxu0 0
      %2203 = vmatpush1.bf16.msra.mxu0 %v2140
      %2204 = vmatprep.subr.bf16.mxu0 0
      %2205 = vmatpush1.bf16.msra.mxu0 %v2141
      %2206 = vmatprep.mubr.bf16.mxu0 %v1914
      %2207 = vmatmul.mubr.bf16.gmra.mrb[0].mxu0 %v1911
      %v2208 = vpop.f32.mrb[0].mxu0
      %v2209 = vadd.f32 0.0, %v2208
      %v2210 = vpop.f32.mrb[0].mxu0
      %v2211 = vpop.f32.mrb[0].mxu0
      %v2212 = vadd.f32 0.0, %v2211
      %v2213 = vpop.f32.mrb[0].mxu0
      %2214 = vmatprep.mubr.bf16.mxu0 %v1917
      %2215 = vmatmul.mubr.bf16.gmra.mrb[0].mxu0 %v1914
      %v2216 = vpop.f32.mrb[0].mxu0
      %v2217 = vadd.f32 0.0, %v2216
      %v2218 = vpop.f32.mrb[0].mxu0
      %v2219 = vpop.f32.mrb[0].mxu0
      %v2220 = vadd.f32 0.0, %v2219
      %v2221 = vpop.f32.mrb[0].mxu0
      %2222 = vmatprep.mubr.bf16.mxu0 %v1920
      %2223 = vmatmul.mubr.bf16.gmra.mrb[0].mxu0 %v1917
      %v2224 = vpop.f32.mrb[0].mxu0
      %v2225 = vadd.f32 0.0, %v2224
      %v2226 = vpop.f32.mrb[0].mxu0
      %v2227 = vpop.f32.mrb[0].mxu0
      %v2228 = vadd.f32 0.0, %v2227
      %v2229 = vpop.f32.mrb[0].mxu0
      %2230 = vmatprep.mubr.bf16.mxu0 %v1923
      %2231 = vmatmul.mubr.bf16.gmra.mrb[0].mxu0 %v1920
      %v2232 = vpop.f32.mrb[0].mxu0
      %v2233 = vadd.f32 0.0, %v2232
      %v2234 = vpop.f32.mrb[0].mxu0
      %v2235 = vpop.f32.mrb[0].mxu0
      %v2236 = vadd.f32 0.0, %v2235
      %v2237 = vpop.f32.mrb[0].mxu0
      %2238 = vmatprep.mubr.bf16.mxu0 %v1926
      %2239 = vmatmul.mubr.bf16.gmra.mrb[0].mxu0 %v1923
      %v2240 = vpop.f32.mrb[0].mxu0
      %v2241 = vadd.f32 0.0, %v2240
      %v2242 = vpop.f32.mrb[0].mxu0
      %v2243 = vpop.f32.mrb[0].mxu0
      %v2244 = vadd.f32 0.0, %v2243
      %v2245 = vpop.f32.mrb[0].mxu0
      %2246 = vmatprep.mubr.bf16.mxu0 %v1929
      %2247 = vmatmul.mubr.bf16.gmra.mrb[0].mxu0 %v1926
      %v2248 = vpop.f32.mrb[0].mxu0
      %v2249 = vadd.f32 0.0, %v2248
      %v2250 = vpop.f32.mrb[0].mxu0
      %v2251 = vpop.f32.mrb[0].mxu0
      %v2252 = vadd.f32 0.0, %v2251
      %v2253 = vpop.f32.mrb[0].mxu0
      %2254 = vmatprep.mubr.bf16.mxu0 %v1932
      %2255 = vmatmul.mubr.bf16.gmra.mrb[0].mxu0 %v1929
      %v2256 = vpop.f32.mrb[0].mxu0
      %v2257 = vadd.f32 0.0, %v2256
      %v2258 = vpop.f32.mrb[0].mxu0
      %v2259 = vpop.f32.mrb[0].mxu0
      %v2260 = vadd.f32 0.0, %v2259
      %v2261 = vpop.f32.mrb[0].mxu0
      %2262 = vmatprep.mubr.bf16.mxu0 %v1935
      %2263 = vmatmul.mubr.bf16.gmra.mrb[0].mxu0 %v1932
      %v2264 = vpop.f32.mrb[0].mxu0
      %v2265 = vadd.f32 0.0, %v2264
      %v2266 = vpop.f32.mrb[0].mxu0
      %v2267 = vpop.f32.mrb[0].mxu0
      %v2268 = vadd.f32 0.0, %v2267
      %v2269 = vpop.f32.mrb[0].mxu0
      %2270 = vmatprep.mubr.bf16.mxu0 %v1938
      %2271 = vmatmul.mubr.bf16.gmra.mrb[0].mxu0 %v1935
      %v2272 = vpop.f32.mrb[0].mxu0
      %v2273 = vadd.f32 0.0, %v2272
      %v2274 = vpop.f32.mrb[0].mxu0
      %v2275 = vpop.f32.mrb[0].mxu0
      %v2276 = vadd.f32 0.0, %v2275
      %v2277 = vpop.f32.mrb[0].mxu0
      %2278 = vmatprep.mubr.bf16.mxu0 %v1941
      %2279 = vmatmul.mubr.bf16.gmra.mrb[0].mxu0 %v1938
      %v2280 = vpop.f32.mrb[0].mxu0
      %v2281 = vadd.f32 0.0, %v2280
      %v2282 = vpop.f32.mrb[0].mxu0
      %v2283 = vpop.f32.mrb[0].mxu0
      %v2284 = vadd.f32 0.0, %v2283
      %v2285 = vpop.f32.mrb[0].mxu0
      %2286 = vmatprep.mubr.bf16.mxu0 %v1944
      %2287 = vmatmul.mubr.bf16.gmra.mrb[0].mxu0 %v1941
      %v2288 = vpop.f32.mrb[0].mxu0
      %v2289 = vadd.f32 0.0, %v2288
      %v2290 = vpop.f32.mrb[0].mxu0
      %v2291 = vpop.f32.mrb[0].mxu0
      %v2292 = vadd.f32 0.0, %v2291
      %v2293 = vpop.f32.mrb[0].mxu0
      %2294 = vmatprep.mubr.bf16.mxu0 %v1947
      %2295 = vmatmul.mubr.bf16.gmra.mrb[0].mxu0 %v1944
      %v2296 = vpop.f32.mrb[0].mxu0
      %v2297 = vadd.f32 0.0, %v2296
      %v2298 = vpop.f32.mrb[0].mxu0
      %v2299 = vpop.f32.mrb[0].mxu0
      %v2300 = vadd.f32 0.0, %v2299
      %v2301 = vpop.f32.mrb[0].mxu0
      %2302 = vmatprep.mubr.bf16.mxu0 %v1950
      %2303 = vmatmul.mubr.bf16.gmra.mrb[0].mxu0 %v1947
      %v2304 = vpop.f32.mrb[0].mxu0
      %v2305 = vadd.f32 0.0, %v2304
      %v2306 = vpop.f32.mrb[0].mxu0
      %v2307 = vpop.f32.mrb[0].mxu0
      %v2308 = vadd.f32 0.0, %v2307
      %v2309 = vpop.f32.mrb[0].mxu0
      %2310 = vmatprep.mubr.bf16.mxu0 %v1953
      %2311 = vmatmul.mubr.bf16.gmra.mrb[0].mxu0 %v1950
      %v2312 = vpop.f32.mrb[0].mxu0
      %v2313 = vadd.f32 0.0, %v2312
      %v2314 = vpop.f32.mrb[0].mxu0
      %v2315 = vpop.f32.mrb[0].mxu0
      %v2316 = vadd.f32 0.0, %v2315
      %v2317 = vpop.f32.mrb[0].mxu0
      %2318 = vmatprep.mubr.bf16.mxu0 %v1956
      %2319 = vmatmul.mubr.bf16.gmra.mrb[0].mxu0 %v1953
      %v2320 = vpop.f32.mrb[0].mxu0
      %v2321 = vadd.f32 0.0, %v2320
      %v2322 = vpop.f32.mrb[0].mxu0
      %v2323 = vpop.f32.mrb[0].mxu0
      %v2324 = vadd.f32 0.0, %v2323
      %v2325 = vpop.f32.mrb[0].mxu0
      %2326 = vmatprep.mubr.bf16.mxu0 %v1959
      %2327 = vmatmul.mubr.bf16.gmra.mrb[0].mxu0 %v1956
      %v2328 = vpop.f32.mrb[0].mxu0
      %v2329 = vadd.f32 0.0, %v2328
      %v2330 = vpop.f32.mrb[0].mxu0
      %v2331 = vpop.f32.mrb[0].mxu0
      %v2332 = vadd.f32 0.0, %v2331
      %v2333 = vpop.f32.mrb[0].mxu0
      %2334 = vdwg.mxu0
      %2335 = vmatprep.subr.bf16.mxu0 0
      %2336 = vmatpush1.bf16.msra.mxu0 %v2142
      %2337 = vmatprep.subr.bf16.mxu0 0
      %2338 = vmatpush1.bf16.msra.mxu0 %v2143
      %2339 = vmatprep.subr.bf16.mxu0 0
      %2340 = vmatpush1.bf16.msra.mxu0 %v2144
      %2341 = vmatprep.subr.bf16.mxu0 0
      %2342 = vmatpush1.bf16.msra.mxu0 %v2145
      %2343 = vmatprep.subr.bf16.mxu0 0
      %2344 = vmatpush1.bf16.msra.mxu0 %v2146
      %2345 = vmatprep.subr.bf16.mxu0 0
      %2346 = vmatpush1.bf16.msra.mxu0 %v2147
      %2347 = vmatprep.subr.bf16.mxu0 0
      %2348 = vmatpush1.bf16.msra.mxu0 %v2148
      %2349 = vmatprep.subr.bf16.mxu0 0
      %2350 = vmatpush1.bf16.msra.mxu0 %v2149
      %2351 = vmatprep.subr.bf16.mxu0 0
      %2352 = vmatpush1.bf16.msra.mxu0 0
      %2353 = vmatprep.subr.bf16.mxu0 0
      %2354 = vmatpush1.bf16.msra.mxu0 0
      %2355 = vmatprep.subr.bf16.mxu0 0
      %2356 = vmatpush1.bf16.msra.mxu0 0
      %2357 = vmatprep.subr.bf16.mxu0 0
      %2358 = vmatpush1.bf16.msra.mxu0 0
      %2359 = vmatprep.subr.bf16.mxu0 0
      %2360 = vmatpush1.bf16.msra.mxu0 0
      %2361 = vmatprep.subr.bf16.mxu0 0
      %2362 = vmatpush1.bf16.msra.mxu0 0
      %2363 = vmatprep.subr.bf16.mxu0 0
      %2364 = vmatpush1.bf16.msra.mxu0 0
      %2365 = vmatprep.subr.bf16.mxu0 0
      %2366 = vmatpush1.bf16.msra.mxu0 0
      %2367 = vmatprep.mubr.bf16.mxu0 0
      %2368 = vmatmul.mubr.bf16.gmra.mrb[0].mxu0 %v1917
      %v2369 = vpop.f32.mrb[0].mxu0
      %v2370 = vadd.f32 %v2209, %v2369
      %v2371 = vpop.f32.mrb[0].mxu0
      %v2372 = vpop.f32.mrb[0].mxu0
      %v2373 = vadd.f32 %v2212, %v2372
      %v2374 = vpop.f32.mrb[0].mxu0
      %2375 = vmatprep.mubr.bf16.mxu0 0
      %2376 = vmatmul.mubr.bf16.gmra.mrb[0].mxu0 %v1920
      %v2377 = vpop.f32.mrb[0].mxu0
      %v2378 = vadd.f32 %v2217, %v2377
      %v2379 = vpop.f32.mrb[0].mxu0
      %v2380 = vpop.f32.mrb[0].mxu0
      %v2381 = vadd.f32 %v2220, %v2380
      %v2382 = vpop.f32.mrb[0].mxu0
      %2383 = vmatprep.mubr.bf16.mxu0 0
      %2384 = vmatmul.mubr.bf16.gmra.mrb[0].mxu0 %v1923
      %v2385 = vpop.f32.mrb[0].mxu0
      %v2386 = vadd.f32 %v2225, %v2385
      %v2387 = vpop.f32.mrb[0].mxu0
      %v2388 = vpop.f32.mrb[0].mxu0
      %v2389 = vadd.f32 %v2228, %v2388
      %v2390 = vpop.f32.mrb[0].mxu0
      %2391 = vmatprep.mubr.bf16.mxu0 0
      %2392 = vmatmul.mubr.bf16.gmra.mrb[0].mxu0 %v1926
      %v2393 = vpop.f32.mrb[0].mxu0
      %v2394 = vadd.f32 %v2233, %v2393
      %v2395 = vpop.f32.mrb[0].mxu0
      %v2396 = vpop.f32.mrb[0].mxu0
      %v2397 = vadd.f32 %v2236, %v2396
      %v2398 = vpop.f32.mrb[0].mxu0
      %2399 = vmatprep.mubr.bf16.mxu0 0
      %2400 = vmatmul.mubr.bf16.gmra.mrb[0].mxu0 %v1929
      %v2401 = vpop.f32.mrb[0].mxu0
      %v2402 = vadd.f32 %v2241, %v2401
      %v2403 = vpop.f32.mrb[0].mxu0
      %v2404 = vpop.f32.mrb[0].mxu0
      %v2405 = vadd.f32 %v2244, %v2404
      %v2406 = vpop.f32.mrb[0].mxu0
      %2407 = vmatprep.mubr.bf16.mxu0 0
      %2408 = vmatmul.mubr.bf16.gmra.mrb[0].mxu0 %v1932
      %v2409 = vpop.f32.mrb[0].mxu0
      %v2410 = vadd.f32 %v2249, %v2409
      %v2411 = vpop.f32.mrb[0].mxu0
      %v2412 = vpop.f32.mrb[0].mxu0
      %v2413 = vadd.f32 %v2252, %v2412
      %v2414 = vpop.f32.mrb[0].mxu0
      %2415 = vmatprep.mubr.bf16.mxu0 0
      %2416 = vmatmul.mubr.bf16.gmra.mrb[0].mxu0 %v1935
      %v2417 = vpop.f32.mrb[0].mxu0
      %v2418 = vadd.f32 %v2257, %v2417
      %v2419 = vpop.f32.mrb[0].mxu0
      %v2420 = vpop.f32.mrb[0].mxu0
      %v2421 = vadd.f32 %v2260, %v2420
      %v2422 = vpop.f32.mrb[0].mxu0
      %2423 = vmatprep.mubr.bf16.mxu0 0
      %2424 = vmatmul.mubr.bf16.gmra.mrb[0].mxu0 %v1938
      %v2425 = vpop.f32.mrb[0].mxu0
      %v2426 = vadd.f32 %v2265, %v2425
      %v2427 = vpop.f32.mrb[0].mxu0
      %v2428 = vpop.f32.mrb[0].mxu0
      %v2429 = vadd.f32 %v2268, %v2428
      %v2430 = vpop.f32.mrb[0].mxu0
      %2431 = vmatprep.mubr.bf16.mxu0 0
      %2432 = vmatmul.mubr.bf16.gmra.mrb[0].mxu0 %v1941
      %v2433 = vpop.f32.mrb[0].mxu0
      %v2434 = vadd.f32 %v2273, %v2433
      %v2435 = vpop.f32.mrb[0].mxu0
      %v2436 = vpop.f32.mrb[0].mxu0
      %v2437 = vadd.f32 %v2276, %v2436
      %v2438 = vpop.f32.mrb[0].mxu0
      %2439 = vmatprep.mubr.bf16.mxu0 0
      %2440 = vmatmul.mubr.bf16.gmra.mrb[0].mxu0 %v1944
      %v2441 = vpop.f32.mrb[0].mxu0
      %v2442 = vadd.f32 %v2281, %v2441
      %v2443 = vpop.f32.mrb[0].mxu0
      %v2444 = vpop.f32.mrb[0].mxu0
      %v2445 = vadd.f32 %v2284, %v2444
      %v2446 = vpop.f32.mrb[0].mxu0
      %2447 = vmatprep.mubr.bf16.mxu0 0
      %2448 = vmatmul.mubr.bf16.gmra.mrb[0].mxu0 %v1947
      %v2449 = vpop.f32.mrb[0].mxu0
      %v2450 = vadd.f32 %v2289, %v2449
      %v2451 = vpop.f32.mrb[0].mxu0
      %v2452 = vpop.f32.mrb[0].mxu0
      %v2453 = vadd.f32 %v2292, %v2452
      %v2454 = vpop.f32.mrb[0].mxu0
      %2455 = vmatprep.mubr.bf16.mxu0 0
      %2456 = vmatmul.mubr.bf16.gmra.mrb[0].mxu0 %v1950
      %v2457 = vpop.f32.mrb[0].mxu0
      %v2458 = vadd.f32 %v2297, %v2457
      %v2459 = vpop.f32.mrb[0].mxu0
      %v2460 = vpop.f32.mrb[0].mxu0
      %v2461 = vadd.f32 %v2300, %v2460
      %v2462 = vpop.f32.mrb[0].mxu0
      %2463 = vmatprep.mubr.bf16.mxu0 0
      %2464 = vmatmul.mubr.bf16.gmra.mrb[0].mxu0 %v1953
      %v2465 = vpop.f32.mrb[0].mxu0
      %v2466 = vadd.f32 %v2305, %v2465
      %v2467 = vpop.f32.mrb[0].mxu0
      %v2468 = vpop.f32.mrb[0].mxu0
      %v2469 = vadd.f32 %v2308, %v2468
      %v2470 = vpop.f32.mrb[0].mxu0
      %2471 = vmatprep.mubr.bf16.mxu0 0
      %2472 = vmatmul.mubr.bf16.gmra.mrb[0].mxu0 %v1956
      %v2473 = vpop.f32.mrb[0].mxu0
      %v2474 = vadd.f32 %v2313, %v2473
      %v2475 = vpop.f32.mrb[0].mxu0
      %v2476 = vpop.f32.mrb[0].mxu0
      %v2477 = vadd.f32 %v2316, %v2476
      %v2478 = vpop.f32.mrb[0].mxu0
      %2479 = vmatprep.mubr.bf16.mxu0 0
      %2480 = vmatmul.mubr.bf16.gmra.mrb[0].mxu0 %v1959
      %v2481 = vpop.f32.mrb[0].mxu0
      %v2482 = vadd.f32 %v2321, %v2481
      %v2483 = vpop.f32.mrb[0].mxu0
      %v2484 = vpop.f32.mrb[0].mxu0
      %v2485 = vadd.f32 %v2324, %v2484
      %v2486 = vpop.f32.mrb[0].mxu0
      %2487 = vmatprep.mubr.bf16.mxu0 0
      %2488 = vmatmul.mubr.bf16.gmra.mrb[0].mxu0 %v1962
      %v2489 = vpop.f32.mrb[0].mxu0
      %v2490 = vadd.f32 %v2329, %v2489
      %v2491 = vpop.f32.mrb[0].mxu0
      %v2492 = vpop.f32.mrb[0].mxu0
      %v2493 = vadd.f32 %v2332, %v2492
      %v2494 = vpop.f32.mrb[0].mxu0
      %2495 = vdwg.mxu0
      %v2496 = vadd.f32 %v1782, %v2370
      %v2497 = vadd.f32 %v1785, %v2373
      %v2498 = vadd.f32 %v1790, %v2378
      %v2499 = vadd.f32 %v1793, %v2381
      %v2500 = vadd.f32 %v1798, %v2386
      %v2501 = vadd.f32 %v1801, %v2389
      %v2502 = vadd.f32 %v1806, %v2394
      %v2503 = vadd.f32 %v1809, %v2397
      %v2504 = vadd.f32 %v1814, %v2402
      %v2505 = vadd.f32 %v1817, %v2405
      %v2506 = vadd.f32 %v1822, %v2410
      %v2507 = vadd.f32 %v1825, %v2413
      %v2508 = vadd.f32 %v1830, %v2418
      %v2509 = vadd.f32 %v1833, %v2421
      %v2510 = vadd.f32 %v1838, %v2426
      %v2511 = vadd.f32 %v1841, %v2429
      %v2512 = vadd.f32 %v1846, %v2434
      %v2513 = vadd.f32 %v1849, %v2437
      %v2514 = vadd.f32 %v1854, %v2442
      %v2515 = vadd.f32 %v1857, %v2445
      %v2516 = vadd.f32 %v1862, %v2450
      %v2517 = vadd.f32 %v1865, %v2453
      %v2518 = vadd.f32 %v1870, %v2458
      %v2519 = vadd.f32 %v1873, %v2461
      %v2520 = vadd.f32 %v1878, %v2466
      %v2521 = vadd.f32 %v1881, %v2469
      %v2522 = vadd.f32 %v1886, %v2474
      %v2523 = vadd.f32 %v1889, %v2477
      %v2524 = vadd.f32 %v1894, %v2482
      %v2525 = vadd.f32 %v1897, %v2485
      %v2526 = vadd.f32 %v1902, %v2490
      %v2527 = vadd.f32 %v1905, %v2493
      %v2528 = vlaneseq
      %v2529 = vand.u32 %v2528, 127
      %vm2530 = vcmp.lt.s32.totalorder %v2529, 8
      %2531 = vadd.xlane.f32.xlu0 %v2496
      %v2532 = vpop.xlane.xlu0 %2531
      %2533 = vadd.xlane.f32.xlu0 %v2497
      %v2534 = vpop.xlane.xlu0 %2533
      %2535 = vadd.xlane.f32.xlu0 %v2498
      %v2536 = vpop.xlane.xlu0 %2535
      %2537 = vadd.xlane.f32.xlu0 %v2499
      %v2538 = vpop.xlane.xlu0 %2537
      %2539 = vadd.xlane.f32.xlu0 %v2500
      %v2540 = vpop.xlane.xlu0 %2539
      %2541 = vadd.xlane.f32.xlu0 %v2501
      %v2542 = vpop.xlane.xlu0 %2541
      %2543 = vadd.xlane.f32.xlu0 %v2502
      %v2544 = vpop.xlane.xlu0 %2543
      %2545 = vadd.xlane.f32.xlu0 %v2503
      %v2546 = vpop.xlane.xlu0 %2545
      %2547 = vadd.xlane.f32.xlu0 %v2504
      %v2548 = vpop.xlane.xlu0 %2547
      %2549 = vadd.xlane.f32.xlu0 %v2505
      %v2550 = vpop.xlane.xlu0 %2549
      %2551 = vadd.xlane.f32.xlu0 %v2506
      %v2552 = vpop.xlane.xlu0 %2551
      %2553 = vadd.xlane.f32.xlu0 %v2507
      %v2554 = vpop.xlane.xlu0 %2553
      %2555 = vadd.xlane.f32.xlu0 %v2508
      %v2556 = vpop.xlane.xlu0 %2555
      %2557 = vadd.xlane.f32.xlu0 %v2509
      %v2558 = vpop.xlane.xlu0 %2557
      %2559 = vadd.xlane.f32.xlu0 %v2510
      %v2560 = vpop.xlane.xlu0 %2559
      %2561 = vadd.xlane.f32.xlu0 %v2511
      %v2562 = vpop.xlane.xlu0 %2561
      %2563 = vadd.xlane.f32.xlu0 %v2512
      %v2564 = vpop.xlane.xlu0 %2563
      %2565 = vadd.xlane.f32.xlu0 %v2513
      %v2566 = vpop.xlane.xlu0 %2565
      %2567 = vadd.xlane.f32.xlu0 %v2514
      %v2568 = vpop.xlane.xlu0 %2567
      %2569 = vadd.xlane.f32.xlu0 %v2515
      %v2570 = vpop.xlane.xlu0 %2569
      %2571 = vadd.xlane.f32.xlu0 %v2516
      %v2572 = vpop.xlane.xlu0 %2571
      %2573 = vadd.xlane.f32.xlu0 %v2517
      %v2574 = vpop.xlane.xlu0 %2573
      %2575 = vadd.xlane.f32.xlu0 %v2518
      %v2576 = vpop.xlane.xlu0 %2575
      %2577 = vadd.xlane.f32.xlu0 %v2519
      %v2578 = vpop.xlane.xlu0 %2577
      %2579 = vadd.xlane.f32.xlu0 %v2520
      %v2580 = vpop.xlane.xlu0 %2579
      %2581 = vadd.xlane.f32.xlu0 %v2521
      %v2582 = vpop.xlane.xlu0 %2581
      %2583 = vadd.xlane.f32.xlu0 %v2522
      %v2584 = vpop.xlane.xlu0 %2583
      %2585 = vadd.xlane.f32.xlu0 %v2523
      %v2586 = vpop.xlane.xlu0 %2585
      %2587 = vadd.xlane.f32.xlu0 %v2524
      %v2588 = vpop.xlane.xlu0 %2587
      %2589 = vadd.xlane.f32.xlu0 %v2525
      %v2590 = vpop.xlane.xlu0 %2589
      %2591 = vadd.xlane.f32.xlu0 %v2526
      %v2592 = vpop.xlane.xlu0 %2591
      %2593 = vadd.xlane.f32.xlu0 %v2527
      %v2594 = vpop.xlane.xlu0 %2593
      %v2595 = vmul.f32 %v2532, 0.125
      %v2596 = vmul.f32 %v2534, 0.125
      %v2597 = vmul.f32 %v2536, 0.125
      %v2598 = vmul.f32 %v2538, 0.125
      %v2599 = vmul.f32 %v2540, 0.125
      %v2600 = vmul.f32 %v2542, 0.125
      %v2601 = vmul.f32 %v2544, 0.125
      %v2602 = vmul.f32 %v2546, 0.125
      %v2603 = vmul.f32 %v2548, 0.125
      %v2604 = vmul.f32 %v2550, 0.125
      %v2605 = vmul.f32 %v2552, 0.125
      %v2606 = vmul.f32 %v2554, 0.125
      %v2607 = vmul.f32 %v2556, 0.125
      %v2608 = vmul.f32 %v2558, 0.125
      %v2609 = vmul.f32 %v2560, 0.125
      %v2610 = vmul.f32 %v2562, 0.125
      %v2611 = vmul.f32 %v2564, 0.125
      %v2612 = vmul.f32 %v2566, 0.125
      %v2613 = vmul.f32 %v2568, 0.125
      %v2614 = vmul.f32 %v2570, 0.125
      %v2615 = vmul.f32 %v2572, 0.125
      %v2616 = vmul.f32 %v2574, 0.125
      %v2617 = vmul.f32 %v2576, 0.125
      %v2618 = vmul.f32 %v2578, 0.125
      %v2619 = vmul.f32 %v2580, 0.125
      %v2620 = vmul.f32 %v2582, 0.125
      %v2621 = vmul.f32 %v2584, 0.125
      %v2622 = vmul.f32 %v2586, 0.125
      %v2623 = vmul.f32 %v2588, 0.125
      %v2624 = vmul.f32 %v2590, 0.125
      %v2625 = vmul.f32 %v2592, 0.125
      %v2626 = vmul.f32 %v2594, 0.125
      %v2627 = vsub.f32 %v2496, %v2595
      %v2628 = vsub.f32 %v2497, %v2596
      %v2629 = vsub.f32 %v2498, %v2597
      %v2630 = vsub.f32 %v2499, %v2598
      %v2631 = vsub.f32 %v2500, %v2599
      %v2632 = vsub.f32 %v2501, %v2600
      %v2633 = vsub.f32 %v2502, %v2601
      %v2634 = vsub.f32 %v2503, %v2602
      %v2635 = vsub.f32 %v2504, %v2603
      %v2636 = vsub.f32 %v2505, %v2604
      %v2637 = vsub.f32 %v2506, %v2605
      %v2638 = vsub.f32 %v2507, %v2606
      %v2639 = vsub.f32 %v2508, %v2607
      %v2640 = vsub.f32 %v2509, %v2608
      %v2641 = vsub.f32 %v2510, %v2609
      %v2642 = vsub.f32 %v2511, %v2610
      %v2643 = vsub.f32 %v2512, %v2611
      %v2644 = vsub.f32 %v2513, %v2612
      %v2645 = vsub.f32 %v2514, %v2613
      %v2646 = vsub.f32 %v2515, %v2614
      %v2647 = vsub.f32 %v2516, %v2615
      %v2648 = vsub.f32 %v2517, %v2616
      %v2649 = vsub.f32 %v2518, %v2617
      %v2650 = vsub.f32 %v2519, %v2618
      %v2651 = vsub.f32 %v2520, %v2619
      %v2652 = vsub.f32 %v2521, %v2620
      %v2653 = vsub.f32 %v2522, %v2621
      %v2654 = vsub.f32 %v2523, %v2622
      %v2655 = vsub.f32 %v2524, %v2623
      %v2656 = vsub.f32 %v2525, %v2624
      %v2657 = vsub.f32 %v2526, %v2625
      %v2658 = vsub.f32 %v2527, %v2626
      %v2659 = vsel %vm2530, 1, 0
      %vm2660 = vcmp.eq.s32.totalorder %v2659, 1
      %v2661 = vsel %vm2660, %v2627, 0.0
      %v2662 = vsel %vm2660, %v2628, 0.0
      %v2663 = vsel %vm2660, %v2629, 0.0
      %v2664 = vsel %vm2660, %v2630, 0.0
      %v2665 = vsel %vm2660, %v2631, 0.0
      %v2666 = vsel %vm2660, %v2632, 0.0
      %v2667 = vsel %vm2660, %v2633, 0.0
      %v2668 = vsel %vm2660, %v2634, 0.0
      %v2669 = vsel %vm2660, %v2635, 0.0
      %v2670 = vsel %vm2660, %v2636, 0.0
      %v2671 = vsel %vm2660, %v2637, 0.0
      %v2672 = vsel %vm2660, %v2638, 0.0
      %v2673 = vsel %vm2660, %v2639, 0.0
      %v2674 = vsel %vm2660, %v2640, 0.0
      %v2675 = vsel %vm2660, %v2641, 0.0
      %v2676 = vsel %vm2660, %v2642, 0.0
      %v2677 = vsel %vm2660, %v2643, 0.0
      %v2678 = vsel %vm2660, %v2644, 0.0
      %v2679 = vsel %vm2660, %v2645, 0.0
      %v2680 = vsel %vm2660, %v2646, 0.0
      %v2681 = vsel %vm2660, %v2647, 0.0
      %v2682 = vsel %vm2660, %v2648, 0.0
      %v2683 = vsel %vm2660, %v2649, 0.0
      %v2684 = vsel %vm2660, %v2650, 0.0
      %v2685 = vsel %vm2660, %v2651, 0.0
      %v2686 = vsel %vm2660, %v2652, 0.0
      %v2687 = vsel %vm2660, %v2653, 0.0
      %v2688 = vsel %vm2660, %v2654, 0.0
      %v2689 = vsel %vm2660, %v2655, 0.0
      %v2690 = vsel %vm2660, %v2656, 0.0
      %v2691 = vsel %vm2660, %v2657, 0.0
      %v2692 = vsel %vm2660, %v2658, 0.0
      %v2693 = vmul.f32 %v2661, %v2661
      %v2694 = vmul.f32 %v2662, %v2662
      %v2695 = vmul.f32 %v2663, %v2663
      %v2696 = vmul.f32 %v2664, %v2664
      %v2697 = vmul.f32 %v2665, %v2665
      %v2698 = vmul.f32 %v2666, %v2666
      %v2699 = vmul.f32 %v2667, %v2667
      %v2700 = vmul.f32 %v2668, %v2668
      %v2701 = vmul.f32 %v2669, %v2669
      %v2702 = vmul.f32 %v2670, %v2670
      %v2703 = vmul.f32 %v2671, %v2671
      %v2704 = vmul.f32 %v2672, %v2672
      %v2705 = vmul.f32 %v2673, %v2673
      %v2706 = vmul.f32 %v2674, %v2674
      %v2707 = vmul.f32 %v2675, %v2675
      %v2708 = vmul.f32 %v2676, %v2676
      %v2709 = vmul.f32 %v2677, %v2677
      %v2710 = vmul.f32 %v2678, %v2678
      %v2711 = vmul.f32 %v2679, %v2679
      %v2712 = vmul.f32 %v2680, %v2680
      %v2713 = vmul.f32 %v2681, %v2681
      %v2714 = vmul.f32 %v2682, %v2682
      %v2715 = vmul.f32 %v2683, %v2683
      %v2716 = vmul.f32 %v2684, %v2684
      %v2717 = vmul.f32 %v2685, %v2685
      %v2718 = vmul.f32 %v2686, %v2686
      %v2719 = vmul.f32 %v2687, %v2687
      %v2720 = vmul.f32 %v2688, %v2688
      %v2721 = vmul.f32 %v2689, %v2689
      %v2722 = vmul.f32 %v2690, %v2690
      %v2723 = vmul.f32 %v2691, %v2691
      %v2724 = vmul.f32 %v2692, %v2692
      %2725 = vadd.xlane.f32.xlu0 %v2693
      %v2726 = vpop.xlane.xlu0 %2725
      %2727 = vadd.xlane.f32.xlu0 %v2694
      %v2728 = vpop.xlane.xlu0 %2727
      %2729 = vadd.xlane.f32.xlu0 %v2695
      %v2730 = vpop.xlane.xlu0 %2729
      %2731 = vadd.xlane.f32.xlu0 %v2696
      %v2732 = vpop.xlane.xlu0 %2731
      %2733 = vadd.xlane.f32.xlu0 %v2697
      %v2734 = vpop.xlane.xlu0 %2733
      %2735 = vadd.xlane.f32.xlu0 %v2698
      %v2736 = vpop.xlane.xlu0 %2735
      %2737 = vadd.xlane.f32.xlu0 %v2699
      %v2738 = vpop.xlane.xlu0 %2737
      %2739 = vadd.xlane.f32.xlu0 %v2700
      %v2740 = vpop.xlane.xlu0 %2739
      %2741 = vadd.xlane.f32.xlu0 %v2701
      %v2742 = vpop.xlane.xlu0 %2741
      %2743 = vadd.xlane.f32.xlu0 %v2702
      %v2744 = vpop.xlane.xlu0 %2743
      %2745 = vadd.xlane.f32.xlu0 %v2703
      %v2746 = vpop.xlane.xlu0 %2745
      %2747 = vadd.xlane.f32.xlu0 %v2704
      %v2748 = vpop.xlane.xlu0 %2747
      %2749 = vadd.xlane.f32.xlu0 %v2705
      %v2750 = vpop.xlane.xlu0 %2749
      %2751 = vadd.xlane.f32.xlu0 %v2706
      %v2752 = vpop.xlane.xlu0 %2751
      %2753 = vadd.xlane.f32.xlu0 %v2707
      %v2754 = vpop.xlane.xlu0 %2753
      %2755 = vadd.xlane.f32.xlu0 %v2708
      %v2756 = vpop.xlane.xlu0 %2755
      %2757 = vadd.xlane.f32.xlu0 %v2709
      %v2758 = vpop.xlane.xlu0 %2757
      %2759 = vadd.xlane.f32.xlu0 %v2710
      %v2760 = vpop.xlane.xlu0 %2759
      %2761 = vadd.xlane.f32.xlu0 %v2711
      %v2762 = vpop.xlane.xlu0 %2761
      %2763 = vadd.xlane.f32.xlu0 %v2712
      %v2764 = vpop.xlane.xlu0 %2763
      %2765 = vadd.xlane.f32.xlu0 %v2713
      %v2766 = vpop.xlane.xlu0 %2765
      %2767 = vadd.xlane.f32.xlu0 %v2714
      %v2768 = vpop.xlane.xlu0 %2767
      %2769 = vadd.xlane.f32.xlu0 %v2715
      %v2770 = vpop.xlane.xlu0 %2769
      %2771 = vadd.xlane.f32.xlu0 %v2716
      %v2772 = vpop.xlane.xlu0 %2771
      %2773 = vadd.xlane.f32.xlu0 %v2717
      %v2774 = vpop.xlane.xlu0 %2773
      %2775 = vadd.xlane.f32.xlu0 %v2718
      %v2776 = vpop.xlane.xlu0 %2775
      %2777 = vadd.xlane.f32.xlu0 %v2719
      %v2778 = vpop.xlane.xlu0 %2777
      %2779 = vadd.xlane.f32.xlu0 %v2720
      %v2780 = vpop.xlane.xlu0 %2779
      %2781 = vadd.xlane.f32.xlu0 %v2721
      %v2782 = vpop.xlane.xlu0 %2781
      %2783 = vadd.xlane.f32.xlu0 %v2722
      %v2784 = vpop.xlane.xlu0 %2783
      %2785 = vadd.xlane.f32.xlu0 %v2723
      %v2786 = vpop.xlane.xlu0 %2785
      %2787 = vadd.xlane.f32.xlu0 %v2724
      %v2788 = vpop.xlane.xlu0 %2787
      %v2789 = vmul.f32 %v2726, 0.125
      %v2790 = vmul.f32 %v2728, 0.125
      %v2791 = vmul.f32 %v2730, 0.125
      %v2792 = vmul.f32 %v2732, 0.125
      %v2793 = vmul.f32 %v2734, 0.125
      %v2794 = vmul.f32 %v2736, 0.125
      %v2795 = vmul.f32 %v2738, 0.125
      %v2796 = vmul.f32 %v2740, 0.125
      %v2797 = vmul.f32 %v2742, 0.125
      %v2798 = vmul.f32 %v2744, 0.125
      %v2799 = vmul.f32 %v2746, 0.125
      %v2800 = vmul.f32 %v2748, 0.125
      %v2801 = vmul.f32 %v2750, 0.125
      %v2802 = vmul.f32 %v2752, 0.125
      %v2803 = vmul.f32 %v2754, 0.125
      %v2804 = vmul.f32 %v2756, 0.125
      %v2805 = vmul.f32 %v2758, 0.125
      %v2806 = vmul.f32 %v2760, 0.125
      %v2807 = vmul.f32 %v2762, 0.125
      %v2808 = vmul.f32 %v2764, 0.125
      %v2809 = vmul.f32 %v2766, 0.125
      %v2810 = vmul.f32 %v2768, 0.125
      %v2811 = vmul.f32 %v2770, 0.125
      %v2812 = vmul.f32 %v2772, 0.125
      %v2813 = vmul.f32 %v2774, 0.125
      %v2814 = vmul.f32 %v2776, 0.125
      %v2815 = vmul.f32 %v2778, 0.125
      %v2816 = vmul.f32 %v2780, 0.125
      %v2817 = vmul.f32 %v2782, 0.125
      %v2818 = vmul.f32 %v2784, 0.125
      %v2819 = vmul.f32 %v2786, 0.125
      %v2820 = vmul.f32 %v2788, 0.125
      %v2821 = vadd.f32 %v2789, 1e-05
      %v2822 = vadd.f32 %v2790, 1e-05
      %v2823 = vadd.f32 %v2791, 1e-05
      %v2824 = vadd.f32 %v2792, 1e-05
      %v2825 = vadd.f32 %v2793, 1e-05
      %v2826 = vadd.f32 %v2794, 1e-05
      %v2827 = vadd.f32 %v2795, 1e-05
      %v2828 = vadd.f32 %v2796, 1e-05
      %v2829 = vadd.f32 %v2797, 1e-05
      %v2830 = vadd.f32 %v2798, 1e-05
      %v2831 = vadd.f32 %v2799, 1e-05
      %v2832 = vadd.f32 %v2800, 1e-05
      %v2833 = vadd.f32 %v2801, 1e-05
      %v2834 = vadd.f32 %v2802, 1e-05
      %v2835 = vadd.f32 %v2803, 1e-05
      %v2836 = vadd.f32 %v2804, 1e-05
      %v2837 = vadd.f32 %v2805, 1e-05
      %v2838 = vadd.f32 %v2806, 1e-05
      %v2839 = vadd.f32 %v2807, 1e-05
      %v2840 = vadd.f32 %v2808, 1e-05
      %v2841 = vadd.f32 %v2809, 1e-05
      %v2842 = vadd.f32 %v2810, 1e-05
      %v2843 = vadd.f32 %v2811, 1e-05
      %v2844 = vadd.f32 %v2812, 1e-05
      %v2845 = vadd.f32 %v2813, 1e-05
      %v2846 = vadd.f32 %v2814, 1e-05
      %v2847 = vadd.f32 %v2815, 1e-05
      %v2848 = vadd.f32 %v2816, 1e-05
      %v2849 = vadd.f32 %v2817, 1e-05
      %v2850 = vadd.f32 %v2818, 1e-05
      %v2851 = vadd.f32 %v2819, 1e-05
      %v2852 = vadd.f32 %v2820, 1e-05
      %v2853 = vrsqrt.pop %v2821
      %v2854 = vrsqrt.pop %v2822
      %v2855 = vrsqrt.pop %v2823
      %v2856 = vrsqrt.pop %v2824
      %v2857 = vrsqrt.pop %v2825
      %v2858 = vrsqrt.pop %v2826
      %v2859 = vrsqrt.pop %v2827
      %v2860 = vrsqrt.pop %v2828
      %v2861 = vrsqrt.pop %v2829
      %v2862 = vrsqrt.pop %v2830
      %v2863 = vrsqrt.pop %v2831
      %v2864 = vrsqrt.pop %v2832
      %v2865 = vrsqrt.pop %v2833
      %v2866 = vrsqrt.pop %v2834
      %v2867 = vrsqrt.pop %v2835
      %v2868 = vrsqrt.pop %v2836
      %v2869 = vrsqrt.pop %v2837
      %v2870 = vrsqrt.pop %v2838
      %v2871 = vrsqrt.pop %v2839
      %v2872 = vrsqrt.pop %v2840
      %v2873 = vrsqrt.pop %v2841
      %v2874 = vrsqrt.pop %v2842
      %v2875 = vrsqrt.pop %v2843
      %v2876 = vrsqrt.pop %v2844
      %v2877 = vrsqrt.pop %v2845
      %v2878 = vrsqrt.pop %v2846
      %v2879 = vrsqrt.pop %v2847
      %v2880 = vrsqrt.pop %v2848
      %v2881 = vrsqrt.pop %v2849
      %v2882 = vrsqrt.pop %v2850
      %v2883 = vrsqrt.pop %v2851
      %v2884 = vrsqrt.pop %v2852
      %v2885 = vmul.f32 %v2661, %v2853
      %v2886 = vmul.f32 %v2662, %v2854
      %v2887 = vmul.f32 %v2663, %v2855
      %v2888 = vmul.f32 %v2664, %v2856
      %v2889 = vmul.f32 %v2665, %v2857
      %v2890 = vmul.f32 %v2666, %v2858
      %v2891 = vmul.f32 %v2667, %v2859
      %v2892 = vmul.f32 %v2668, %v2860
      %v2893 = vmul.f32 %v2669, %v2861
      %v2894 = vmul.f32 %v2670, %v2862
      %v2895 = vmul.f32 %v2671, %v2863
      %v2896 = vmul.f32 %v2672, %v2864
      %v2897 = vmul.f32 %v2673, %v2865
      %v2898 = vmul.f32 %v2674, %v2866
      %v2899 = vmul.f32 %v2675, %v2867
      %v2900 = vmul.f32 %v2676, %v2868
      %v2901 = vmul.f32 %v2677, %v2869
      %v2902 = vmul.f32 %v2678, %v2870
      %v2903 = vmul.f32 %v2679, %v2871
      %v2904 = vmul.f32 %v2680, %v2872
      %v2905 = vmul.f32 %v2681, %v2873
      %v2906 = vmul.f32 %v2682, %v2874
      %v2907 = vmul.f32 %v2683, %v2875
      %v2908 = vmul.f32 %v2684, %v2876
      %v2909 = vmul.f32 %v2685, %v2877
      %v2910 = vmul.f32 %v2686, %v2878
      %v2911 = vmul.f32 %v2687, %v2879
      %v2912 = vmul.f32 %v2688, %v2880
      %v2913 = vmul.f32 %v2689, %v2881
      %v2914 = vmul.f32 %v2690, %v2882
      %v2915 = vmul.f32 %v2691, %v2883
      %v2916 = vmul.f32 %v2692, %v2884
      %v2917 = vld [vmem:[%s2] sm:$0x1]
      %v2919 = vlaneseq
      %v2920 = vshrl.u32 %v2919, 7
      %v2921 = vsub.s32 0, %v2920
      %v2922 = vrot.slane %v2917, %v2921
      %v2924 = vmul.f32 %v2885, %v2922
      %v2925 = vmul.f32 %v2886, %v2922
      %v2926 = vmul.f32 %v2887, %v2922
      %v2927 = vmul.f32 %v2888, %v2922
      %v2928 = vmul.f32 %v2889, %v2922
      %v2929 = vmul.f32 %v2890, %v2922
      %v2930 = vmul.f32 %v2891, %v2922
      %v2931 = vmul.f32 %v2892, %v2922
      %v2932 = vmul.f32 %v2893, %v2922
      %v2933 = vmul.f32 %v2894, %v2922
      %v2934 = vmul.f32 %v2895, %v2922
      %v2935 = vmul.f32 %v2896, %v2922
      %v2936 = vmul.f32 %v2897, %v2922
      %v2937 = vmul.f32 %v2898, %v2922
      %v2938 = vmul.f32 %v2899, %v2922
      %v2939 = vmul.f32 %v2900, %v2922
      %v2940 = vmul.f32 %v2901, %v2922
      %v2941 = vmul.f32 %v2902, %v2922
      %v2942 = vmul.f32 %v2903, %v2922
      %v2943 = vmul.f32 %v2904, %v2922
      %v2944 = vmul.f32 %v2905, %v2922
      %v2945 = vmul.f32 %v2906, %v2922
      %v2946 = vmul.f32 %v2907, %v2922
      %v2947 = vmul.f32 %v2908, %v2922
      %v2948 = vmul.f32 %v2909, %v2922
      %v2949 = vmul.f32 %v2910, %v2922
      %v2950 = vmul.f32 %v2911, %v2922
      %v2951 = vmul.f32 %v2912, %v2922
      %v2952 = vmul.f32 %v2913, %v2922
      %v2953 = vmul.f32 %v2914, %v2922
      %v2954 = vmul.f32 %v2915, %v2922
      %v2955 = vmul.f32 %v2916, %v2922
      %v2956 = vld [vmem:[%s3] sm:$0x1]
      %v2958 = vlaneseq
      %v2959 = vshrl.u32 %v2958, 7
      %v2960 = vsub.s32 0, %v2959
      %v2961 = vrot.slane %v2956, %v2960
      %v2963 = vadd.f32 %v2924, %v2961
      %v2964 = vadd.f32 %v2925, %v2961
      %v2965 = vadd.f32 %v2926, %v2961
      %v2966 = vadd.f32 %v2927, %v2961
      %v2967 = vadd.f32 %v2928, %v2961
      %v2968 = vadd.f32 %v2929, %v2961
      %v2969 = vadd.f32 %v2930, %v2961
      %v2970 = vadd.f32 %v2931, %v2961
      %v2971 = vadd.f32 %v2932, %v2961
      %v2972 = vadd.f32 %v2933, %v2961
      %v2973 = vadd.f32 %v2934, %v2961
      %v2974 = vadd.f32 %v2935, %v2961
      %v2975 = vadd.f32 %v2936, %v2961
      %v2976 = vadd.f32 %v2937, %v2961
      %v2977 = vadd.f32 %v2938, %v2961
      %v2978 = vadd.f32 %v2939, %v2961
      %v2979 = vadd.f32 %v2940, %v2961
      %v2980 = vadd.f32 %v2941, %v2961
      %v2981 = vadd.f32 %v2942, %v2961
      %v2982 = vadd.f32 %v2943, %v2961
      %v2983 = vadd.f32 %v2944, %v2961
      %v2984 = vadd.f32 %v2945, %v2961
      %v2985 = vadd.f32 %v2946, %v2961
      %v2986 = vadd.f32 %v2947, %v2961
      %v2987 = vadd.f32 %v2948, %v2961
      %v2988 = vadd.f32 %v2949, %v2961
      %v2989 = vadd.f32 %v2950, %v2961
      %v2990 = vadd.f32 %v2951, %v2961
      %v2991 = vadd.f32 %v2952, %v2961
      %v2992 = vadd.f32 %v2953, %v2961
      %v2993 = vadd.f32 %v2954, %v2961
      %v2994 = vadd.f32 %v2955, %v2961
      %v2995 = vmax.f32 %v2963, 0.0
      %v2996 = vmax.f32 %v2964, 0.0
      %v2997 = vmax.f32 %v2965, 0.0
      %v2998 = vmax.f32 %v2966, 0.0
      %v2999 = vmax.f32 %v2967, 0.0
      %v3000 = vmax.f32 %v2968, 0.0
      %v3001 = vmax.f32 %v2969, 0.0
      %v3002 = vmax.f32 %v2970, 0.0
      %v3003 = vmax.f32 %v2971, 0.0
      %v3004 = vmax.f32 %v2972, 0.0
      %v3005 = vmax.f32 %v2973, 0.0
      %v3006 = vmax.f32 %v2974, 0.0
      %v3007 = vmax.f32 %v2975, 0.0
      %v3008 = vmax.f32 %v2976, 0.0
      %v3009 = vmax.f32 %v2977, 0.0
      %v3010 = vmax.f32 %v2978, 0.0
      %v3011 = vmax.f32 %v2979, 0.0
      %v3012 = vmax.f32 %v2980, 0.0
      %v3013 = vmax.f32 %v2981, 0.0
      %v3014 = vmax.f32 %v2982, 0.0
      %v3015 = vmax.f32 %v2983, 0.0
      %v3016 = vmax.f32 %v2984, 0.0
      %v3017 = vmax.f32 %v2985, 0.0
      %v3018 = vmax.f32 %v2986, 0.0
      %v3019 = vmax.f32 %v2987, 0.0
      %v3020 = vmax.f32 %v2988, 0.0
      %v3021 = vmax.f32 %v2989, 0.0
      %v3022 = vmax.f32 %v2990, 0.0
      %v3023 = vmax.f32 %v2991, 0.0
      %v3024 = vmax.f32 %v2992, 0.0
      %v3025 = vmax.f32 %v2993, 0.0
      %v3026 = vmax.f32 %v2994, 0.0
      %3027 = vst [vmem:[%s175] sm:$0xff] %v2995
      %3028 = vst [vmem:[%s175 + $0x8] sm:$0xff] %v2996
      %3029 = vst [vmem:[%s175 + $0x10] sm:$0xff] %v2997
      %3030 = vst [vmem:[%s175 + $0x18] sm:$0xff] %v2998
      %3031 = vst [vmem:[%s175 + $0x20] sm:$0xff] %v2999
      %3032 = vst [vmem:[%s175 + $0x28] sm:$0xff] %v3000
      %3033 = vst [vmem:[%s175 + $0x30] sm:$0xff] %v3001
      %3034 = vst [vmem:[%s175 + $0x38] sm:$0xff] %v3002
      %3035 = vst [vmem:[%s175 + $0x40] sm:$0xff] %v3003
      %3036 = vst [vmem:[%s175 + $0x48] sm:$0xff] %v3004
      %3037 = vst [vmem:[%s175 + $0x50] sm:$0xff] %v3005
      %3038 = vst [vmem:[%s175 + $0x58] sm:$0xff] %v3006
      %3039 = vst [vmem:[%s175 + $0x60] sm:$0xff] %v3007
      %3040 = vst [vmem:[%s175 + $0x68] sm:$0xff] %v3008
      %3041 = vst [vmem:[%s175 + $0x70] sm:$0xff] %v3009
      %3042 = vst [vmem:[%s175 + $0x78] sm:$0xff] %v3010
      %3043 = vst [vmem:[%s175 + $0x80] sm:$0xff] %v3011
      %3044 = vst [vmem:[%s175 + $0x88] sm:$0xff] %v3012
      %3045 = vst [vmem:[%s175 + $0x90] sm:$0xff] %v3013
      %3046 = vst [vmem:[%s175 + $0x98] sm:$0xff] %v3014
      %3047 = vst [vmem:[%s175 + $0xa0] sm:$0xff] %v3015
      %3048 = vst [vmem:[%s175 + $0xa8] sm:$0xff] %v3016
      %3049 = vst [vmem:[%s175 + $0xb0] sm:$0xff] %v3017
      %3050 = vst [vmem:[%s175 + $0xb8] sm:$0xff] %v3018
      %3051 = vst [vmem:[%s175 + $0xc0] sm:$0xff] %v3019
      %3052 = vst [vmem:[%s175 + $0xc8] sm:$0xff] %v3020
      %3053 = vst [vmem:[%s175 + $0xd0] sm:$0xff] %v3021
      %3054 = vst [vmem:[%s175 + $0xd8] sm:$0xff] %v3022
      %3055 = vst [vmem:[%s175 + $0xe0] sm:$0xff] %v3023
      %3056 = vst [vmem:[%s175 + $0xe8] sm:$0xff] %v3024
      %3057 = vst [vmem:[%s175 + $0xf0] sm:$0xff] %v3025
      %3058 = vst [vmem:[%s175 + $0xf8] sm:$0xff] %v3026
      %s3059 = smul.u32 16, %s20
      %p3060 = scmp.lt.s32.totalorder %s19, 1
      %s3061 = scalar_select %p3060, %s19, 1
      %p3062 = scmp.lt.s32.totalorder %s3059, 15
      %s3063 = scalar_select %p3062, %s3059, 15
      %s3064 = smul.addr %s3063, 2
      %s3065 = smul.addr %s3061, 32
      %s3066 = sadd.s32 %s3064, %s3065
      %s3067 = smul.addr %s3066, 8
      %s3068 = scalar_lea.vmem %s4, %s3067
      // Predicated region
      $region109: #{psp_forward.1} parent=31 // pred_check
        %p3069 = pneg %p110
      $region110: #{psp_forward.1} parent=31 // pred_check_branch
        %3071 = sbr.rel (%p3069) target = $region112
      $region111: #{psp_forward.1} parent=31 // pred_region
        %s3072 = smul.u32 16, %s20
      $region112: #{psp_forward.1} parent=31 // pred_fallthru
        _
    $region32: #{psp_forward.1} parent=5 // pred_fallthru
      _
    %p3073 = scmp.le.s32.totalorder 2, %s10
    // Predicated region
    $region113: #{psp_forward.1} parent=5 // pred_check
      %p3074 = pneg %p3073
    $region114: #{psp_forward.1} parent=5 // pred_check_branch
      %3076 = sbr.rel (%p3074) target = $region116
    $region115: #{psp_forward.1} parent=5 // pred_region
      %s3077 = ssub.s32 %s10, 2
      // Predicated region
      $region117: #{psp_forward.1} parent=115 // pred_check
        %p3078 = pneg %p116
      $region118: #{psp_forward.1} parent=115 // pred_check_branch
        %3080 = sbr.rel (%p3078) target = $region120
      $region119: #{psp_forward.1} parent=115 // pred_region
        %s3081 = smul.u32 16, %s22
        %p3082 = scmp.lt.s32.totalorder %s21, 1
        %s3083 = scalar_select %p3082, %s21, 1
        %p3084 = scmp.lt.s32.totalorder %s3081, 15
        %s3085 = scalar_select %p3084, %s3081, 15
        %s3086 = smul.addr %s3085, 2
        %s3087 = smul.addr %s3083, 32
        %s3088 = sadd.s32 %s3086, %s3087
        %s3089 = smul.addr %s3088, 8
        %s3090 = scalar_lea.vmem %s4, %s3089
      $region120: #{psp_forward.1} parent=115 // pred_fallthru
        _
    $region116: #{psp_forward.1} parent=5 // pred_fallthru
      _
  $region6: #{psp_forward.1} parent=0 // loop_footer
    %s14 = sadd.s32 1, %s10
  $region7: #{psp_forward.1} parent=0 // loop_footer_branch
    %9 = sbr.rel target = $region3
  $region8: #{psp_forward.1} parent=0 // loop_exit
    _
  %3091 = vsyncmov [#allocation3]
  %s3092 = vpop.sfrf %3091
  %p3093 = scmp.eq.s32.totalorder %s3092, 0
  %p3094 = pneg %p3093
  %3096 = shalt.err (%p3094)
  %s3097 = scalar_lea.sflag [#allocation3], 1
  %3098 = vsyncmov %s3097
  %s3099 = vpop.sfrf %3098
  %p3100 = scmp.eq.s32.totalorder %s3099, 0
  %p3101 = pneg %p3100
  %3103 = shalt.err (%p3101)

</llo_original>
